<compile_context>
chip_gen: v5e
topology: v5e:2x2
jax: 0.10.0
libtpu: 0.0.40
codegen_flags: <defaults>
</compile_context>

<pallas_src>
import functools

import jax
import jax.numpy as jnp
from jax import lax
from jax.experimental import pallas as pl
from jax.experimental.pallas import tpu as pltpu


def quick_gelu(v):
    return v * jax.nn.sigmoid(1.702 * v)


# ---------------------------------------------------------------------------
# Fused kernel: one grid step per batch element.
# ---------------------------------------------------------------------------
def fused_kernel(x_ref, w1_ref, b1_ref, w2_ref, b2_ref, mt_ref,
                 bm_ref, r_ref, bht_ref, wd_ref, bd_ref, valid_ref,
                 wu_ref, bu_ref, out_ref, pad_ref, *, H, W, dim):
    HW = H * W
    x = x_ref[0]                                                       # [HW, C]

    # ---- phase 1: meta_net -> mask softmax -> mask-weighted spatial reduce ----
    h1 = jnp.dot(x, w1_ref[...], preferred_element_type=jnp.float32) + b1_ref[...]
    h1 = jnp.maximum(h1, 0.0)                                          # ReLU
    prompt = jnp.dot(h1, w2_ref[...], preferred_element_type=jnp.float32) + b2_ref[...]
    logits = jnp.dot(prompt, mt_ref[...], preferred_element_type=jnp.float32)  # [HW, M]
    m = jnp.max(logits, axis=0, keepdims=True)
    e = jnp.exp(logits - m)
    inv = pl.reciprocal(jnp.sum(e, axis=0, keepdims=True), approx=True)
    sm = e * inv                                   # softmax over H*W, per mask
    total = jnp.sum(sm, axis=1, keepdims=True)     # sum over masks      [HW, 1]
    feat = jnp.sum(total * prompt, axis=0, keepdims=True)              # [1, 64]

    # ---- per-batch conv weight, produced directly transposed: [dim, 9*dim] ----
    # L[o, o'*64+e] = delta(o, o') * feat[e]  ->  W_imT = L @ R + bhT
    feat_tile = jnp.concatenate([feat] * dim, axis=1)                  # [1, dim*64]
    l_mat = bm_ref[...] * feat_tile                                    # [dim, dim*64]
    w_imt = jnp.dot(l_mat, r_ref[...], preferred_element_type=jnp.float32) + bht_ref[...]

    # ---- phase 2: adapter_down -> QuickGELU -> 3x3 conv -> QuickGELU -> up ----
    xd = jnp.dot(x, wd_ref[...], preferred_element_type=jnp.float32) + bd_ref[...]
    xd = quick_gelu(xd)                                                # [HW, dim]

    # Row-flattened "padded" copy of xd.  The border rows are never written and
    # may hold garbage (even NaN); the select against `valid` below replaces
    # every such element before the matmul, so no zero-fill is needed.
    pad_ref[pl.ds(W + 1, HW), :] = xd

    pieces = []
    for t in range(9):                              # tap t = ky*3 + kx
        d = (t // 3 - 1) * W + (t % 3 - 1)          # static offset in [-(W+1), W+1]
        pieces.append(pad_ref[pl.ds(W + 1 + d, HW), :])
    patches = jnp.concatenate(pieces, axis=1)                          # [HW, 9*dim]
    patches = jnp.where(valid_ref[...] > 0.5, patches, 0.0)

    acc = lax.dot_general(patches, w_imt,
                          dimension_numbers=(((1,), (1,)), ((), ())),
                          preferred_element_type=jnp.float32)          # [HW, dim]
    y = quick_gelu(acc)
    # TODO(synk): nn.Dropout(0.1) treated as identity (eval mode).
    yu = jnp.dot(y, wu_ref[...], preferred_element_type=jnp.float32) + bu_ref[...]
    out_ref[0] = (yu + x).astype(out_ref.dtype)


# ---------------------------------------------------------------------------
# Host-side constant re-layouts (batch independent, computed once per call)
# ---------------------------------------------------------------------------
def _derived_constants(params, *, H, W, dim):
    wh = params["wh"]                    # [64, dim*dim*9]; col = (o*dim+i)*9 + t
    bh = params["bh"][0]                 # [dim*dim*9]
    e_dim = wh.shape[0]                  # 64
    # R[o*e_dim + e, t*dim + i] = wh[e, (o*dim+i)*9 + t]
    r_mat = wh.reshape(e_dim, dim, dim, 9).transpose(1, 0, 3, 2).reshape(dim * e_dim, 9 * dim)
    # bhT[o, t*dim + i] = bh[(o*dim+i)*9 + t]
    bht = bh.reshape(dim, dim, 9).transpose(0, 2, 1).reshape(dim, 9 * dim)
    # block-diagonal selector for building L from feat inside the kernel
    bm = jnp.repeat(jnp.eye(dim, dtype=jnp.float32), e_dim, axis=1)    # [dim, dim*64]
    # per-tap validity mask (handles conv zero padding and row-wrap reads)
    hh = jnp.arange(H * W, dtype=jnp.int32) // W
    ww = jnp.arange(H * W, dtype=jnp.int32) % W
    cols = []
    for t in range(9):
        dy, dx = t // 3 - 1, t % 3 - 1
        v = ((hh + dy) >= 0) & ((hh + dy) < H) & ((ww + dx) >= 0) & ((ww + dx) < W)
        cols.append(jnp.repeat(v.astype(jnp.float32)[:, None], dim, axis=1))
    valid = jnp.concatenate(cols, axis=1)                              # [HW, 9*dim]
    return bm, r_mat, bht, valid


# ---------------------------------------------------------------------------
# Wrapper
# ---------------------------------------------------------------------------
def convpass_forward(x, params, *, dim, num_mask):
    B, H, W, C = x.shape
    HW = H * W
    x_flat = x.reshape(B, HW, C)

    bm, r_mat, bht, valid = _derived_constants(params, H=H, W=W, dim=dim)

    def full(shape):
        n = len(shape)
        return pl.BlockSpec(shape, lambda b, _n=n: (0,) * _n)

    kern = functools.partial(fused_kernel, H=H, W=W, dim=dim)
    out_flat = pl.pallas_call(
        kern,
        out_shape=jax.ShapeDtypeStruct((B, HW, C), jnp.float32),
        grid_spec=pltpu.PrefetchScalarGridSpec(
            num_scalar_prefetch=0,
            grid=(B,),
            in_specs=[
                pl.BlockSpec((1, HW, C), lambda b: (b, 0, 0)),   # x
                full((C, 64)), full((1, 64)),                    # meta_net linear1
                full((64, 64)), full((1, 64)),                   # meta_net linear2
                full((64, num_mask)),                            # mask_token^T
                full((dim, dim * 64)),                           # block-diag selector
                full((dim * 64, 9 * dim)),                       # hypernet weight (re-laid-out)
                full((dim, 9 * dim)),                            # hypernet bias (transposed)
                full((C, dim)), full((1, dim)),                  # adapter_down
                full((HW, 9 * dim)),                             # per-tap validity mask
                full((dim, C)), full((1, C)),                    # adapter_up
            ],
            out_specs=pl.BlockSpec((1, HW, C), lambda b: (b, 0, 0)),
            scratch_shapes=[pltpu.VMEM((HW + 2 * (W + 1), dim), jnp.float32)],
        ),
        compiler_params=pltpu.CompilerParams(dimension_semantics=("parallel",)),
    )(x_flat, params["w1"], params["b1"], params["w2"], params["b2"],
      params["mask_token_t"], bm, r_mat, bht,
      params["wd"], params["bd"], valid,
      params["wu"], params["bu"])

    return out_flat.reshape(B, H, W, C)


# ---------------------------------------------------------------------------
# Deterministic synthetic parameters (shapes from __init__)
# ---------------------------------------------------------------------------
def build_params(key, input_dim, dim, num_mask):
    ks = jax.random.split(key, 9)

    def u(k, shape, scale):
        return jax.random.uniform(k, shape, jnp.float32, -1.0, 1.0) * scale

    params = {}
    # meta_net: Linear(input_dim, 64) -> ReLU -> Linear(64, 64)
    params["w1"] = u(ks[0], (input_dim, 64), 1.0 / jnp.sqrt(input_dim))
    params["b1"] = u(ks[1], (1, 64), 0.05)
    params["w2"] = u(ks[2], (64, 64), 1.0 / 16.0)
    params["b2"] = u(ks[3], (1, 64), 0.05)
    # mask_token.weight: [num_mask, 64]; kernels use its transpose
    params["mask_token_t"] = u(ks[4], (64, num_mask), 0.1)
    # conv_hypernet: Linear(64, dim*dim*3*3)
    params["wh"] = u(ks[5], (64, dim * dim * 9), 0.02)
    params["bh"] = u(ks[6], (1, dim * dim * 9), 0.02)
    # adapter_down: xavier_uniform weight, zero bias
    lim = float(jnp.sqrt(6.0 / (input_dim + dim)))
    params["wd"] = jax.random.uniform(ks[7], (input_dim, dim), jnp.float32, -lim, lim)
    params["bd"] = jnp.zeros((1, dim), jnp.float32)
    # adapter_up: PyTorch zero-inits weight/bias; use a small nonzero weight so
    # the adapter path is numerically exercised (bias kept at zero).
    params["wu"] = u(ks[8], (dim, input_dim), 0.05)
    params["bu"] = jnp.zeros((1, input_dim), jnp.float32)
    return params


# ---------------------------------------------------------------------------
# Pure-JAX reference (same math, no Pallas) used to validate the kernel
# ---------------------------------------------------------------------------
def reference_forward(x, params, *, dim, num_mask):
    B, H, W, C = x.shape
    prompt = jnp.maximum(jnp.einsum("bhwc,ce->bhwe", x, params["w1"]) + params["b1"][0], 0.0)
    prompt = jnp.einsum("bhwe,ef->bhwf", prompt, params["w2"]) + params["b2"][0]
    mask = jnp.einsum("bhwe,em->mbhw", prompt, params["mask_token_t"])
    mask = jax.nn.softmax(mask.reshape(num_mask, B, H * W), axis=-1).reshape(num_mask, B, H, W)
    mwf = (jnp.sum(mask, axis=0)[..., None] * prompt).sum(axis=(1, 2))      # [B, 64]
    outs = []
    for b in range(B):
        wflat = mwf[b] @ params["wh"] + params["bh"][0]
        cw = wflat.reshape(dim, dim, 3, 3)                                   # [o, i, kh, kw]
        xd = x[b] @ params["wd"] + params["bd"][0]
        xd = xd * jax.nn.sigmoid(1.702 * xd)
        xp = jnp.pad(xd, ((1, 1), (1, 1), (0, 0)))
        acc = jnp.zeros((H, W, dim), jnp.float32)
        for ky in range(3):
            for kx in range(3):
                acc = acc + jnp.einsum("hwi,oi->hwo", xp[ky:ky + H, kx:kx + W], cw[:, :, ky, kx])
        y = acc * jax.nn.sigmoid(1.702 * acc)
        outs.append(y @ params["wu"] + params["bu"][0] + x[b])
    return jnp.stack(outs, axis=0)


if __name__ == "__main__":
    B, H, W = 2, 16, 16
    INPUT_DIM, DIM, NUM_MASK = 32, 8, 4

    key = jax.random.PRNGKey(0)
    kx, kp = jax.random.split(key)
    x = jax.random.normal(kx, (B, H, W, INPUT_DIM), jnp.float32)
    params = build_params(kp, INPUT_DIM, DIM, NUM_MASK)

    out = convpass_forward(x, params, dim=DIM, num_mask=NUM_MASK)
    out = jax.block_until_ready(out)
    ref = reference_forward(x, params, dim=DIM, num_mask=NUM_MASK)

    assert out.shape == (B, H, W, INPUT_DIM)
    max_err = float(jnp.max(jnp.abs(out - ref)))
    assert jnp.allclose(out, ref, atol=2e-2, rtol=2e-2), f"max_err={max_err}"
    print("KERNEL_OK")
</pallas_src>

<mosaic_0001>
module attributes {stable_mosaic.version = 11 : i64} {
  func.func @fused_kernel(%arg0: i32, %arg1: memref<1x256x32xf32, #tpu.memory_space<vmem>>, %arg2: memref<32x64xf32, #tpu.memory_space<vmem>>, %arg3: memref<1x64xf32, #tpu.memory_space<vmem>>, %arg4: memref<64x64xf32, #tpu.memory_space<vmem>>, %arg5: memref<1x64xf32, #tpu.memory_space<vmem>>, %arg6: memref<64x4xf32, #tpu.memory_space<vmem>>, %arg7: memref<8x512xf32, #tpu.memory_space<vmem>>, %arg8: memref<512x72xf32, #tpu.memory_space<vmem>>, %arg9: memref<8x72xf32, #tpu.memory_space<vmem>>, %arg10: memref<32x8xf32, #tpu.memory_space<vmem>>, %arg11: memref<1x8xf32, #tpu.memory_space<vmem>>, %arg12: memref<256x72xf32, #tpu.memory_space<vmem>>, %arg13: memref<8x32xf32, #tpu.memory_space<vmem>>, %arg14: memref<1x32xf32, #tpu.memory_space<vmem>>, %arg15: memref<1x256x32xf32, #tpu.memory_space<vmem>>, %arg16: memref<290x8xf32, #tpu.memory_space<vmem>>) attributes {dimension_semantics = [#tpu.dimension_semantics<parallel>], iteration_bounds = array<i64: 2>, scalar_prefetch = 0 : i64, scratch_operands = 1 : i64, tpu.core_type = #tpu.core_type<tc>, window_params = [{transform_indices = @transform_0, window_bounds = array<i64: 1, 256, 32>}, {pipeline_mode = #tpu.pipeline_mode<synchronous>, transform_indices = @transform_1, window_bounds = array<i64: 32, 64>}, {pipeline_mode = #tpu.pipeline_mode<synchronous>, transform_indices = @transform_2, window_bounds = array<i64: 1, 64>}, {pipeline_mode = #tpu.pipeline_mode<synchronous>, transform_indices = @transform_3, window_bounds = array<i64: 64, 64>}, {pipeline_mode = #tpu.pipeline_mode<synchronous>, transform_indices = @transform_4, window_bounds = array<i64: 1, 64>}, {pipeline_mode = #tpu.pipeline_mode<synchronous>, transform_indices = @transform_5, window_bounds = array<i64: 64, 4>}, {pipeline_mode = #tpu.pipeline_mode<synchronous>, transform_indices = @transform_6, window_bounds = array<i64: 8, 512>}, {pipeline_mode = #tpu.pipeline_mode<synchronous>, transform_indices = @transform_7, window_bounds = array<i64: 512, 72>}, {pipeline_mode = #tpu.pipeline_mode<synchronous>, transform_indices = @transform_8, window_bounds = array<i64: 8, 72>}, {pipeline_mode = #tpu.pipeline_mode<synchronous>, transform_indices = @transform_9, window_bounds = array<i64: 32, 8>}, {pipeline_mode = #tpu.pipeline_mode<synchronous>, transform_indices = @transform_10, window_bounds = array<i64: 1, 8>}, {pipeline_mode = #tpu.pipeline_mode<synchronous>, transform_indices = @transform_11, window_bounds = array<i64: 256, 72>}, {pipeline_mode = #tpu.pipeline_mode<synchronous>, transform_indices = @transform_12, window_bounds = array<i64: 8, 32>}, {pipeline_mode = #tpu.pipeline_mode<synchronous>, transform_indices = @transform_13, window_bounds = array<i64: 1, 32>}, {transform_indices = @transform_14, window_bounds = array<i64: 1, 256, 32>}]} {
    %c0 = arith.constant 0 : index
    %c0_0 = arith.constant 0 : index
    %c0_1 = arith.constant 0 : index
    %0 = vector.load %arg1[%c0, %c0_0, %c0_1] : memref<1x256x32xf32, #tpu.memory_space<vmem>>, vector<1x256x32xf32>
    %1 = vector.shape_cast %0 : vector<1x256x32xf32> to vector<256x32xf32>
    %c0_2 = arith.constant 0 : index
    %c0_3 = arith.constant 0 : index
    %2 = vector.load %arg2[%c0_2, %c0_3] : memref<32x64xf32, #tpu.memory_space<vmem>>, vector<32x64xf32>
    %cst = arith.constant dense<0.000000e+00> : vector<256x64xf32>
    %3 = tpu.matmul %1, %2, %cst {dimension_numbers = #tpu.dot_dimension_numbers<[1], [0], [0], [1], [0, 0, 1, 1], [], []>} : vector<256x32xf32>, vector<32x64xf32>, vector<256x64xf32> -> vector<256x64xf32>
    %c0_4 = arith.constant 0 : index
    %c0_5 = arith.constant 0 : index
    %4 = vector.load %arg3[%c0_4, %c0_5] : memref<1x64xf32, #tpu.memory_space<vmem>>, vector<1x64xf32>
    %5 = vector.broadcast %4 : vector<1x64xf32> to vector<256x64xf32>
    %6 = arith.addf %3, %5 : vector<256x64xf32>
    %cst_6 = arith.constant 0.000000e+00 : f32
    %7 = vector.broadcast %cst_6 : f32 to vector<256x64xf32>
    %8 = arith.maximumf %6, %7 : vector<256x64xf32>
    %c0_7 = arith.constant 0 : index
    %c0_8 = arith.constant 0 : index
    %9 = vector.load %arg4[%c0_7, %c0_8] : memref<64x64xf32, #tpu.memory_space<vmem>>, vector<64x64xf32>
    %cst_9 = arith.constant dense<0.000000e+00> : vector<256x64xf32>
    %10 = tpu.matmul %8, %9, %cst_9 {dimension_numbers = #tpu.dot_dimension_numbers<[1], [0], [0], [1], [0, 0, 1, 1], [], []>} : vector<256x64xf32>, vector<64x64xf32>, vector<256x64xf32> -> vector<256x64xf32>
    %c0_10 = arith.constant 0 : index
    %c0_11 = arith.constant 0 : index
    %11 = vector.load %arg5[%c0_10, %c0_11] : memref<1x64xf32, #tpu.memory_space<vmem>>, vector<1x64xf32>
    %12 = vector.broadcast %11 : vector<1x64xf32> to vector<256x64xf32>
    %13 = arith.addf %10, %12 : vector<256x64xf32>
    %c0_12 = arith.constant 0 : index
    %c0_13 = arith.constant 0 : index
    %14 = vector.load %arg6[%c0_12, %c0_13] : memref<64x4xf32, #tpu.memory_space<vmem>>, vector<64x4xf32>
    %cst_14 = arith.constant dense<0.000000e+00> : vector<256x4xf32>
    %15 = tpu.matmul %13, %14, %cst_14 {dimension_numbers = #tpu.dot_dimension_numbers<[1], [0], [0], [1], [0, 0, 1, 1], [], []>} : vector<256x64xf32>, vector<64x4xf32>, vector<256x4xf32> -> vector<256x4xf32>
    %cst_15 = arith.constant dense<0xFF800000> : vector<4xf32>
    %16 = vector.multi_reduction <maximumf>, %15, %cst_15 [0] : vector<256x4xf32> to vector<4xf32>
    %17 = vector.shape_cast %16 : vector<4xf32> to vector<1x4xf32>
    %18 = vector.broadcast %17 : vector<1x4xf32> to vector<256x4xf32>
    %19 = arith.subf %15, %18 : vector<256x4xf32>
    %20 = math.exp %19 : vector<256x4xf32>
    %cst_16 = arith.constant dense<0.000000e+00> : vector<4xf32>
    %21 = vector.multi_reduction <add>, %20, %cst_16 [0] : vector<256x4xf32> to vector<4xf32>
    %22 = vector.shape_cast %21 : vector<4xf32> to vector<1x4xf32>
    %23 = tpu.reciprocal %22 {approx = true} : vector<1x4xf32> -> vector<1x4xf32>
    %24 = vector.broadcast %23 : vector<1x4xf32> to vector<256x4xf32>
    %25 = arith.mulf %20, %24 : vector<256x4xf32>
    %cst_17 = arith.constant dense<0.000000e+00> : vector<256xf32>
    %26 = vector.multi_reduction <add>, %25, %cst_17 [1] : vector<256x4xf32> to vector<256xf32>
    %27 = vector.shape_cast %26 : vector<256xf32> to vector<256x1xf32>
    %28 = vector.broadcast %27 : vector<256x1xf32> to vector<256x64xf32>
    %29 = arith.mulf %28, %13 : vector<256x64xf32>
    %cst_18 = arith.constant dense<0.000000e+00> : vector<64xf32>
    %30 = vector.multi_reduction <add>, %29, %cst_18 [0] : vector<256x64xf32> to vector<64xf32>
    %31 = vector.shape_cast %30 : vector<64xf32> to vector<1x64xf32>
    %32 = tpu.concatenate %31, %31, %31, %31, %31, %31, %31, %31 in 1 : vector<1x64xf32>, vector<1x64xf32>, vector<1x64xf32>, vector<1x64xf32>, vector<1x64xf32>, vector<1x64xf32>, vector<1x64xf32>, vector<1x64xf32> -> vector<1x512xf32>
    %c0_19 = arith.constant 0 : index
    %c0_20 = arith.constant 0 : index
    %33 = vector.load %arg7[%c0_19, %c0_20] : memref<8x512xf32, #tpu.memory_space<vmem>>, vector<8x512xf32>
    %34 = vector.broadcast %32 : vector<1x512xf32> to vector<8x512xf32>
    %35 = arith.mulf %33, %34 : vector<8x512xf32>
    %c0_21 = arith.constant 0 : index
    %c0_22 = arith.constant 0 : index
    %36 = vector.load %arg8[%c0_21, %c0_22] : memref<512x72xf32, #tpu.memory_space<vmem>>, vector<512x72xf32>
    %cst_23 = arith.constant dense<0.000000e+00> : vector<8x72xf32>
    %37 = tpu.matmul %35, %36, %cst_23 {dimension_numbers = #tpu.dot_dimension_numbers<[1], [0], [0], [1], [0, 0, 1, 1], [], []>} : vector<8x512xf32>, vector<512x72xf32>, vector<8x72xf32> -> vector<8x72xf32>
    %c0_24 = arith.constant 0 : index
    %c0_25 = arith.constant 0 : index
    %38 = vector.load %arg9[%c0_24, %c0_25] : memref<8x72xf32, #tpu.memory_space<vmem>>, vector<8x72xf32>
    %39 = arith.addf %37, %38 : vector<8x72xf32>
    %c0_26 = arith.constant 0 : index
    %c0_27 = arith.constant 0 : index
    %40 = vector.load %arg10[%c0_26, %c0_27] : memref<32x8xf32, #tpu.memory_space<vmem>>, vector<32x8xf32>
    %cst_28 = arith.constant dense<0.000000e+00> : vector<256x8xf32>
    %41 = tpu.matmul %1, %40, %cst_28 {dimension_numbers = #tpu.dot_dimension_numbers<[1], [0], [0], [1], [0, 0, 1, 1], [], []>} : vector<256x32xf32>, vector<32x8xf32>, vector<256x8xf32> -> vector<256x8xf32>
    %c0_29 = arith.constant 0 : index
    %c0_30 = arith.constant 0 : index
    %42 = vector.load %arg11[%c0_29, %c0_30] : memref<1x8xf32, #tpu.memory_space<vmem>>, vector<1x8xf32>
    %43 = vector.broadcast %42 : vector<1x8xf32> to vector<256x8xf32>
    %44 = arith.addf %41, %43 : vector<256x8xf32>
    %cst_31 = arith.constant 1.702000e+00 : f32
    %45 = vector.broadcast %cst_31 : f32 to vector<256x8xf32>
    %46 = arith.mulf %45, %44 : vector<256x8xf32>
    %47 = arith.negf %46 : vector<256x8xf32>
    %48 = math.exp %47 : vector<256x8xf32>
    %cst_32 = arith.constant 1.000000e+00 : f32
    %49 = vector.broadcast %cst_32 : f32 to vector<256x8xf32>
    %50 = arith.addf %49, %48 : vector<256x8xf32>
    %51 = arith.divf %49, %50 : vector<256x8xf32>
    %52 = arith.mulf %44, %51 : vector<256x8xf32>
    %c17 = arith.constant 17 : index
    %c0_33 = arith.constant 0 : index
    %53 = vector.load %arg16[%c17, %c0_33] : memref<290x8xf32, #tpu.memory_space<vmem>>, vector<256x8xf32>
    tpu.vector_store %arg16[%c17, %c0_33], %52 {strides = array<i32>} : memref<290x8xf32, #tpu.memory_space<vmem>>, vector<256x8xf32>,
    %c0_34 = arith.constant 0 : index
    %c0_35 = arith.constant 0 : index
    %54 = vector.load %arg16[%c0_34, %c0_35] : memref<290x8xf32, #tpu.memory_space<vmem>>, vector<256x8xf32>
    %c1 = arith.constant 1 : index
    %c0_36 = arith.constant 0 : index
    %55 = vector.load %arg16[%c1, %c0_36] : memref<290x8xf32, #tpu.memory_space<vmem>>, vector<256x8xf32>
    %c2 = arith.constant 2 : index
    %c0_37 = arith.constant 0 : index
    %56 = vector.load %arg16[%c2, %c0_37] : memref<290x8xf32, #tpu.memory_space<vmem>>, vector<256x8xf32>
    %c16 = arith.constant 16 : index
    %c0_38 = arith.constant 0 : index
    %57 = vector.load %arg16[%c16, %c0_38] : memref<290x8xf32, #tpu.memory_space<vmem>>, vector<256x8xf32>
    %c17_39 = arith.constant 17 : index
    %c0_40 = arith.constant 0 : index
    %58 = vector.load %arg16[%c17_39, %c0_40] : memref<290x8xf32, #tpu.memory_space<vmem>>, vector<256x8xf32>
    %c18 = arith.constant 18 : index
    %c0_41 = arith.constant 0 : index
    %59 = vector.load %arg16[%c18, %c0_41] : memref<290x8xf32, #tpu.memory_space<vmem>>, vector<256x8xf32>
    %c32 = arith.constant 32 : index
    %c0_42 = arith.constant 0 : index
    %60 = vector.load %arg16[%c32, %c0_42] : memref<290x8xf32, #tpu.memory_space<vmem>>, vector<256x8xf32>
    %c33 = arith.constant 33 : index
    %c0_43 = arith.constant 0 : index
    %61 = vector.load %arg16[%c33, %c0_43] : memref<290x8xf32, #tpu.memory_space<vmem>>, vector<256x8xf32>
    %c34 = arith.constant 34 : index
    %c0_44 = arith.constant 0 : index
    %62 = vector.load %arg16[%c34, %c0_44] : memref<290x8xf32, #tpu.memory_space<vmem>>, vector<256x8xf32>
    %63 = tpu.concatenate %54, %55, %56, %57, %58, %59, %60, %61, %62 in 1 : vector<256x8xf32>, vector<256x8xf32>, vector<256x8xf32>, vector<256x8xf32>, vector<256x8xf32>, vector<256x8xf32>, vector<256x8xf32>, vector<256x8xf32>, vector<256x8xf32> -> vector<256x72xf32>
    %c0_45 = arith.constant 0 : index
    %c0_46 = arith.constant 0 : index
    %64 = vector.load %arg12[%c0_45, %c0_46] : memref<256x72xf32, #tpu.memory_space<vmem>>, vector<256x72xf32>
    %cst_47 = arith.constant 5.000000e-01 : f32
    %65 = vector.broadcast %cst_47 : f32 to vector<256x72xf32>
    %66 = arith.cmpf ogt, %64, %65 : vector<256x72xf32>
    %cst_48 = arith.constant 0.000000e+00 : f32
    %67 = vector.broadcast %cst_48 : f32 to vector<256x72xf32>
    %68 = arith.select %66, %63, %67 : vector<256x72xi1>, vector<256x72xf32>
    %cst_49 = arith.constant dense<0.000000e+00> : vector<256x8xf32>
    %69 = tpu.matmul %68, %39, %cst_49 {dimension_numbers = #tpu.dot_dimension_numbers<[1], [1], [0], [0], [0, 0, 1, 0], [], []>} : vector<256x72xf32>, vector<8x72xf32>, vector<256x8xf32> -> vector<256x8xf32>
    %cst_50 = arith.constant 1.702000e+00 : f32
    %70 = vector.broadcast %cst_50 : f32 to vector<256x8xf32>
    %71 = arith.mulf %70, %69 : vector<256x8xf32>
    %72 = arith.negf %71 : vector<256x8xf32>
    %73 = math.exp %72 : vector<256x8xf32>
    %cst_51 = arith.constant 1.000000e+00 : f32
    %74 = vector.broadcast %cst_51 : f32 to vector<256x8xf32>
    %75 = arith.addf %74, %73 : vector<256x8xf32>
    %76 = arith.divf %74, %75 : vector<256x8xf32>
    %77 = arith.mulf %69, %76 : vector<256x8xf32>
    %c0_52 = arith.constant 0 : index
    %c0_53 = arith.constant 0 : index
    %78 = vector.load %arg13[%c0_52, %c0_53] : memref<8x32xf32, #tpu.memory_space<vmem>>, vector<8x32xf32>
    %cst_54 = arith.constant dense<0.000000e+00> : vector<256x32xf32>
    %79 = tpu.matmul %77, %78, %cst_54 {dimension_numbers = #tpu.dot_dimension_numbers<[1], [0], [0], [1], [0, 0, 1, 1], [], []>} : vector<256x8xf32>, vector<8x32xf32>, vector<256x32xf32> -> vector<256x32xf32>
    %c0_55 = arith.constant 0 : index
    %c0_56 = arith.constant 0 : index
    %80 = vector.load %arg14[%c0_55, %c0_56] : memref<1x32xf32, #tpu.memory_space<vmem>>, vector<1x32xf32>
    %81 = vector.broadcast %80 : vector<1x32xf32> to vector<256x32xf32>
    %82 = arith.addf %79, %81 : vector<256x32xf32>
    %83 = arith.addf %82, %1 : vector<256x32xf32>
    %c0_57 = arith.constant 0 : index
    %c0_58 = arith.constant 0 : index
    %c0_59 = arith.constant 0 : index
    %84 = vector.load %arg15[%c0_57, %c0_58, %c0_59] : memref<1x256x32xf32, #tpu.memory_space<vmem>>, vector<1x256x32xf32>
    %85 = vector.shape_cast %84 : vector<1x256x32xf32> to vector<256x32xf32>
    %86 = vector.shape_cast %83 : vector<256x32xf32> to vector<1x256x32xf32>
    tpu.vector_store %arg15[%c0_57, %c0_58, %c0_59], %86 {strides = array<i32>} : memref<1x256x32xf32, #tpu.memory_space<vmem>>, vector<1x256x32xf32>,
    return
  }
  func.func @transform_0(%arg0: i32) -> (i32, i32, i32) {
    %c0_i32 = arith.constant 0 : i32
    %c0_i32_0 = arith.constant 0 : i32
    %c0_i32_1 = arith.constant 0 : i32
    return %arg0, %c0_i32, %c0_i32_0 : i32, i32, i32
  }
  func.func @transform_1(%arg0: i32) -> (i32, i32) {
    %c0_i32 = arith.constant 0 : i32
    %c0_i32_0 = arith.constant 0 : i32
    %c0_i32_1 = arith.constant 0 : i32
    return %c0_i32, %c0_i32_0 : i32, i32
  }
  func.func @transform_2(%arg0: i32) -> (i32, i32) {
    %c0_i32 = arith.constant 0 : i32
    %c0_i32_0 = arith.constant 0 : i32
    %c0_i32_1 = arith.constant 0 : i32
    return %c0_i32, %c0_i32_0 : i32, i32
  }
  func.func @transform_3(%arg0: i32) -> (i32, i32) {
    %c0_i32 = arith.constant 0 : i32
    %c0_i32_0 = arith.constant 0 : i32
    %c0_i32_1 = arith.constant 0 : i32
    return %c0_i32, %c0_i32_0 : i32, i32
  }
  func.func @transform_4(%arg0: i32) -> (i32, i32) {
    %c0_i32 = arith.constant 0 : i32
    %c0_i32_0 = arith.constant 0 : i32
    %c0_i32_1 = arith.constant 0 : i32
    return %c0_i32, %c0_i32_0 : i32, i32
  }
  func.func @transform_5(%arg0: i32) -> (i32, i32) {
    %c0_i32 = arith.constant 0 : i32
    %c0_i32_0 = arith.constant 0 : i32
    %c0_i32_1 = arith.constant 0 : i32
    return %c0_i32, %c0_i32_0 : i32, i32
  }
  func.func @transform_6(%arg0: i32) -> (i32, i32) {
    %c0_i32 = arith.constant 0 : i32
    %c0_i32_0 = arith.constant 0 : i32
    %c0_i32_1 = arith.constant 0 : i32
    return %c0_i32, %c0_i32_0 : i32, i32
  }
  func.func @transform_7(%arg0: i32) -> (i32, i32) {
    %c0_i32 = arith.constant 0 : i32
    %c0_i32_0 = arith.constant 0 : i32
    %c0_i32_1 = arith.constant 0 : i32
    return %c0_i32, %c0_i32_0 : i32, i32
  }
  func.func @transform_8(%arg0: i32) -> (i32, i32) {
    %c0_i32 = arith.constant 0 : i32
    %c0_i32_0 = arith.constant 0 : i32
    %c0_i32_1 = arith.constant 0 : i32
    return %c0_i32, %c0_i32_0 : i32, i32
  }
  func.func @transform_9(%arg0: i32) -> (i32, i32) {
    %c0_i32 = arith.constant 0 : i32
    %c0_i32_0 = arith.constant 0 : i32
    %c0_i32_1 = arith.constant 0 : i32
    return %c0_i32, %c0_i32_0 : i32, i32
  }
  func.func @transform_10(%arg0: i32) -> (i32, i32) {
    %c0_i32 = arith.constant 0 : i32
    %c0_i32_0 = arith.constant 0 : i32
    %c0_i32_1 = arith.constant 0 : i32
    return %c0_i32, %c0_i32_0 : i32, i32
  }
  func.func @transform_11(%arg0: i32) -> (i32, i32) {
    %c0_i32 = arith.constant 0 : i32
    %c0_i32_0 = arith.constant 0 : i32
    %c0_i32_1 = arith.constant 0 : i32
    return %c0_i32, %c0_i32_0 : i32, i32
  }
  func.func @transform_12(%arg0: i32) -> (i32, i32) {
    %c0_i32 = arith.constant 0 : i32
    %c0_i32_0 = arith.constant 0 : i32
    %c0_i32_1 = arith.constant 0 : i32
    return %c0_i32, %c0_i32_0 : i32, i32
  }
  func.func @transform_13(%arg0: i32) -> (i32, i32) {
    %c0_i32 = arith.constant 0 : i32
    %c0_i32_0 = arith.constant 0 : i32
    %c0_i32_1 = arith.constant 0 : i32
    return %c0_i32, %c0_i32_0 : i32, i32
  }
  func.func @transform_14(%arg0: i32) -> (i32, i32, i32) {
    %c0_i32 = arith.constant 0 : i32
    %c0_i32_0 = arith.constant 0 : i32
    %c0_i32_1 = arith.constant 0 : i32
    return %arg0, %c0_i32, %c0_i32_0 : i32, i32, i32
  }
}

</mosaic_0001>

<llo_original>
// kernel: tpu_custom_call.1
$region0: #{tpu_custom_call.1}
  #allocation0 [shape = 'u32[]', space=smem, size = 0x4, offset = 0x4, fixed_abs, tag = 'smem constant byte address 0x4 - core index']
  #allocation1 [shape = 'u32[72,128]{1,0:T(1,128)}', space=vmem, size = 0x9000, scoped, tag = 'internal scratch']
  #allocation2 [shape = 'f32[290,8]{1,0:T(8,128)}', space=vmem, size = 0x25000, scoped, tag = 'scratch operand']
  %s0 = inlined_call_operand.vmem [shape: f32[2,256,32], index: 0, kind: input, shape index: {}]
  %s1 = inlined_call_operand.vmem [shape: f32[32,64], index: 1, kind: input, shape index: {}]
  %s2 = inlined_call_operand.vmem [shape: f32[1,64], index: 2, kind: input, shape index: {}]
  %s3 = inlined_call_operand.vmem [shape: f32[64,64], index: 3, kind: input, shape index: {}]
  %s4 = inlined_call_operand.vmem [shape: f32[1,64], index: 4, kind: input, shape index: {}]
  %s5 = inlined_call_operand.vmem [shape: f32[64,4], index: 5, kind: input, shape index: {}]
  %s6 = inlined_call_operand.vmem [shape: f32[8,512], index: 6, kind: input, shape index: {}]
  %s7 = inlined_call_operand.vmem [shape: f32[512,72], index: 7, kind: input, shape index: {}]
  %s8 = inlined_call_operand.vmem [shape: f32[8,72], index: 8, kind: input, shape index: {}]
  %s9 = inlined_call_operand.vmem [shape: f32[32,8], index: 9, kind: input, shape index: {}]
  %s10 = inlined_call_operand.vmem [shape: f32[1,8], index: 10, kind: input, shape index: {}]
  %s11 = inlined_call_operand.vmem [shape: f32[256,72], index: 11, kind: input, shape index: {}]
  %s12 = inlined_call_operand.vmem [shape: f32[8,32], index: 12, kind: input, shape index: {}]
  %s13 = inlined_call_operand.vmem [shape: f32[1,32], index: 13, kind: input, shape index: {}]
  %s14 = inlined_call_operand.vmem [shape: f32[2,256,32], index: 14, kind: output, shape index: {}]
  %s15 = sld [smem:[#allocation0]]
  $region89: #{tpu_custom_call.1} parent=0
    _
  %s17 = ssub.s32 1, %s15
  %s18 = scalar_select 0, %s17, %s15
  loop: start=0, step=1, limit=4
  $region2: #{tpu_custom_call.1} parent=0 // loop_pre_header
    _
  $region3: #{tpu_custom_call.1} parent=0 // loop_header
    %s20 = sphi 0, %s24
    %p21 = scmp.ge.s32.totalorder %s20, 4
    %s30 = sphi 0, %s32
    %s33 = sphi 0, %s30
    %s34 = sphi 0, %s33
    %s50 = sphi 0, %s34
    %s54 = sphi 0, %s54
    %s56 = sphi 0, %s54
    %s57 = sphi 0, %s56
    %s71 = sphi 0, %s57
    %s75 = sphi 0, %s75
    %s77 = sphi 0, %s75
    %s78 = sphi 0, %s77
    %s92 = sphi 0, %s78
    %s96 = sphi 0, %s96
    %s98 = sphi 0, %s96
    %s99 = sphi 0, %s98
    %s113 = sphi 0, %s99
    %s117 = sphi 0, %s117
    %s119 = sphi 0, %s117
    %s120 = sphi 0, %s119
    %s134 = sphi 0, %s120
    %s138 = sphi 0, %s138
    %s140 = sphi 0, %s138
    %s141 = sphi 0, %s140
    %s155 = sphi 0, %s141
    %s159 = sphi 0, %s159
    %s161 = sphi 0, %s159
    %s162 = sphi 0, %s161
    %s176 = sphi 0, %s162
    %s180 = sphi 0, %s180
    %s182 = sphi 0, %s180
    %s183 = sphi 0, %s182
    %s197 = sphi 0, %s183
    %s201 = sphi 0, %s201
    %s203 = sphi 0, %s201
    %s204 = sphi 0, %s203
    %s218 = sphi 0, %s204
    %s222 = sphi 0, %s222
    %s224 = sphi 0, %s222
    %s225 = sphi 0, %s224
    %s239 = sphi 0, %s225
    %s243 = sphi 0, %s243
    %s245 = sphi 0, %s243
    %s246 = sphi 0, %s245
    %s260 = sphi 0, %s246
    %s264 = sphi 0, %s264
    %s266 = sphi 0, %s264
    %s267 = sphi 0, %s266
    %s281 = sphi 0, %s267
    %s285 = sphi 0, %s285
    %s287 = sphi 0, %s285
    %s288 = sphi 0, %s287
    %s302 = sphi 0, %s288
    %s306 = sphi 0, %s306
    %s308 = sphi 0, %s306
    %s309 = sphi 0, %s308
    %s323 = sphi 0, %s309
    %s329 = sphi 0, %s331
    %s332 = sphi 0, %s329
    %s333 = sphi 0, %s332
    %s349 = sphi 0, %s333
  $region4: #{tpu_custom_call.1} parent=0 // loop_header_branch
    %23 = sbr.rel (%p21) target = $region8
  $region5: #{tpu_custom_call.1} parent=0 // loop_body
    %s25 = ssub.s32 %s20, 1
    %s26 = ssub.s32 %s20, 2
    %s27 = sadd.s32 %s20, 1
    %s28 = ssub.s32 %s20, %s27
    %p29 = scmp.eq.s32.totalorder %s28, 0
    %s31 = sadd.s32 %s30, 1
    %s32 = scalar_select %p29, %s30, %s31
    %p35 = pneg %p29
    %p36 = scmp.eq.s32.totalorder %s20, 1
    %p37 = por %p35, %p36
    %p38 = scmp.ne.s32.totalorder %s30, %s33
    %p39 = scmp.eq.s32.totalorder %s20, 0
    %p40 = por %p38, %p39
    %p41 = scmp.ne.s32.totalorder %s30, %s33
    %p42 = scmp.eq.s32.totalorder %s25, 1
    %p43 = por %p41, %p42
    %p44 = scmp.ne.s32.totalorder %s33, %s34
    %p45 = scmp.eq.s32.totalorder %s25, 0
    %p46 = por %p44, %p45
    %p47 = scmp.ne.s32.totalorder %s33, %s34
    %p48 = scmp.eq.s32.totalorder %s26, 1
    %p49 = por %p47, %p48
    %p51 = scmp.ne.s32.totalorder %s34, %s50
    %p52 = scmp.eq.s32.totalorder %s26, 0
    %p53 = por %p51, %p52
    %s55 = sadd.s32 %s54, 1
    %p58 = scmp.eq.s32.totalorder %s20, 1
    %p59 = scmp.ne.s32.totalorder %s54, %s56
    %p60 = scmp.eq.s32.totalorder %s20, 0
    %p61 = por %p59, %p60
    %p62 = scmp.ne.s32.totalorder %s54, %s56
    %p63 = scmp.eq.s32.totalorder %s25, 1
    %p64 = por %p62, %p63
    %p65 = scmp.ne.s32.totalorder %s56, %s57
    %p66 = scmp.eq.s32.totalorder %s25, 0
    %p67 = por %p65, %p66
    %p68 = scmp.ne.s32.totalorder %s56, %s57
    %p69 = scmp.eq.s32.totalorder %s26, 1
    %p70 = por %p68, %p69
    %p72 = scmp.ne.s32.totalorder %s57, %s71
    %p73 = scmp.eq.s32.totalorder %s26, 0
    %p74 = por %p72, %p73
    %s76 = sadd.s32 %s75, 1
    %p79 = scmp.eq.s32.totalorder %s20, 1
    %p80 = scmp.ne.s32.totalorder %s75, %s77
    %p81 = scmp.eq.s32.totalorder %s20, 0
    %p82 = por %p80, %p81
    %p83 = scmp.ne.s32.totalorder %s75, %s77
    %p84 = scmp.eq.s32.totalorder %s25, 1
    %p85 = por %p83, %p84
    %p86 = scmp.ne.s32.totalorder %s77, %s78
    %p87 = scmp.eq.s32.totalorder %s25, 0
    %p88 = por %p86, %p87
    %p89 = scmp.ne.s32.totalorder %s77, %s78
    %p90 = scmp.eq.s32.totalorder %s26, 1
    %p91 = por %p89, %p90
    %p93 = scmp.ne.s32.totalorder %s78, %s92
    %p94 = scmp.eq.s32.totalorder %s26, 0
    %p95 = por %p93, %p94
    %s97 = sadd.s32 %s96, 1
    %p100 = scmp.eq.s32.totalorder %s20, 1
    %p101 = scmp.ne.s32.totalorder %s96, %s98
    %p102 = scmp.eq.s32.totalorder %s20, 0
    %p103 = por %p101, %p102
    %p104 = scmp.ne.s32.totalorder %s96, %s98
    %p105 = scmp.eq.s32.totalorder %s25, 1
    %p106 = por %p104, %p105
    %p107 = scmp.ne.s32.totalorder %s98, %s99
    %p108 = scmp.eq.s32.totalorder %s25, 0
    %p109 = por %p107, %p108
    %p110 = scmp.ne.s32.totalorder %s98, %s99
    %p111 = scmp.eq.s32.totalorder %s26, 1
    %p112 = por %p110, %p111
    %p114 = scmp.ne.s32.totalorder %s99, %s113
    %p115 = scmp.eq.s32.totalorder %s26, 0
    %p116 = por %p114, %p115
    %s118 = sadd.s32 %s117, 1
    %p121 = scmp.eq.s32.totalorder %s20, 1
    %p122 = scmp.ne.s32.totalorder %s117, %s119
    %p123 = scmp.eq.s32.totalorder %s20, 0
    %p124 = por %p122, %p123
    %p125 = scmp.ne.s32.totalorder %s117, %s119
    %p126 = scmp.eq.s32.totalorder %s25, 1
    %p127 = por %p125, %p126
    %p128 = scmp.ne.s32.totalorder %s119, %s120
    %p129 = scmp.eq.s32.totalorder %s25, 0
    %p130 = por %p128, %p129
    %p131 = scmp.ne.s32.totalorder %s119, %s120
    %p132 = scmp.eq.s32.totalorder %s26, 1
    %p133 = por %p131, %p132
    %p135 = scmp.ne.s32.totalorder %s120, %s134
    %p136 = scmp.eq.s32.totalorder %s26, 0
    %p137 = por %p135, %p136
    %s139 = sadd.s32 %s138, 1
    %p142 = scmp.eq.s32.totalorder %s20, 1
    %p143 = scmp.ne.s32.totalorder %s138, %s140
    %p144 = scmp.eq.s32.totalorder %s20, 0
    %p145 = por %p143, %p144
    %p146 = scmp.ne.s32.totalorder %s138, %s140
    %p147 = scmp.eq.s32.totalorder %s25, 1
    %p148 = por %p146, %p147
    %p149 = scmp.ne.s32.totalorder %s140, %s141
    %p150 = scmp.eq.s32.totalorder %s25, 0
    %p151 = por %p149, %p150
    %p152 = scmp.ne.s32.totalorder %s140, %s141
    %p153 = scmp.eq.s32.totalorder %s26, 1
    %p154 = por %p152, %p153
    %p156 = scmp.ne.s32.totalorder %s141, %s155
    %p157 = scmp.eq.s32.totalorder %s26, 0
    %p158 = por %p156, %p157
    %s160 = sadd.s32 %s159, 1
    %p163 = scmp.eq.s32.totalorder %s20, 1
    %p164 = scmp.ne.s32.totalorder %s159, %s161
    %p165 = scmp.eq.s32.totalorder %s20, 0
    %p166 = por %p164, %p165
    %p167 = scmp.ne.s32.totalorder %s159, %s161
    %p168 = scmp.eq.s32.totalorder %s25, 1
    %p169 = por %p167, %p168
    %p170 = scmp.ne.s32.totalorder %s161, %s162
    %p171 = scmp.eq.s32.totalorder %s25, 0
    %p172 = por %p170, %p171
    %p173 = scmp.ne.s32.totalorder %s161, %s162
    %p174 = scmp.eq.s32.totalorder %s26, 1
    %p175 = por %p173, %p174
    %p177 = scmp.ne.s32.totalorder %s162, %s176
    %p178 = scmp.eq.s32.totalorder %s26, 0
    %p179 = por %p177, %p178
    %s181 = sadd.s32 %s180, 1
    %p184 = scmp.eq.s32.totalorder %s20, 1
    %p185 = scmp.ne.s32.totalorder %s180, %s182
    %p186 = scmp.eq.s32.totalorder %s20, 0
    %p187 = por %p185, %p186
    %p188 = scmp.ne.s32.totalorder %s180, %s182
    %p189 = scmp.eq.s32.totalorder %s25, 1
    %p190 = por %p188, %p189
    %p191 = scmp.ne.s32.totalorder %s182, %s183
    %p192 = scmp.eq.s32.totalorder %s25, 0
    %p193 = por %p191, %p192
    %p194 = scmp.ne.s32.totalorder %s182, %s183
    %p195 = scmp.eq.s32.totalorder %s26, 1
    %p196 = por %p194, %p195
    %p198 = scmp.ne.s32.totalorder %s183, %s197
    %p199 = scmp.eq.s32.totalorder %s26, 0
    %p200 = por %p198, %p199
    %s202 = sadd.s32 %s201, 1
    %p205 = scmp.eq.s32.totalorder %s20, 1
    %p206 = scmp.ne.s32.totalorder %s201, %s203
    %p207 = scmp.eq.s32.totalorder %s20, 0
    %p208 = por %p206, %p207
    %p209 = scmp.ne.s32.totalorder %s201, %s203
    %p210 = scmp.eq.s32.totalorder %s25, 1
    %p211 = por %p209, %p210
    %p212 = scmp.ne.s32.totalorder %s203, %s204
    %p213 = scmp.eq.s32.totalorder %s25, 0
    %p214 = por %p212, %p213
    %p215 = scmp.ne.s32.totalorder %s203, %s204
    %p216 = scmp.eq.s32.totalorder %s26, 1
    %p217 = por %p215, %p216
    %p219 = scmp.ne.s32.totalorder %s204, %s218
    %p220 = scmp.eq.s32.totalorder %s26, 0
    %p221 = por %p219, %p220
    %s223 = sadd.s32 %s222, 1
    %p226 = scmp.eq.s32.totalorder %s20, 1
    %p227 = scmp.ne.s32.totalorder %s222, %s224
    %p228 = scmp.eq.s32.totalorder %s20, 0
    %p229 = por %p227, %p228
    %p230 = scmp.ne.s32.totalorder %s222, %s224
    %p231 = scmp.eq.s32.totalorder %s25, 1
    %p232 = por %p230, %p231
    %p233 = scmp.ne.s32.totalorder %s224, %s225
    %p234 = scmp.eq.s32.totalorder %s25, 0
    %p235 = por %p233, %p234
    %p236 = scmp.ne.s32.totalorder %s224, %s225
    %p237 = scmp.eq.s32.totalorder %s26, 1
    %p238 = por %p236, %p237
    %p240 = scmp.ne.s32.totalorder %s225, %s239
    %p241 = scmp.eq.s32.totalorder %s26, 0
    %p242 = por %p240, %p241
    %s244 = sadd.s32 %s243, 1
    %p247 = scmp.eq.s32.totalorder %s20, 1
    %p248 = scmp.ne.s32.totalorder %s243, %s245
    %p249 = scmp.eq.s32.totalorder %s20, 0
    %p250 = por %p248, %p249
    %p251 = scmp.ne.s32.totalorder %s243, %s245
    %p252 = scmp.eq.s32.totalorder %s25, 1
    %p253 = por %p251, %p252
    %p254 = scmp.ne.s32.totalorder %s245, %s246
    %p255 = scmp.eq.s32.totalorder %s25, 0
    %p256 = por %p254, %p255
    %p257 = scmp.ne.s32.totalorder %s245, %s246
    %p258 = scmp.eq.s32.totalorder %s26, 1
    %p259 = por %p257, %p258
    %p261 = scmp.ne.s32.totalorder %s246, %s260
    %p262 = scmp.eq.s32.totalorder %s26, 0
    %p263 = por %p261, %p262
    %s265 = sadd.s32 %s264, 1
    %p268 = scmp.eq.s32.totalorder %s20, 1
    %p269 = scmp.ne.s32.totalorder %s264, %s266
    %p270 = scmp.eq.s32.totalorder %s20, 0
    %p271 = por %p269, %p270
    %p272 = scmp.ne.s32.totalorder %s264, %s266
    %p273 = scmp.eq.s32.totalorder %s25, 1
    %p274 = por %p272, %p273
    %p275 = scmp.ne.s32.totalorder %s266, %s267
    %p276 = scmp.eq.s32.totalorder %s25, 0
    %p277 = por %p275, %p276
    %p278 = scmp.ne.s32.totalorder %s266, %s267
    %p279 = scmp.eq.s32.totalorder %s26, 1
    %p280 = por %p278, %p279
    %p282 = scmp.ne.s32.totalorder %s267, %s281
    %p283 = scmp.eq.s32.totalorder %s26, 0
    %p284 = por %p282, %p283
    %s286 = sadd.s32 %s285, 1
    %p289 = scmp.eq.s32.totalorder %s20, 1
    %p290 = scmp.ne.s32.totalorder %s285, %s287
    %p291 = scmp.eq.s32.totalorder %s20, 0
    %p292 = por %p290, %p291
    %p293 = scmp.ne.s32.totalorder %s285, %s287
    %p294 = scmp.eq.s32.totalorder %s25, 1
    %p295 = por %p293, %p294
    %p296 = scmp.ne.s32.totalorder %s287, %s288
    %p297 = scmp.eq.s32.totalorder %s25, 0
    %p298 = por %p296, %p297
    %p299 = scmp.ne.s32.totalorder %s287, %s288
    %p300 = scmp.eq.s32.totalorder %s26, 1
    %p301 = por %p299, %p300
    %p303 = scmp.ne.s32.totalorder %s288, %s302
    %p304 = scmp.eq.s32.totalorder %s26, 0
    %p305 = por %p303, %p304
    %s307 = sadd.s32 %s306, 1
    %p310 = scmp.eq.s32.totalorder %s20, 1
    %p311 = scmp.ne.s32.totalorder %s306, %s308
    %p312 = scmp.eq.s32.totalorder %s20, 0
    %p313 = por %p311, %p312
    %p314 = scmp.ne.s32.totalorder %s306, %s308
    %p315 = scmp.eq.s32.totalorder %s25, 1
    %p316 = por %p314, %p315
    %p317 = scmp.ne.s32.totalorder %s308, %s309
    %p318 = scmp.eq.s32.totalorder %s25, 0
    %p319 = por %p317, %p318
    %p320 = scmp.ne.s32.totalorder %s308, %s309
    %p321 = scmp.eq.s32.totalorder %s26, 1
    %p322 = por %p320, %p321
    %p324 = scmp.ne.s32.totalorder %s309, %s323
    %p325 = scmp.eq.s32.totalorder %s26, 0
    %p326 = por %p324, %p325
    %s327 = ssub.s32 %s20, %s27
    %p328 = scmp.eq.s32.totalorder %s327, 0
    %s330 = sadd.s32 %s329, 1
    %s331 = scalar_select %p328, %s329, %s330
    %p334 = pneg %p328
    %p335 = scmp.eq.s32.totalorder %s20, 1
    %p336 = por %p334, %p335
    %p337 = scmp.ne.s32.totalorder %s329, %s332
    %p338 = scmp.eq.s32.totalorder %s20, 0
    %p339 = por %p337, %p338
    %p340 = scmp.ne.s32.totalorder %s329, %s332
    %p341 = scmp.eq.s32.totalorder %s25, 1
    %p342 = por %p340, %p341
    %p343 = scmp.ne.s32.totalorder %s332, %s333
    %p344 = scmp.eq.s32.totalorder %s25, 0
    %p345 = por %p343, %p344
    %p346 = scmp.ne.s32.totalorder %s332, %s333
    %p347 = scmp.eq.s32.totalorder %s26, 1
    %p348 = por %p346, %p347
    %p350 = scmp.ne.s32.totalorder %s333, %s349
    %p351 = scmp.eq.s32.totalorder %s26, 0
    %p352 = por %p350, %p351
    %p353 = scmp.le.s32.totalorder 1, %s20
    %p354 = scmp.lt.s32.totalorder %s20, 3
    %p355 = pnand %p353, %p354
    %p356 = pneg %p355
    // Predicated region
    $region9: #{tpu_custom_call.1} parent=5 // pred_check
      _
    $region10: #{tpu_custom_call.1} parent=5 // pred_check_branch
      %358 = sbr.rel (%p355) target = $region12
    $region11: #{tpu_custom_call.1} parent=5 // pred_region
      %s359 = ssub.s32 %s20, 1
      // Predicated region
      $region13: #{tpu_custom_call.1} parent=11 // pred_check
        %p360 = pneg %p67
      $region14: #{tpu_custom_call.1} parent=11 // pred_check_branch
        %362 = sbr.rel (%p360) target = $region16
      $region15: #{tpu_custom_call.1} parent=11 // pred_region
        _
      $region16: #{tpu_custom_call.1} parent=11 // pred_fallthru
        _
      // Predicated region
      $region17: #{tpu_custom_call.1} parent=11 // pred_check
        %p363 = pneg %p88
      $region18: #{tpu_custom_call.1} parent=11 // pred_check_branch
        %365 = sbr.rel (%p363) target = $region20
      $region19: #{tpu_custom_call.1} parent=11 // pred_region
        _
      $region20: #{tpu_custom_call.1} parent=11 // pred_fallthru
        _
      // Predicated region
      $region21: #{tpu_custom_call.1} parent=11 // pred_check
        %p366 = pneg %p109
      $region22: #{tpu_custom_call.1} parent=11 // pred_check_branch
        %368 = sbr.rel (%p366) target = $region24
      $region23: #{tpu_custom_call.1} parent=11 // pred_region
        _
      $region24: #{tpu_custom_call.1} parent=11 // pred_fallthru
        _
      // Predicated region
      $region25: #{tpu_custom_call.1} parent=11 // pred_check
        %p369 = pneg %p130
      $region26: #{tpu_custom_call.1} parent=11 // pred_check_branch
        %371 = sbr.rel (%p369) target = $region28
      $region27: #{tpu_custom_call.1} parent=11 // pred_region
        _
      $region28: #{tpu_custom_call.1} parent=11 // pred_fallthru
        _
      // Predicated region
      $region29: #{tpu_custom_call.1} parent=11 // pred_check
        %p372 = pneg %p151
      $region30: #{tpu_custom_call.1} parent=11 // pred_check_branch
        %374 = sbr.rel (%p372) target = $region32
      $region31: #{tpu_custom_call.1} parent=11 // pred_region
        _
      $region32: #{tpu_custom_call.1} parent=11 // pred_fallthru
        _
      // Predicated region
      $region33: #{tpu_custom_call.1} parent=11 // pred_check
        %p375 = pneg %p172
      $region34: #{tpu_custom_call.1} parent=11 // pred_check_branch
        %377 = sbr.rel (%p375) target = $region36
      $region35: #{tpu_custom_call.1} parent=11 // pred_region
        _
      $region36: #{tpu_custom_call.1} parent=11 // pred_fallthru
        _
      // Predicated region
      $region37: #{tpu_custom_call.1} parent=11 // pred_check
        %p378 = pneg %p193
      $region38: #{tpu_custom_call.1} parent=11 // pred_check_branch
        %380 = sbr.rel (%p378) target = $region40
      $region39: #{tpu_custom_call.1} parent=11 // pred_region
        _
      $region40: #{tpu_custom_call.1} parent=11 // pred_fallthru
        _
      // Predicated region
      $region41: #{tpu_custom_call.1} parent=11 // pred_check
        %p381 = pneg %p214
      $region42: #{tpu_custom_call.1} parent=11 // pred_check_branch
        %383 = sbr.rel (%p381) target = $region44
      $region43: #{tpu_custom_call.1} parent=11 // pred_region
        _
      $region44: #{tpu_custom_call.1} parent=11 // pred_fallthru
        _
      // Predicated region
      $region45: #{tpu_custom_call.1} parent=11 // pred_check
        %p384 = pneg %p235
      $region46: #{tpu_custom_call.1} parent=11 // pred_check_branch
        %386 = sbr.rel (%p384) target = $region48
      $region47: #{tpu_custom_call.1} parent=11 // pred_region
        _
      $region48: #{tpu_custom_call.1} parent=11 // pred_fallthru
        _
      // Predicated region
      $region49: #{tpu_custom_call.1} parent=11 // pred_check
        %p387 = pneg %p256
      $region50: #{tpu_custom_call.1} parent=11 // pred_check_branch
        %389 = sbr.rel (%p387) target = $region52
      $region51: #{tpu_custom_call.1} parent=11 // pred_region
        _
      $region52: #{tpu_custom_call.1} parent=11 // pred_fallthru
        _
      // Predicated region
      $region53: #{tpu_custom_call.1} parent=11 // pred_check
        %p390 = pneg %p277
      $region54: #{tpu_custom_call.1} parent=11 // pred_check_branch
        %392 = sbr.rel (%p390) target = $region56
      $region55: #{tpu_custom_call.1} parent=11 // pred_region
        _
      $region56: #{tpu_custom_call.1} parent=11 // pred_fallthru
        _
      // Predicated region
      $region57: #{tpu_custom_call.1} parent=11 // pred_check
        %p393 = pneg %p298
      $region58: #{tpu_custom_call.1} parent=11 // pred_check_branch
        %395 = sbr.rel (%p393) target = $region60
      $region59: #{tpu_custom_call.1} parent=11 // pred_region
        _
      $region60: #{tpu_custom_call.1} parent=11 // pred_fallthru
        _
      // Predicated region
      $region61: #{tpu_custom_call.1} parent=11 // pred_check
        %p396 = pneg %p319
      $region62: #{tpu_custom_call.1} parent=11 // pred_check_branch
        %398 = sbr.rel (%p396) target = $region64
      $region63: #{tpu_custom_call.1} parent=11 // pred_region
        _
      $region64: #{tpu_custom_call.1} parent=11 // pred_fallthru
        _
    $region12: #{tpu_custom_call.1} parent=5 // pred_fallthru
      _
    %p399 = scmp.lt.s32.totalorder %s20, 2
    // Predicated region
    $region65: #{tpu_custom_call.1} parent=5 // pred_check
      %p400 = pneg %p399
    $region66: #{tpu_custom_call.1} parent=5 // pred_check_branch
      %402 = sbr.rel (%p400) target = $region68
    $region67: #{tpu_custom_call.1} parent=5 // pred_region
      // Predicated region
      $region69: #{tpu_custom_call.1} parent=67 // pred_check
        %p403 = pneg %p40
      $region70: #{tpu_custom_call.1} parent=67 // pred_check_branch
        %405 = sbr.rel (%p403) target = $region72
      $region71: #{tpu_custom_call.1} parent=67 // pred_region
        %p406 = scmp.lt.s32.totalorder %s20, 1
        %s407 = scalar_select %p406, %s20, 1
        %s408 = smul.addr %s407, 32
        %s409 = smul.addr %s408, 8
        %s410 = scalar_lea.vmem %s0, %s409
      $region72: #{tpu_custom_call.1} parent=67 // pred_fallthru
        _
    $region68: #{tpu_custom_call.1} parent=5 // pred_fallthru
      _
    %p411 = scmp.le.s32.totalorder 1, %s20
    %p412 = scmp.lt.s32.totalorder %s20, 3
    %p413 = pnand %p411, %p412
    %p414 = pneg %p413
    // Predicated region
    $region73: #{tpu_custom_call.1} parent=5 // pred_check
      _
    $region74: #{tpu_custom_call.1} parent=5 // pred_check_branch
      %416 = sbr.rel (%p413) target = $region76
    $region75: #{tpu_custom_call.1} parent=5 // pred_region
      %s417 = ssub.s32 %s20, 1
      %p418 = scmp.lt.s32.totalorder %s25, 1
      %s419 = scalar_select %p418, %s25, 1
      %s420 = smul.addr %s419, 32
      %s421 = smul.addr %s420, 8
      %s422 = scalar_lea.vmem %s0, %s421
      %p423 = pneg %p46
      %p424 = pneg %p43
      %p425 = pneg %p67
      %p426 = pneg %p64
      %p427 = pneg %p88
      %p428 = pneg %p85
      %p429 = pneg %p109
      %p430 = pneg %p106
      %p431 = pneg %p130
      %p432 = pneg %p127
      %p433 = pneg %p151
      %p434 = pneg %p148
      %p435 = pneg %p172
      %p436 = pneg %p169
      %p437 = pneg %p193
      %p438 = pneg %p190
      %p439 = pneg %p214
      %p440 = pneg %p211
      %p441 = pneg %p235
      %p442 = pneg %p232
      %p443 = pneg %p256
      %p444 = pneg %p253
      %p445 = pneg %p277
      %p446 = pneg %p274
      %p447 = pneg %p298
      %p448 = pneg %p295
      %p449 = pneg %p319
      %p450 = pneg %p316
      %p451 = pneg %p345
      %p452 = pneg %p342
      %p453 = scmp.lt.s32.totalorder %s25, 1
      %s454 = scalar_select %p453, %s25, 1
      %s455 = smul.addr %s454, 32
      %s456 = smul.addr %s455, 8
      %s457 = scalar_lea.vmem %s14, %s456
      %p458 = scmp.lt.s32.totalorder %s25, 1
      %s459 = scalar_select %p458, %s25, 1
      %s460 = smul.addr %s459, 32
      %s461 = smul.addr %s460, 8
      %s462 = scalar_lea.vmem %s0, %s461
      %p463 = scmp.lt.s32.totalorder %s25, 1
      %s464 = scalar_select %p463, %s25, 1
      %s465 = smul.addr %s464, 32
      %s466 = smul.addr %s465, 8
      %s467 = scalar_lea.vmem %s14, %s466
      %v468 = vld [vmem:[%s462] sm:$0xff]
      %v469 = vld [vmem:[%s462 + $0x8] sm:$0xff]
      %v470 = vld [vmem:[%s462 + $0x10] sm:$0xff]
      %v471 = vld [vmem:[%s462 + $0x18] sm:$0xff]
      %v472 = vld [vmem:[%s462 + $0x20] sm:$0xff]
      %v473 = vld [vmem:[%s462 + $0x28] sm:$0xff]
      %v474 = vld [vmem:[%s462 + $0x30] sm:$0xff]
      %v475 = vld [vmem:[%s462 + $0x38] sm:$0xff]
      %v476 = vld [vmem:[%s462 + $0x40] sm:$0xff]
      %v477 = vld [vmem:[%s462 + $0x48] sm:$0xff]
      %v478 = vld [vmem:[%s462 + $0x50] sm:$0xff]
      %v479 = vld [vmem:[%s462 + $0x58] sm:$0xff]
      %v480 = vld [vmem:[%s462 + $0x60] sm:$0xff]
      %v481 = vld [vmem:[%s462 + $0x68] sm:$0xff]
      %v482 = vld [vmem:[%s462 + $0x70] sm:$0xff]
      %v483 = vld [vmem:[%s462 + $0x78] sm:$0xff]
      %v484 = vld [vmem:[%s462 + $0x80] sm:$0xff]
      %v485 = vld [vmem:[%s462 + $0x88] sm:$0xff]
      %v486 = vld [vmem:[%s462 + $0x90] sm:$0xff]
      %v487 = vld [vmem:[%s462 + $0x98] sm:$0xff]
      %v488 = vld [vmem:[%s462 + $0xa0] sm:$0xff]
      %v489 = vld [vmem:[%s462 + $0xa8] sm:$0xff]
      %v490 = vld [vmem:[%s462 + $0xb0] sm:$0xff]
      %v491 = vld [vmem:[%s462 + $0xb8] sm:$0xff]
      %v492 = vld [vmem:[%s462 + $0xc0] sm:$0xff]
      %v493 = vld [vmem:[%s462 + $0xc8] sm:$0xff]
      %v494 = vld [vmem:[%s462 + $0xd0] sm:$0xff]
      %v495 = vld [vmem:[%s462 + $0xd8] sm:$0xff]
      %v496 = vld [vmem:[%s462 + $0xe0] sm:$0xff]
      %v497 = vld [vmem:[%s462 + $0xe8] sm:$0xff]
      %v498 = vld [vmem:[%s462 + $0xf0] sm:$0xff]
      %v499 = vld [vmem:[%s462 + $0xf8] sm:$0xff]
      %v500 = vld [vmem:[%s1] sm:$0xff]
      %v501 = vld [vmem:[%s1 + $0x8] sm:$0xff]
      %v502 = vld [vmem:[%s1 + $0x10] sm:$0xff]
      %v503 = vld [vmem:[%s1 + $0x18] sm:$0xff]
      %v504 = vld [vmem:[%s2] sm:$0x1]
      %v506 = vperm.slane %v504, 0
      %vm508 = vcmask 261120
      %v510 = vsel %vm508, %v468, 0
      %v513 = vsel %vm508, %v469, 0
      %v516 = vsel %vm508, %v470, 0
      %v519 = vsel %vm508, %v471, 0
      %v522 = vsel %vm508, %v472, 0
      %v525 = vsel %vm508, %v473, 0
      %v528 = vsel %vm508, %v474, 0
      %v531 = vsel %vm508, %v475, 0
      %v534 = vsel %vm508, %v476, 0
      %v537 = vsel %vm508, %v477, 0
      %v540 = vsel %vm508, %v478, 0
      %v543 = vsel %vm508, %v479, 0
      %v546 = vsel %vm508, %v480, 0
      %v549 = vsel %vm508, %v481, 0
      %v552 = vsel %vm508, %v482, 0
      %v555 = vsel %vm508, %v483, 0
      %v558 = vsel %vm508, %v484, 0
      %v561 = vsel %vm508, %v485, 0
      %v564 = vsel %vm508, %v486, 0
      %v567 = vsel %vm508, %v487, 0
      %v570 = vsel %vm508, %v488, 0
      %v573 = vsel %vm508, %v489, 0
      %v576 = vsel %vm508, %v490, 0
      %v579 = vsel %vm508, %v491, 0
      %v582 = vsel %vm508, %v492, 0
      %v585 = vsel %vm508, %v493, 0
      %v588 = vsel %vm508, %v494, 0
      %v591 = vsel %vm508, %v495, 0
      %v594 = vsel %vm508, %v496, 0
      %v597 = vsel %vm508, %v497, 0
      %v600 = vsel %vm508, %v498, 0
      %v603 = vsel %vm508, %v499, 0
      %605 = vmatpush.msra.mxu0 0.0
      %606 = vmatpush.msra.mxu0 0.0
      %607 = vmatpush.msra.mxu0 0.0
      %608 = vmatpush.msra.mxu0 0.0
      %609 = vmatpush.msra.mxu0 0.0
      %610 = vmatpush.msra.mxu0 0.0
      %611 = vmatpush.msra.mxu0 0.0
      %612 = vmatpush.msra.mxu0 0.0
      %613 = vmatpush.msra.mxu0 0.0
      %614 = vmatpush.msra.mxu0 0.0
      %615 = vmatpush.msra.mxu0 0.0
      %616 = vmatpush.msra.mxu0 0.0
      %617 = vmatpush.msra.mxu0 %v503
      %618 = vmatpush.msra.mxu0 %v502
      %619 = vmatpush.msra.mxu0 %v501
      %620 = vmatpush.msra.mxu0 %v500
      %621 = vmatmul.f32.gmra.mxu0 %v510
      %v622 = vpop.f32.mrf.mxu0
      %v623 = vadd.f32 %v506, %v622
      %624 = vmatmul.f32.gmra.mxu0 %v513
      %v625 = vpop.f32.mrf.mxu0
      %v626 = vadd.f32 %v506, %v625
      %627 = vmatmul.f32.gmra.mxu0 %v516
      %v628 = vpop.f32.mrf.mxu0
      %v629 = vadd.f32 %v506, %v628
      %630 = vmatmul.f32.gmra.mxu0 %v519
      %v631 = vpop.f32.mrf.mxu0
      %v632 = vadd.f32 %v506, %v631
      %633 = vmatmul.f32.gmra.mxu0 %v522
      %v634 = vpop.f32.mrf.mxu0
      %v635 = vadd.f32 %v506, %v634
      %636 = vmatmul.f32.gmra.mxu0 %v525
      %v637 = vpop.f32.mrf.mxu0
      %v638 = vadd.f32 %v506, %v637
      %639 = vmatmul.f32.gmra.mxu0 %v528
      %v640 = vpop.f32.mrf.mxu0
      %v641 = vadd.f32 %v506, %v640
      %642 = vmatmul.f32.gmra.mxu0 %v531
      %v643 = vpop.f32.mrf.mxu0
      %v644 = vadd.f32 %v506, %v643
      %645 = vmatmul.f32.gmra.mxu0 %v534
      %v646 = vpop.f32.mrf.mxu0
      %v647 = vadd.f32 %v506, %v646
      %648 = vmatmul.f32.gmra.mxu0 %v537
      %v649 = vpop.f32.mrf.mxu0
      %v650 = vadd.f32 %v506, %v649
      %651 = vmatmul.f32.gmra.mxu0 %v540
      %v652 = vpop.f32.mrf.mxu0
      %v653 = vadd.f32 %v506, %v652
      %654 = vmatmul.f32.gmra.mxu0 %v543
      %v655 = vpop.f32.mrf.mxu0
      %v656 = vadd.f32 %v506, %v655
      %657 = vmatmul.f32.gmra.mxu0 %v546
      %v658 = vpop.f32.mrf.mxu0
      %v659 = vadd.f32 %v506, %v658
      %660 = vmatmul.f32.gmra.mxu0 %v549
      %v661 = vpop.f32.mrf.mxu0
      %v662 = vadd.f32 %v506, %v661
      %663 = vmatmul.f32.gmra.mxu0 %v552
      %v664 = vpop.f32.mrf.mxu0
      %v665 = vadd.f32 %v506, %v664
      %666 = vmatmul.f32.gmra.mxu0 %v555
      %v667 = vpop.f32.mrf.mxu0
      %v668 = vadd.f32 %v506, %v667
      %669 = vmatmul.f32.gmra.mxu0 %v558
      %v670 = vpop.f32.mrf.mxu0
      %v671 = vadd.f32 %v506, %v670
      %672 = vmatmul.f32.gmra.mxu0 %v561
      %v673 = vpop.f32.mrf.mxu0
      %v674 = vadd.f32 %v506, %v673
      %675 = vmatmul.f32.gmra.mxu0 %v564
      %v676 = vpop.f32.mrf.mxu0
      %v677 = vadd.f32 %v506, %v676
      %678 = vmatmul.f32.gmra.mxu0 %v567
      %v679 = vpop.f32.mrf.mxu0
      %v680 = vadd.f32 %v506, %v679
      %681 = vmatmul.f32.gmra.mxu0 %v570
      %v682 = vpop.f32.mrf.mxu0
      %v683 = vadd.f32 %v506, %v682
      %684 = vmatmul.f32.gmra.mxu0 %v573
      %v685 = vpop.f32.mrf.mxu0
      %v686 = vadd.f32 %v506, %v685
      %687 = vmatmul.f32.gmra.mxu0 %v576
      %v688 = vpop.f32.mrf.mxu0
      %v689 = vadd.f32 %v506, %v688
      %690 = vmatmul.f32.gmra.mxu0 %v579
      %v691 = vpop.f32.mrf.mxu0
      %v692 = vadd.f32 %v506, %v691
      %693 = vmatmul.f32.gmra.mxu0 %v582
      %v694 = vpop.f32.mrf.mxu0
      %v695 = vadd.f32 %v506, %v694
      %696 = vmatmul.f32.gmra.mxu0 %v585
      %v697 = vpop.f32.mrf.mxu0
      %v698 = vadd.f32 %v506, %v697
      %699 = vmatmul.f32.gmra.mxu0 %v588
      %v700 = vpop.f32.mrf.mxu0
      %v701 = vadd.f32 %v506, %v700
      %702 = vmatmul.f32.gmra.mxu0 %v591
      %v703 = vpop.f32.mrf.mxu0
      %v704 = vadd.f32 %v506, %v703
      %705 = vmatmul.f32.gmra.mxu0 %v594
      %v706 = vpop.f32.mrf.mxu0
      %v707 = vadd.f32 %v506, %v706
      %708 = vmatmul.f32.gmra.mxu0 %v597
      %v709 = vpop.f32.mrf.mxu0
      %v710 = vadd.f32 %v506, %v709
      %711 = vmatmul.f32.gmra.mxu0 %v600
      %v712 = vpop.f32.mrf.mxu0
      %v713 = vadd.f32 %v506, %v712
      %714 = vmatmul.f32.gmra.mxu0 %v603
      %v715 = vpop.f32.mrf.mxu0
      %v716 = vadd.f32 %v506, %v715
      %717 = vdwg.mxu0
      %v718 = vmax.f32 %v623, 0.0
      %v719 = vmax.f32 %v626, 0.0
      %v720 = vmax.f32 %v629, 0.0
      %v721 = vmax.f32 %v632, 0.0
      %v722 = vmax.f32 %v635, 0.0
      %v723 = vmax.f32 %v638, 0.0
      %v724 = vmax.f32 %v641, 0.0
      %v725 = vmax.f32 %v644, 0.0
      %v726 = vmax.f32 %v647, 0.0
      %v727 = vmax.f32 %v650, 0.0
      %v728 = vmax.f32 %v653, 0.0
      %v729 = vmax.f32 %v656, 0.0
      %v730 = vmax.f32 %v659, 0.0
      %v731 = vmax.f32 %v662, 0.0
      %v732 = vmax.f32 %v665, 0.0
      %v733 = vmax.f32 %v668, 0.0
      %v734 = vmax.f32 %v671, 0.0
      %v735 = vmax.f32 %v674, 0.0
      %v736 = vmax.f32 %v677, 0.0
      %v737 = vmax.f32 %v680, 0.0
      %v738 = vmax.f32 %v683, 0.0
      %v739 = vmax.f32 %v686, 0.0
      %v740 = vmax.f32 %v689, 0.0
      %v741 = vmax.f32 %v692, 0.0
      %v742 = vmax.f32 %v695, 0.0
      %v743 = vmax.f32 %v698, 0.0
      %v744 = vmax.f32 %v701, 0.0
      %v745 = vmax.f32 %v704, 0.0
      %v746 = vmax.f32 %v707, 0.0
      %v747 = vmax.f32 %v710, 0.0
      %v748 = vmax.f32 %v713, 0.0
      %v749 = vmax.f32 %v716, 0.0
      %v750 = vld [vmem:[%s3] sm:$0xff]
      %v751 = vld [vmem:[%s3 + $0x8] sm:$0xff]
      %v752 = vld [vmem:[%s3 + $0x10] sm:$0xff]
      %v753 = vld [vmem:[%s3 + $0x18] sm:$0xff]
      %v754 = vld [vmem:[%s3 + $0x20] sm:$0xff]
      %v755 = vld [vmem:[%s3 + $0x28] sm:$0xff]
      %v756 = vld [vmem:[%s3 + $0x30] sm:$0xff]
      %v757 = vld [vmem:[%s3 + $0x38] sm:$0xff]
      %v758 = vld [vmem:[%s4] sm:$0x1]
      %v760 = vperm.slane %v758, 0
      %vm762 = vcmask 523264
      %v764 = vsel %vm762, %v718, 0
      %v767 = vsel %vm762, %v719, 0
      %v770 = vsel %vm762, %v720, 0
      %v773 = vsel %vm762, %v721, 0
      %v776 = vsel %vm762, %v722, 0
      %v779 = vsel %vm762, %v723, 0
      %v782 = vsel %vm762, %v724, 0
      %v785 = vsel %vm762, %v725, 0
      %v788 = vsel %vm762, %v726, 0
      %v791 = vsel %vm762, %v727, 0
      %v794 = vsel %vm762, %v728, 0
      %v797 = vsel %vm762, %v729, 0
      %v800 = vsel %vm762, %v730, 0
      %v803 = vsel %vm762, %v731, 0
      %v806 = vsel %vm762, %v732, 0
      %v809 = vsel %vm762, %v733, 0
      %v812 = vsel %vm762, %v734, 0
      %v815 = vsel %vm762, %v735, 0
      %v818 = vsel %vm762, %v736, 0
      %v821 = vsel %vm762, %v737, 0
      %v824 = vsel %vm762, %v738, 0
      %v827 = vsel %vm762, %v739, 0
      %v830 = vsel %vm762, %v740, 0
      %v833 = vsel %vm762, %v741, 0
      %v836 = vsel %vm762, %v742, 0
      %v839 = vsel %vm762, %v743, 0
      %v842 = vsel %vm762, %v744, 0
      %v845 = vsel %vm762, %v745, 0
      %v848 = vsel %vm762, %v746, 0
      %v851 = vsel %vm762, %v747, 0
      %v854 = vsel %vm762, %v748, 0
      %v857 = vsel %vm762, %v749, 0
      %859 = vmatpush.msra.mxu0 0.0
      %860 = vmatpush.msra.mxu0 0.0
      %861 = vmatpush.msra.mxu0 0.0
      %862 = vmatpush.msra.mxu0 0.0
      %863 = vmatpush.msra.mxu0 0.0
      %864 = vmatpush.msra.mxu0 0.0
      %865 = vmatpush.msra.mxu0 0.0
      %866 = vmatpush.msra.mxu0 0.0
      %867 = vmatpush.msra.mxu0 %v757
      %868 = vmatpush.msra.mxu0 %v756
      %869 = vmatpush.msra.mxu0 %v755
      %870 = vmatpush.msra.mxu0 %v754
      %871 = vmatpush.msra.mxu0 %v753
      %872 = vmatpush.msra.mxu0 %v752
      %873 = vmatpush.msra.mxu0 %v751
      %874 = vmatpush.msra.mxu0 %v750
      %875 = vmatmul.f32.gmra.mxu0 %v764
      %v876 = vpop.f32.mrf.mxu0
      %v877 = vadd.f32 %v760, %v876
      %878 = vmatmul.f32.gmra.mxu0 %v767
      %v879 = vpop.f32.mrf.mxu0
      %v880 = vadd.f32 %v760, %v879
      %881 = vmatmul.f32.gmra.mxu0 %v770
      %v882 = vpop.f32.mrf.mxu0
      %v883 = vadd.f32 %v760, %v882
      %884 = vmatmul.f32.gmra.mxu0 %v773
      %v885 = vpop.f32.mrf.mxu0
      %v886 = vadd.f32 %v760, %v885
      %887 = vmatmul.f32.gmra.mxu0 %v776
      %v888 = vpop.f32.mrf.mxu0
      %v889 = vadd.f32 %v760, %v888
      %890 = vmatmul.f32.gmra.mxu0 %v779
      %v891 = vpop.f32.mrf.mxu0
      %v892 = vadd.f32 %v760, %v891
      %893 = vmatmul.f32.gmra.mxu0 %v782
      %v894 = vpop.f32.mrf.mxu0
      %v895 = vadd.f32 %v760, %v894
      %896 = vmatmul.f32.gmra.mxu0 %v785
      %v897 = vpop.f32.mrf.mxu0
      %v898 = vadd.f32 %v760, %v897
      %899 = vmatmul.f32.gmra.mxu0 %v788
      %v900 = vpop.f32.mrf.mxu0
      %v901 = vadd.f32 %v760, %v900
      %902 = vmatmul.f32.gmra.mxu0 %v791
      %v903 = vpop.f32.mrf.mxu0
      %v904 = vadd.f32 %v760, %v903
      %905 = vmatmul.f32.gmra.mxu0 %v794
      %v906 = vpop.f32.mrf.mxu0
      %v907 = vadd.f32 %v760, %v906
      %908 = vmatmul.f32.gmra.mxu0 %v797
      %v909 = vpop.f32.mrf.mxu0
      %v910 = vadd.f32 %v760, %v909
      %911 = vmatmul.f32.gmra.mxu0 %v800
      %v912 = vpop.f32.mrf.mxu0
      %v913 = vadd.f32 %v760, %v912
      %914 = vmatmul.f32.gmra.mxu0 %v803
      %v915 = vpop.f32.mrf.mxu0
      %v916 = vadd.f32 %v760, %v915
      %917 = vmatmul.f32.gmra.mxu0 %v806
      %v918 = vpop.f32.mrf.mxu0
      %v919 = vadd.f32 %v760, %v918
      %920 = vmatmul.f32.gmra.mxu0 %v809
      %v921 = vpop.f32.mrf.mxu0
      %v922 = vadd.f32 %v760, %v921
      %923 = vmatmul.f32.gmra.mxu0 %v812
      %v924 = vpop.f32.mrf.mxu0
      %v925 = vadd.f32 %v760, %v924
      %926 = vmatmul.f32.gmra.mxu0 %v815
      %v927 = vpop.f32.mrf.mxu0
      %v928 = vadd.f32 %v760, %v927
      %929 = vmatmul.f32.gmra.mxu0 %v818
      %v930 = vpop.f32.mrf.mxu0
      %v931 = vadd.f32 %v760, %v930
      %932 = vmatmul.f32.gmra.mxu0 %v821
      %v933 = vpop.f32.mrf.mxu0
      %v934 = vadd.f32 %v760, %v933
      %935 = vmatmul.f32.gmra.mxu0 %v824
      %v936 = vpop.f32.mrf.mxu0
      %v937 = vadd.f32 %v760, %v936
      %938 = vmatmul.f32.gmra.mxu0 %v827
      %v939 = vpop.f32.mrf.mxu0
      %v940 = vadd.f32 %v760, %v939
      %941 = vmatmul.f32.gmra.mxu0 %v830
      %v942 = vpop.f32.mrf.mxu0
      %v943 = vadd.f32 %v760, %v942
      %944 = vmatmul.f32.gmra.mxu0 %v833
      %v945 = vpop.f32.mrf.mxu0
      %v946 = vadd.f32 %v760, %v945
      %947 = vmatmul.f32.gmra.mxu0 %v836
      %v948 = vpop.f32.mrf.mxu0
      %v949 = vadd.f32 %v760, %v948
      %950 = vmatmul.f32.gmra.mxu0 %v839
      %v951 = vpop.f32.mrf.mxu0
      %v952 = vadd.f32 %v760, %v951
      %953 = vmatmul.f32.gmra.mxu0 %v842
      %v954 = vpop.f32.mrf.mxu0
      %v955 = vadd.f32 %v760, %v954
      %956 = vmatmul.f32.gmra.mxu0 %v845
      %v957 = vpop.f32.mrf.mxu0
      %v958 = vadd.f32 %v760, %v957
      %959 = vmatmul.f32.gmra.mxu0 %v848
      %v960 = vpop.f32.mrf.mxu0
      %v961 = vadd.f32 %v760, %v960
      %962 = vmatmul.f32.gmra.mxu0 %v851
      %v963 = vpop.f32.mrf.mxu0
      %v964 = vadd.f32 %v760, %v963
      %965 = vmatmul.f32.gmra.mxu0 %v854
      %v966 = vpop.f32.mrf.mxu0
      %v967 = vadd.f32 %v760, %v966
      %968 = vmatmul.f32.gmra.mxu0 %v857
      %v969 = vpop.f32.mrf.mxu0
      %v970 = vadd.f32 %v760, %v969
      %971 = vdwg.mxu0
      %v972 = vld [vmem:[%s5] sm:$0xff]
      %v973 = vld [vmem:[%s5 + $0x8] sm:$0xff]
      %v974 = vld [vmem:[%s5 + $0x10] sm:$0xff]
      %v975 = vld [vmem:[%s5 + $0x18] sm:$0xff]
      %v976 = vld [vmem:[%s5 + $0x20] sm:$0xff]
      %v977 = vld [vmem:[%s5 + $0x28] sm:$0xff]
      %v978 = vld [vmem:[%s5 + $0x30] sm:$0xff]
      %v979 = vld [vmem:[%s5 + $0x38] sm:$0xff]
      %v981 = vsel %vm762, %v877, 0
      %v984 = vsel %vm762, %v880, 0
      %v987 = vsel %vm762, %v883, 0
      %v990 = vsel %vm762, %v886, 0
      %v993 = vsel %vm762, %v889, 0
      %v996 = vsel %vm762, %v892, 0
      %v999 = vsel %vm762, %v895, 0
      %v1002 = vsel %vm762, %v898, 0
      %v1005 = vsel %vm762, %v901, 0
      %v1008 = vsel %vm762, %v904, 0
      %v1011 = vsel %vm762, %v907, 0
      %v1014 = vsel %vm762, %v910, 0
      %v1017 = vsel %vm762, %v913, 0
      %v1020 = vsel %vm762, %v916, 0
      %v1023 = vsel %vm762, %v919, 0
      %v1026 = vsel %vm762, %v922, 0
      %v1029 = vsel %vm762, %v925, 0
      %v1032 = vsel %vm762, %v928, 0
      %v1035 = vsel %vm762, %v931, 0
      %v1038 = vsel %vm762, %v934, 0
      %v1041 = vsel %vm762, %v937, 0
      %v1044 = vsel %vm762, %v940, 0
      %v1047 = vsel %vm762, %v943, 0
      %v1050 = vsel %vm762, %v946, 0
      %v1053 = vsel %vm762, %v949, 0
      %v1056 = vsel %vm762, %v952, 0
      %v1059 = vsel %vm762, %v955, 0
      %v1062 = vsel %vm762, %v958, 0
      %v1065 = vsel %vm762, %v961, 0
      %v1068 = vsel %vm762, %v964, 0
      %v1071 = vsel %vm762, %v967, 0
      %v1074 = vsel %vm762, %v970, 0
      %1076 = vmatpush.msra.mxu0 0.0
      %1077 = vmatpush.msra.mxu0 0.0
      %1078 = vmatpush.msra.mxu0 0.0
      %1079 = vmatpush.msra.mxu0 0.0
      %1080 = vmatpush.msra.mxu0 0.0
      %1081 = vmatpush.msra.mxu0 0.0
      %1082 = vmatpush.msra.mxu0 0.0
      %1083 = vmatpush.msra.mxu0 0.0
      %1084 = vmatpush.msra.mxu0 %v979
      %1085 = vmatpush.msra.mxu0 %v978
      %1086 = vmatpush.msra.mxu0 %v977
      %1087 = vmatpush.msra.mxu0 %v976
      %1088 = vmatpush.msra.mxu0 %v975
      %1089 = vmatpush.msra.mxu0 %v974
      %1090 = vmatpush.msra.mxu0 %v973
      %1091 = vmatpush.msra.mxu0 %v972
      %1092 = vmatmul.f32.gmra.mxu0 %v981
      %v1093 = vpop.f32.mrf.mxu0
      %v1094 = vadd.f32 0.0, %v1093
      %1095 = vmatmul.f32.gmra.mxu0 %v984
      %v1096 = vpop.f32.mrf.mxu0
      %v1097 = vadd.f32 0.0, %v1096
      %1098 = vmatmul.f32.gmra.mxu0 %v987
      %v1099 = vpop.f32.mrf.mxu0
      %v1100 = vadd.f32 0.0, %v1099
      %1101 = vmatmul.f32.gmra.mxu0 %v990
      %v1102 = vpop.f32.mrf.mxu0
      %v1103 = vadd.f32 0.0, %v1102
      %1104 = vmatmul.f32.gmra.mxu0 %v993
      %v1105 = vpop.f32.mrf.mxu0
      %v1106 = vadd.f32 0.0, %v1105
      %1107 = vmatmul.f32.gmra.mxu0 %v996
      %v1108 = vpop.f32.mrf.mxu0
      %v1109 = vadd.f32 0.0, %v1108
      %1110 = vmatmul.f32.gmra.mxu0 %v999
      %v1111 = vpop.f32.mrf.mxu0
      %v1112 = vadd.f32 0.0, %v1111
      %1113 = vmatmul.f32.gmra.mxu0 %v1002
      %v1114 = vpop.f32.mrf.mxu0
      %v1115 = vadd.f32 0.0, %v1114
      %1116 = vmatmul.f32.gmra.mxu0 %v1005
      %v1117 = vpop.f32.mrf.mxu0
      %v1118 = vadd.f32 0.0, %v1117
      %1119 = vmatmul.f32.gmra.mxu0 %v1008
      %v1120 = vpop.f32.mrf.mxu0
      %v1121 = vadd.f32 0.0, %v1120
      %1122 = vmatmul.f32.gmra.mxu0 %v1011
      %v1123 = vpop.f32.mrf.mxu0
      %v1124 = vadd.f32 0.0, %v1123
      %1125 = vmatmul.f32.gmra.mxu0 %v1014
      %v1126 = vpop.f32.mrf.mxu0
      %v1127 = vadd.f32 0.0, %v1126
      %1128 = vmatmul.f32.gmra.mxu0 %v1017
      %v1129 = vpop.f32.mrf.mxu0
      %v1130 = vadd.f32 0.0, %v1129
      %1131 = vmatmul.f32.gmra.mxu0 %v1020
      %v1132 = vpop.f32.mrf.mxu0
      %v1133 = vadd.f32 0.0, %v1132
      %1134 = vmatmul.f32.gmra.mxu0 %v1023
      %v1135 = vpop.f32.mrf.mxu0
      %v1136 = vadd.f32 0.0, %v1135
      %1137 = vmatmul.f32.gmra.mxu0 %v1026
      %v1138 = vpop.f32.mrf.mxu0
      %v1139 = vadd.f32 0.0, %v1138
      %1140 = vmatmul.f32.gmra.mxu0 %v1029
      %v1141 = vpop.f32.mrf.mxu0
      %v1142 = vadd.f32 0.0, %v1141
      %1143 = vmatmul.f32.gmra.mxu0 %v1032
      %v1144 = vpop.f32.mrf.mxu0
      %v1145 = vadd.f32 0.0, %v1144
      %1146 = vmatmul.f32.gmra.mxu0 %v1035
      %v1147 = vpop.f32.mrf.mxu0
      %v1148 = vadd.f32 0.0, %v1147
      %1149 = vmatmul.f32.gmra.mxu0 %v1038
      %v1150 = vpop.f32.mrf.mxu0
      %v1151 = vadd.f32 0.0, %v1150
      %1152 = vmatmul.f32.gmra.mxu0 %v1041
      %v1153 = vpop.f32.mrf.mxu0
      %v1154 = vadd.f32 0.0, %v1153
      %1155 = vmatmul.f32.gmra.mxu0 %v1044
      %v1156 = vpop.f32.mrf.mxu0
      %v1157 = vadd.f32 0.0, %v1156
      %1158 = vmatmul.f32.gmra.mxu0 %v1047
      %v1159 = vpop.f32.mrf.mxu0
      %v1160 = vadd.f32 0.0, %v1159
      %1161 = vmatmul.f32.gmra.mxu0 %v1050
      %v1162 = vpop.f32.mrf.mxu0
      %v1163 = vadd.f32 0.0, %v1162
      %1164 = vmatmul.f32.gmra.mxu0 %v1053
      %v1165 = vpop.f32.mrf.mxu0
      %v1166 = vadd.f32 0.0, %v1165
      %1167 = vmatmul.f32.gmra.mxu0 %v1056
      %v1168 = vpop.f32.mrf.mxu0
      %v1169 = vadd.f32 0.0, %v1168
      %1170 = vmatmul.f32.gmra.mxu0 %v1059
      %v1171 = vpop.f32.mrf.mxu0
      %v1172 = vadd.f32 0.0, %v1171
      %1173 = vmatmul.f32.gmra.mxu0 %v1062
      %v1174 = vpop.f32.mrf.mxu0
      %v1175 = vadd.f32 0.0, %v1174
      %1176 = vmatmul.f32.gmra.mxu0 %v1065
      %v1177 = vpop.f32.mrf.mxu0
      %v1178 = vadd.f32 0.0, %v1177
      %1179 = vmatmul.f32.gmra.mxu0 %v1068
      %v1180 = vpop.f32.mrf.mxu0
      %v1181 = vadd.f32 0.0, %v1180
      %1182 = vmatmul.f32.gmra.mxu0 %v1071
      %v1183 = vpop.f32.mrf.mxu0
      %v1184 = vadd.f32 0.0, %v1183
      %1185 = vmatmul.f32.gmra.mxu0 %v1074
      %v1186 = vpop.f32.mrf.mxu0
      %v1187 = vadd.f32 0.0, %v1186
      %1188 = vdwg.mxu0
      %vm1189 = vcmask 31744
      %v1190 = vsel %vm1189, %v1094, -inf
      %v1191 = vsel %vm1189, %v1097, -inf
      %v1192 = vsel %vm1189, %v1100, -inf
      %v1193 = vsel %vm1189, %v1103, -inf
      %v1194 = vsel %vm1189, %v1106, -inf
      %v1195 = vmax.f32 %v1190, %v1194
      %v1196 = vsel %vm1189, %v1109, -inf
      %v1197 = vmax.f32 %v1191, %v1196
      %v1198 = vsel %vm1189, %v1112, -inf
      %v1199 = vmax.f32 %v1192, %v1198
      %v1200 = vsel %vm1189, %v1115, -inf
      %v1201 = vmax.f32 %v1193, %v1200
      %v1202 = vsel %vm1189, %v1118, -inf
      %v1203 = vmax.f32 %v1195, %v1202
      %v1204 = vsel %vm1189, %v1121, -inf
      %v1205 = vmax.f32 %v1197, %v1204
      %v1206 = vsel %vm1189, %v1124, -inf
      %v1207 = vmax.f32 %v1199, %v1206
      %v1208 = vsel %vm1189, %v1127, -inf
      %v1209 = vmax.f32 %v1201, %v1208
      %v1210 = vsel %vm1189, %v1130, -inf
      %v1211 = vmax.f32 %v1203, %v1210
      %v1212 = vsel %vm1189, %v1133, -inf
      %v1213 = vmax.f32 %v1205, %v1212
      %v1214 = vsel %vm1189, %v1136, -inf
      %v1215 = vmax.f32 %v1207, %v1214
      %v1216 = vsel %vm1189, %v1139, -inf
      %v1217 = vmax.f32 %v1209, %v1216
      %v1218 = vsel %vm1189, %v1142, -inf
      %v1219 = vmax.f32 %v1211, %v1218
      %v1220 = vsel %vm1189, %v1145, -inf
      %v1221 = vmax.f32 %v1213, %v1220
      %v1222 = vsel %vm1189, %v1148, -inf
      %v1223 = vmax.f32 %v1215, %v1222
      %v1224 = vsel %vm1189, %v1151, -inf
      %v1225 = vmax.f32 %v1217, %v1224
      %v1226 = vsel %vm1189, %v1154, -inf
      %v1227 = vmax.f32 %v1219, %v1226
      %v1228 = vsel %vm1189, %v1157, -inf
      %v1229 = vmax.f32 %v1221, %v1228
      %v1230 = vsel %vm1189, %v1160, -inf
      %v1231 = vmax.f32 %v1223, %v1230
      %v1232 = vsel %vm1189, %v1163, -inf
      %v1233 = vmax.f32 %v1225, %v1232
      %v1234 = vsel %vm1189, %v1166, -inf
      %v1235 = vmax.f32 %v1227, %v1234
      %v1236 = vsel %vm1189, %v1169, -inf
      %v1237 = vmax.f32 %v1229, %v1236
      %v1238 = vsel %vm1189, %v1172, -inf
      %v1239 = vmax.f32 %v1231, %v1238
      %v1240 = vsel %vm1189, %v1175, -inf
      %v1241 = vmax.f32 %v1233, %v1240
      %v1242 = vsel %vm1189, %v1178, -inf
      %v1243 = vmax.f32 %v1235, %v1242
      %v1244 = vsel %vm1189, %v1181, -inf
      %v1245 = vmax.f32 %v1237, %v1244
      %v1246 = vsel %vm1189, %v1184, -inf
      %v1247 = vmax.f32 %v1239, %v1246
      %v1248 = vsel %vm1189, %v1187, -inf
      %v1249 = vmax.f32 %v1241, %v1248
      %v1250 = vmax.f32 %v1243, %v1245
      %v1251 = vmax.f32 %v1247, %v1249
      %v1252 = vmax.f32 %v1250, %v1251
      %v1253 = vrot.slane %v1252, 4
      %v1254 = vmax.f32 %v1252, %v1253
      %v1255 = vrot.slane %v1254, 2
      %v1256 = vmax.f32 %v1254, %v1255
      %v1257 = vrot.slane %v1256, 1
      %v1258 = vmax.f32 %v1256, %v1257
      %v1259 = vsub.f32 %v1094, %v1258
      %v1260 = vsub.f32 %v1097, %v1258
      %v1261 = vsub.f32 %v1100, %v1258
      %v1262 = vsub.f32 %v1103, %v1258
      %v1263 = vsub.f32 %v1106, %v1258
      %v1264 = vsub.f32 %v1109, %v1258
      %v1265 = vsub.f32 %v1112, %v1258
      %v1266 = vsub.f32 %v1115, %v1258
      %v1267 = vsub.f32 %v1118, %v1258
      %v1268 = vsub.f32 %v1121, %v1258
      %v1269 = vsub.f32 %v1124, %v1258
      %v1270 = vsub.f32 %v1127, %v1258
      %v1271 = vsub.f32 %v1130, %v1258
      %v1272 = vsub.f32 %v1133, %v1258
      %v1273 = vsub.f32 %v1136, %v1258
      %v1274 = vsub.f32 %v1139, %v1258
      %v1275 = vsub.f32 %v1142, %v1258
      %v1276 = vsub.f32 %v1145, %v1258
      %v1277 = vsub.f32 %v1148, %v1258
      %v1278 = vsub.f32 %v1151, %v1258
      %v1279 = vsub.f32 %v1154, %v1258
      %v1280 = vsub.f32 %v1157, %v1258
      %v1281 = vsub.f32 %v1160, %v1258
      %v1282 = vsub.f32 %v1163, %v1258
      %v1283 = vsub.f32 %v1166, %v1258
      %v1284 = vsub.f32 %v1169, %v1258
      %v1285 = vsub.f32 %v1172, %v1258
      %v1286 = vsub.f32 %v1175, %v1258
      %v1287 = vsub.f32 %v1178, %v1258
      %v1288 = vsub.f32 %v1181, %v1258
      %v1289 = vsub.f32 %v1184, %v1258
      %v1290 = vsub.f32 %v1187, %v1258
      %v1291 = vmul.f32 %v1259, 1.442695
      %v1292 = vpow.pop %v1291
      %v1293 = vmul.f32 %v1260, 1.442695
      %v1294 = vpow.pop %v1293
      %v1295 = vmul.f32 %v1261, 1.442695
      %v1296 = vpow.pop %v1295
      %v1297 = vmul.f32 %v1262, 1.442695
      %v1298 = vpow.pop %v1297
      %v1299 = vmul.f32 %v1263, 1.442695
      %v1300 = vpow.pop %v1299
      %v1301 = vmul.f32 %v1264, 1.442695
      %v1302 = vpow.pop %v1301
      %v1303 = vmul.f32 %v1265, 1.442695
      %v1304 = vpow.pop %v1303
      %v1305 = vmul.f32 %v1266, 1.442695
      %v1306 = vpow.pop %v1305
      %v1307 = vmul.f32 %v1267, 1.442695
      %v1308 = vpow.pop %v1307
      %v1309 = vmul.f32 %v1268, 1.442695
      %v1310 = vpow.pop %v1309
      %v1311 = vmul.f32 %v1269, 1.442695
      %v1312 = vpow.pop %v1311
      %v1313 = vmul.f32 %v1270, 1.442695
      %v1314 = vpow.pop %v1313
      %v1315 = vmul.f32 %v1271, 1.442695
      %v1316 = vpow.pop %v1315
      %v1317 = vmul.f32 %v1272, 1.442695
      %v1318 = vpow.pop %v1317
      %v1319 = vmul.f32 %v1273, 1.442695
      %v1320 = vpow.pop %v1319
      %v1321 = vmul.f32 %v1274, 1.442695
      %v1322 = vpow.pop %v1321
      %v1323 = vmul.f32 %v1275, 1.442695
      %v1324 = vpow.pop %v1323
      %v1325 = vmul.f32 %v1276, 1.442695
      %v1326 = vpow.pop %v1325
      %v1327 = vmul.f32 %v1277, 1.442695
      %v1328 = vpow.pop %v1327
      %v1329 = vmul.f32 %v1278, 1.442695
      %v1330 = vpow.pop %v1329
      %v1331 = vmul.f32 %v1279, 1.442695
      %v1332 = vpow.pop %v1331
      %v1333 = vmul.f32 %v1280, 1.442695
      %v1334 = vpow.pop %v1333
      %v1335 = vmul.f32 %v1281, 1.442695
      %v1336 = vpow.pop %v1335
      %v1337 = vmul.f32 %v1282, 1.442695
      %v1338 = vpow.pop %v1337
      %v1339 = vmul.f32 %v1283, 1.442695
      %v1340 = vpow.pop %v1339
      %v1341 = vmul.f32 %v1284, 1.442695
      %v1342 = vpow.pop %v1341
      %v1343 = vmul.f32 %v1285, 1.442695
      %v1344 = vpow.pop %v1343
      %v1345 = vmul.f32 %v1286, 1.442695
      %v1346 = vpow.pop %v1345
      %v1347 = vmul.f32 %v1287, 1.442695
      %v1348 = vpow.pop %v1347
      %v1349 = vmul.f32 %v1288, 1.442695
      %v1350 = vpow.pop %v1349
      %v1351 = vmul.f32 %v1289, 1.442695
      %v1352 = vpow.pop %v1351
      %v1353 = vmul.f32 %v1290, 1.442695
      %v1354 = vpow.pop %v1353
      %v1355 = vsel %vm1189, %v1292, 0.0
      %v1356 = vsel %vm1189, %v1294, 0.0
      %v1357 = vadd.f32 %v1355, %v1356
      %v1358 = vsel %vm1189, %v1296, 0.0
      %v1359 = vadd.f32 %v1357, %v1358
      %v1360 = vsel %vm1189, %v1298, 0.0
      %v1361 = vadd.f32 %v1359, %v1360
      %v1362 = vsel %vm1189, %v1300, 0.0
      %v1363 = vadd.f32 %v1361, %v1362
      %v1364 = vsel %vm1189, %v1302, 0.0
      %v1365 = vadd.f32 %v1363, %v1364
      %v1366 = vsel %vm1189, %v1304, 0.0
      %v1367 = vadd.f32 %v1365, %v1366
      %v1368 = vsel %vm1189, %v1306, 0.0
      %v1369 = vadd.f32 %v1367, %v1368
      %v1370 = vsel %vm1189, %v1308, 0.0
      %v1371 = vadd.f32 %v1369, %v1370
      %v1372 = vsel %vm1189, %v1310, 0.0
      %v1373 = vadd.f32 %v1371, %v1372
      %v1374 = vsel %vm1189, %v1312, 0.0
      %v1375 = vadd.f32 %v1373, %v1374
      %v1376 = vsel %vm1189, %v1314, 0.0
      %v1377 = vadd.f32 %v1375, %v1376
      %v1378 = vsel %vm1189, %v1316, 0.0
      %v1379 = vadd.f32 %v1377, %v1378
      %v1380 = vsel %vm1189, %v1318, 0.0
      %v1381 = vadd.f32 %v1379, %v1380
      %v1382 = vsel %vm1189, %v1320, 0.0
      %v1383 = vadd.f32 %v1381, %v1382
      %v1384 = vsel %vm1189, %v1322, 0.0
      %v1385 = vadd.f32 %v1383, %v1384
      %v1386 = vsel %vm1189, %v1324, 0.0
      %v1387 = vadd.f32 %v1385, %v1386
      %v1388 = vsel %vm1189, %v1326, 0.0
      %v1389 = vadd.f32 %v1387, %v1388
      %v1390 = vsel %vm1189, %v1328, 0.0
      %v1391 = vadd.f32 %v1389, %v1390
      %v1392 = vsel %vm1189, %v1330, 0.0
      %v1393 = vadd.f32 %v1391, %v1392
      %v1394 = vsel %vm1189, %v1332, 0.0
      %v1395 = vadd.f32 %v1393, %v1394
      %v1396 = vsel %vm1189, %v1334, 0.0
      %v1397 = vadd.f32 %v1395, %v1396
      %v1398 = vsel %vm1189, %v1336, 0.0
      %v1399 = vadd.f32 %v1397, %v1398
      %v1400 = vsel %vm1189, %v1338, 0.0
      %v1401 = vadd.f32 %v1399, %v1400
      %v1402 = vsel %vm1189, %v1340, 0.0
      %v1403 = vadd.f32 %v1401, %v1402
      %v1404 = vsel %vm1189, %v1342, 0.0
      %v1405 = vadd.f32 %v1403, %v1404
      %v1406 = vsel %vm1189, %v1344, 0.0
      %v1407 = vadd.f32 %v1405, %v1406
      %v1408 = vsel %vm1189, %v1346, 0.0
      %v1409 = vadd.f32 %v1407, %v1408
      %v1410 = vsel %vm1189, %v1348, 0.0
      %v1411 = vadd.f32 %v1409, %v1410
      %v1412 = vsel %vm1189, %v1350, 0.0
      %v1413 = vadd.f32 %v1411, %v1412
      %v1414 = vsel %vm1189, %v1352, 0.0
      %v1415 = vadd.f32 %v1413, %v1414
      %v1416 = vsel %vm1189, %v1354, 0.0
      %v1417 = vadd.f32 %v1415, %v1416
      %v1418 = vrot.slane %v1417, 4
      %v1419 = vadd.f32 %v1417, %v1418
      %v1420 = vrot.slane %v1419, 2
      %v1421 = vadd.f32 %v1419, %v1420
      %v1422 = vrot.slane %v1421, 1
      %v1423 = vadd.f32 %v1421, %v1422
      %v1424 = vrcp.pop %v1423
      %v1425 = vmul.f32 %v1292, %v1424
      %v1426 = vmul.f32 %v1294, %v1424
      %v1427 = vmul.f32 %v1296, %v1424
      %v1428 = vmul.f32 %v1298, %v1424
      %v1429 = vmul.f32 %v1300, %v1424
      %v1430 = vmul.f32 %v1302, %v1424
      %v1431 = vmul.f32 %v1304, %v1424
      %v1432 = vmul.f32 %v1306, %v1424
      %v1433 = vmul.f32 %v1308, %v1424
      %v1434 = vmul.f32 %v1310, %v1424
      %v1435 = vmul.f32 %v1312, %v1424
      %v1436 = vmul.f32 %v1314, %v1424
      %v1437 = vmul.f32 %v1316, %v1424
      %v1438 = vmul.f32 %v1318, %v1424
      %v1439 = vmul.f32 %v1320, %v1424
      %v1440 = vmul.f32 %v1322, %v1424
      %v1441 = vmul.f32 %v1324, %v1424
      %v1442 = vmul.f32 %v1326, %v1424
      %v1443 = vmul.f32 %v1328, %v1424
      %v1444 = vmul.f32 %v1330, %v1424
      %v1445 = vmul.f32 %v1332, %v1424
      %v1446 = vmul.f32 %v1334, %v1424
      %v1447 = vmul.f32 %v1336, %v1424
      %v1448 = vmul.f32 %v1338, %v1424
      %v1449 = vmul.f32 %v1340, %v1424
      %v1450 = vmul.f32 %v1342, %v1424
      %v1451 = vmul.f32 %v1344, %v1424
      %v1452 = vmul.f32 %v1346, %v1424
      %v1453 = vmul.f32 %v1348, %v1424
      %v1454 = vmul.f32 %v1350, %v1424
      %v1455 = vmul.f32 %v1352, %v1424
      %v1456 = vmul.f32 %v1354, %v1424
      %v1457 = vsel %vm1189, %v1425, 0.0
      %1458 = vadd.xlane.f32.xlu0 %v1457
      %v1459 = vpop.xlane.xlu0 %1458
      %v1460 = vsel %vm1189, %v1426, 0.0
      %1461 = vadd.xlane.f32.xlu0 %v1460
      %v1462 = vpop.xlane.xlu0 %1461
      %v1463 = vsel %vm1189, %v1427, 0.0
      %1464 = vadd.xlane.f32.xlu0 %v1463
      %v1465 = vpop.xlane.xlu0 %1464
      %v1466 = vsel %vm1189, %v1428, 0.0
      %1467 = vadd.xlane.f32.xlu0 %v1466
      %v1468 = vpop.xlane.xlu0 %1467
      %v1469 = vsel %vm1189, %v1429, 0.0
      %1470 = vadd.xlane.f32.xlu0 %v1469
      %v1471 = vpop.xlane.xlu0 %1470
      %v1472 = vsel %vm1189, %v1430, 0.0
      %1473 = vadd.xlane.f32.xlu0 %v1472
      %v1474 = vpop.xlane.xlu0 %1473
      %v1475 = vsel %vm1189, %v1431, 0.0
      %1476 = vadd.xlane.f32.xlu0 %v1475
      %v1477 = vpop.xlane.xlu0 %1476
      %v1478 = vsel %vm1189, %v1432, 0.0
      %1479 = vadd.xlane.f32.xlu0 %v1478
      %v1480 = vpop.xlane.xlu0 %1479
      %v1481 = vsel %vm1189, %v1433, 0.0
      %1482 = vadd.xlane.f32.xlu0 %v1481
      %v1483 = vpop.xlane.xlu0 %1482
      %v1484 = vsel %vm1189, %v1434, 0.0
      %1485 = vadd.xlane.f32.xlu0 %v1484
      %v1486 = vpop.xlane.xlu0 %1485
      %v1487 = vsel %vm1189, %v1435, 0.0
      %1488 = vadd.xlane.f32.xlu0 %v1487
      %v1489 = vpop.xlane.xlu0 %1488
      %v1490 = vsel %vm1189, %v1436, 0.0
      %1491 = vadd.xlane.f32.xlu0 %v1490
      %v1492 = vpop.xlane.xlu0 %1491
      %v1493 = vsel %vm1189, %v1437, 0.0
      %1494 = vadd.xlane.f32.xlu0 %v1493
      %v1495 = vpop.xlane.xlu0 %1494
      %v1496 = vsel %vm1189, %v1438, 0.0
      %1497 = vadd.xlane.f32.xlu0 %v1496
      %v1498 = vpop.xlane.xlu0 %1497
      %v1499 = vsel %vm1189, %v1439, 0.0
      %1500 = vadd.xlane.f32.xlu0 %v1499
      %v1501 = vpop.xlane.xlu0 %1500
      %v1502 = vsel %vm1189, %v1440, 0.0
      %1503 = vadd.xlane.f32.xlu0 %v1502
      %v1504 = vpop.xlane.xlu0 %1503
      %v1505 = vsel %vm1189, %v1441, 0.0
      %1506 = vadd.xlane.f32.xlu0 %v1505
      %v1507 = vpop.xlane.xlu0 %1506
      %v1508 = vsel %vm1189, %v1442, 0.0
      %1509 = vadd.xlane.f32.xlu0 %v1508
      %v1510 = vpop.xlane.xlu0 %1509
      %v1511 = vsel %vm1189, %v1443, 0.0
      %1512 = vadd.xlane.f32.xlu0 %v1511
      %v1513 = vpop.xlane.xlu0 %1512
      %v1514 = vsel %vm1189, %v1444, 0.0
      %1515 = vadd.xlane.f32.xlu0 %v1514
      %v1516 = vpop.xlane.xlu0 %1515
      %v1517 = vsel %vm1189, %v1445, 0.0
      %1518 = vadd.xlane.f32.xlu0 %v1517
      %v1519 = vpop.xlane.xlu0 %1518
      %v1520 = vsel %vm1189, %v1446, 0.0
      %1521 = vadd.xlane.f32.xlu0 %v1520
      %v1522 = vpop.xlane.xlu0 %1521
      %v1523 = vsel %vm1189, %v1447, 0.0
      %1524 = vadd.xlane.f32.xlu0 %v1523
      %v1525 = vpop.xlane.xlu0 %1524
      %v1526 = vsel %vm1189, %v1448, 0.0
      %1527 = vadd.xlane.f32.xlu0 %v1526
      %v1528 = vpop.xlane.xlu0 %1527
      %v1529 = vsel %vm1189, %v1449, 0.0
      %1530 = vadd.xlane.f32.xlu0 %v1529
      %v1531 = vpop.xlane.xlu0 %1530
      %v1532 = vsel %vm1189, %v1450, 0.0
      %1533 = vadd.xlane.f32.xlu0 %v1532
      %v1534 = vpop.xlane.xlu0 %1533
      %v1535 = vsel %vm1189, %v1451, 0.0
      %1536 = vadd.xlane.f32.xlu0 %v1535
      %v1537 = vpop.xlane.xlu0 %1536
      %v1538 = vsel %vm1189, %v1452, 0.0
      %1539 = vadd.xlane.f32.xlu0 %v1538
      %v1540 = vpop.xlane.xlu0 %1539
      %v1541 = vsel %vm1189, %v1453, 0.0
      %1542 = vadd.xlane.f32.xlu0 %v1541
      %v1543 = vpop.xlane.xlu0 %1542
      %v1544 = vsel %vm1189, %v1454, 0.0
      %1545 = vadd.xlane.f32.xlu0 %v1544
      %v1546 = vpop.xlane.xlu0 %1545
      %v1547 = vsel %vm1189, %v1455, 0.0
      %1548 = vadd.xlane.f32.xlu0 %v1547
      %v1549 = vpop.xlane.xlu0 %1548
      %v1550 = vsel %vm1189, %v1456, 0.0
      %1551 = vadd.xlane.f32.xlu0 %v1550
      %v1552 = vpop.xlane.xlu0 %1551
      %v1553 = vmul.f32 %v1459, %v877
      %v1554 = vmul.f32 %v1462, %v880
      %v1555 = vmul.f32 %v1465, %v883
      %v1556 = vmul.f32 %v1468, %v886
      %v1557 = vmul.f32 %v1471, %v889
      %v1558 = vmul.f32 %v1474, %v892
      %v1559 = vmul.f32 %v1477, %v895
      %v1560 = vmul.f32 %v1480, %v898
      %v1561 = vmul.f32 %v1483, %v901
      %v1562 = vmul.f32 %v1486, %v904
      %v1563 = vmul.f32 %v1489, %v907
      %v1564 = vmul.f32 %v1492, %v910
      %v1565 = vmul.f32 %v1495, %v913
      %v1566 = vmul.f32 %v1498, %v916
      %v1567 = vmul.f32 %v1501, %v919
      %v1568 = vmul.f32 %v1504, %v922
      %v1569 = vmul.f32 %v1507, %v925
      %v1570 = vmul.f32 %v1510, %v928
      %v1571 = vmul.f32 %v1513, %v931
      %v1572 = vmul.f32 %v1516, %v934
      %v1573 = vmul.f32 %v1519, %v937
      %v1574 = vmul.f32 %v1522, %v940
      %v1575 = vmul.f32 %v1525, %v943
      %v1576 = vmul.f32 %v1528, %v946
      %v1577 = vmul.f32 %v1531, %v949
      %v1578 = vmul.f32 %v1534, %v952
      %v1579 = vmul.f32 %v1537, %v955
      %v1580 = vmul.f32 %v1540, %v958
      %v1581 = vmul.f32 %v1543, %v961
      %v1582 = vmul.f32 %v1546, %v964
      %v1583 = vmul.f32 %v1549, %v967
      %v1584 = vmul.f32 %v1552, %v970
      %v1585 = vsel %vm762, %v1553, 0.0
      %v1586 = vsel %vm762, %v1554, 0.0
      %v1587 = vadd.f32 %v1585, %v1586
      %v1588 = vsel %vm762, %v1555, 0.0
      %v1589 = vadd.f32 %v1587, %v1588
      %v1590 = vsel %vm762, %v1556, 0.0
      %v1591 = vadd.f32 %v1589, %v1590
      %v1592 = vsel %vm762, %v1557, 0.0
      %v1593 = vadd.f32 %v1591, %v1592
      %v1594 = vsel %vm762, %v1558, 0.0
      %v1595 = vadd.f32 %v1593, %v1594
      %v1596 = vsel %vm762, %v1559, 0.0
      %v1597 = vadd.f32 %v1595, %v1596
      %v1598 = vsel %vm762, %v1560, 0.0
      %v1599 = vadd.f32 %v1597, %v1598
      %v1600 = vsel %vm762, %v1561, 0.0
      %v1601 = vadd.f32 %v1599, %v1600
      %v1602 = vsel %vm762, %v1562, 0.0
      %v1603 = vadd.f32 %v1601, %v1602
      %v1604 = vsel %vm762, %v1563, 0.0
      %v1605 = vadd.f32 %v1603, %v1604
      %v1606 = vsel %vm762, %v1564, 0.0
      %v1607 = vadd.f32 %v1605, %v1606
      %v1608 = vsel %vm762, %v1565, 0.0
      %v1609 = vadd.f32 %v1607, %v1608
      %v1610 = vsel %vm762, %v1566, 0.0
      %v1611 = vadd.f32 %v1609, %v1610
      %v1612 = vsel %vm762, %v1567, 0.0
      %v1613 = vadd.f32 %v1611, %v1612
      %v1614 = vsel %vm762, %v1568, 0.0
      %v1615 = vadd.f32 %v1613, %v1614
      %v1616 = vsel %vm762, %v1569, 0.0
      %v1617 = vadd.f32 %v1615, %v1616
      %v1618 = vsel %vm762, %v1570, 0.0
      %v1619 = vadd.f32 %v1617, %v1618
      %v1620 = vsel %vm762, %v1571, 0.0
      %v1621 = vadd.f32 %v1619, %v1620
      %v1622 = vsel %vm762, %v1572, 0.0
      %v1623 = vadd.f32 %v1621, %v1622
      %v1624 = vsel %vm762, %v1573, 0.0
      %v1625 = vadd.f32 %v1623, %v1624
      %v1626 = vsel %vm762, %v1574, 0.0
      %v1627 = vadd.f32 %v1625, %v1626
      %v1628 = vsel %vm762, %v1575, 0.0
      %v1629 = vadd.f32 %v1627, %v1628
      %v1630 = vsel %vm762, %v1576, 0.0
      %v1631 = vadd.f32 %v1629, %v1630
      %v1632 = vsel %vm762, %v1577, 0.0
      %v1633 = vadd.f32 %v1631, %v1632
      %v1634 = vsel %vm762, %v1578, 0.0
      %v1635 = vadd.f32 %v1633, %v1634
      %v1636 = vsel %vm762, %v1579, 0.0
      %v1637 = vadd.f32 %v1635, %v1636
      %v1638 = vsel %vm762, %v1580, 0.0
      %v1639 = vadd.f32 %v1637, %v1638
      %v1640 = vsel %vm762, %v1581, 0.0
      %v1641 = vadd.f32 %v1639, %v1640
      %v1642 = vsel %vm762, %v1582, 0.0
      %v1643 = vadd.f32 %v1641, %v1642
      %v1644 = vsel %vm762, %v1583, 0.0
      %v1645 = vadd.f32 %v1643, %v1644
      %v1646 = vsel %vm762, %v1584, 0.0
      %v1647 = vadd.f32 %v1645, %v1646
      %v1648 = vrot.slane %v1647, 4
      %v1649 = vadd.f32 %v1647, %v1648
      %v1650 = vrot.slane %v1649, 2
      %v1651 = vadd.f32 %v1649, %v1650
      %v1652 = vrot.slane %v1651, 1
      %v1653 = vadd.f32 %v1651, %v1652
      %1655 = vrot.lane.b32.xlu0 %v1653, 64
      %v1656 = vpop.permute.xlu0 %1655
      %v1658 = vsel %vm762, %v1653, %v1656
      %v1659 = vld [vmem:[%s6] sm:$0xff]
      %v1660 = vld [vmem:[%s6 + $0x8] sm:$0xff]
      %v1661 = vld [vmem:[%s6 + $0x10] sm:$0xff]
      %v1662 = vld [vmem:[%s6 + $0x18] sm:$0xff]
      %v1663 = vperm.slane %v1658, 0
      %v1664 = vmul.f32 %v1659, %v1663
      %v1665 = vmul.f32 %v1660, %v1663
      %v1666 = vmul.f32 %v1661, %v1663
      %v1667 = vmul.f32 %v1662, %v1663
      %v1668 = vld [vmem:[%s7] sm:$0xff]
      %v1669 = vld [vmem:[%s7 + $0x8] sm:$0xff]
      %v1670 = vld [vmem:[%s7 + $0x10] sm:$0xff]
      %v1671 = vld [vmem:[%s7 + $0x18] sm:$0xff]
      %v1672 = vld [vmem:[%s7 + $0x20] sm:$0xff]
      %v1673 = vld [vmem:[%s7 + $0x28] sm:$0xff]
      %v1674 = vld [vmem:[%s7 + $0x30] sm:$0xff]
      %v1675 = vld [vmem:[%s7 + $0x38] sm:$0xff]
      %v1676 = vld [vmem:[%s7 + $0x40] sm:$0xff]
      %v1677 = vld [vmem:[%s7 + $0x48] sm:$0xff]
      %v1678 = vld [vmem:[%s7 + $0x50] sm:$0xff]
      %v1679 = vld [vmem:[%s7 + $0x58] sm:$0xff]
      %v1680 = vld [vmem:[%s7 + $0x60] sm:$0xff]
      %v1681 = vld [vmem:[%s7 + $0x68] sm:$0xff]
      %v1682 = vld [vmem:[%s7 + $0x70] sm:$0xff]
      %v1683 = vld [vmem:[%s7 + $0x78] sm:$0xff]
      %v1684 = vld [vmem:[%s7 + $0x80] sm:$0xff]
      %v1685 = vld [vmem:[%s7 + $0x88] sm:$0xff]
      %v1686 = vld [vmem:[%s7 + $0x90] sm:$0xff]
      %v1687 = vld [vmem:[%s7 + $0x98] sm:$0xff]
      %v1688 = vld [vmem:[%s7 + $0xa0] sm:$0xff]
      %v1689 = vld [vmem:[%s7 + $0xa8] sm:$0xff]
      %v1690 = vld [vmem:[%s7 + $0xb0] sm:$0xff]
      %v1691 = vld [vmem:[%s7 + $0xb8] sm:$0xff]
      %v1692 = vld [vmem:[%s7 + $0xc0] sm:$0xff]
      %v1693 = vld [vmem:[%s7 + $0xc8] sm:$0xff]
      %v1694 = vld [vmem:[%s7 + $0xd0] sm:$0xff]
      %v1695 = vld [vmem:[%s7 + $0xd8] sm:$0xff]
      %v1696 = vld [vmem:[%s7 + $0xe0] sm:$0xff]
      %v1697 = vld [vmem:[%s7 + $0xe8] sm:$0xff]
      %v1698 = vld [vmem:[%s7 + $0xf0] sm:$0xff]
      %v1699 = vld [vmem:[%s7 + $0xf8] sm:$0xff]
      %v1700 = vld [vmem:[%s7 + $0x100] sm:$0xff]
      %v1701 = vld [vmem:[%s7 + $0x108] sm:$0xff]
      %v1702 = vld [vmem:[%s7 + $0x110] sm:$0xff]
      %v1703 = vld [vmem:[%s7 + $0x118] sm:$0xff]
      %v1704 = vld [vmem:[%s7 + $0x120] sm:$0xff]
      %v1705 = vld [vmem:[%s7 + $0x128] sm:$0xff]
      %v1706 = vld [vmem:[%s7 + $0x130] sm:$0xff]
      %v1707 = vld [vmem:[%s7 + $0x138] sm:$0xff]
      %v1708 = vld [vmem:[%s7 + $0x140] sm:$0xff]
      %v1709 = vld [vmem:[%s7 + $0x148] sm:$0xff]
      %v1710 = vld [vmem:[%s7 + $0x150] sm:$0xff]
      %v1711 = vld [vmem:[%s7 + $0x158] sm:$0xff]
      %v1712 = vld [vmem:[%s7 + $0x160] sm:$0xff]
      %v1713 = vld [vmem:[%s7 + $0x168] sm:$0xff]
      %v1714 = vld [vmem:[%s7 + $0x170] sm:$0xff]
      %v1715 = vld [vmem:[%s7 + $0x178] sm:$0xff]
      %v1716 = vld [vmem:[%s7 + $0x180] sm:$0xff]
      %v1717 = vld [vmem:[%s7 + $0x188] sm:$0xff]
      %v1718 = vld [vmem:[%s7 + $0x190] sm:$0xff]
      %v1719 = vld [vmem:[%s7 + $0x198] sm:$0xff]
      %v1720 = vld [vmem:[%s7 + $0x1a0] sm:$0xff]
      %v1721 = vld [vmem:[%s7 + $0x1a8] sm:$0xff]
      %v1722 = vld [vmem:[%s7 + $0x1b0] sm:$0xff]
      %v1723 = vld [vmem:[%s7 + $0x1b8] sm:$0xff]
      %v1724 = vld [vmem:[%s7 + $0x1c0] sm:$0xff]
      %v1725 = vld [vmem:[%s7 + $0x1c8] sm:$0xff]
      %v1726 = vld [vmem:[%s7 + $0x1d0] sm:$0xff]
      %v1727 = vld [vmem:[%s7 + $0x1d8] sm:$0xff]
      %v1728 = vld [vmem:[%s7 + $0x1e0] sm:$0xff]
      %v1729 = vld [vmem:[%s7 + $0x1e8] sm:$0xff]
      %v1730 = vld [vmem:[%s7 + $0x1f0] sm:$0xff]
      %v1731 = vld [vmem:[%s7 + $0x1f8] sm:$0xff]
      %v1732 = vld [vmem:[%s8] sm:$0xff]
      %1733 = vmatpush.msra.mxu0 %v1683
      %1734 = vmatpush.msra.mxu0 %v1682
      %1735 = vmatpush.msra.mxu0 %v1681
      %1736 = vmatpush.msra.mxu0 %v1680
      %1737 = vmatpush.msra.mxu0 %v1679
      %1738 = vmatpush.msra.mxu0 %v1678
      %1739 = vmatpush.msra.mxu0 %v1677
      %1740 = vmatpush.msra.mxu0 %v1676
      %1741 = vmatpush.msra.mxu0 %v1675
      %1742 = vmatpush.msra.mxu0 %v1674
      %1743 = vmatpush.msra.mxu0 %v1673
      %1744 = vmatpush.msra.mxu0 %v1672
      %1745 = vmatpush.msra.mxu0 %v1671
      %1746 = vmatpush.msra.mxu0 %v1670
      %1747 = vmatpush.msra.mxu0 %v1669
      %1748 = vmatpush.msra.mxu0 %v1668
      %1749 = vmatmul.f32.gmra.mxu0 %v1664
      %v1750 = vpop.f32.mrf.mxu0
      %v1751 = vadd.f32 %v1732, %v1750
      %1752 = vdwg.mxu0
      %1753 = vmatpush.msra.mxu0 %v1699
      %1754 = vmatpush.msra.mxu0 %v1698
      %1755 = vmatpush.msra.mxu0 %v1697
      %1756 = vmatpush.msra.mxu0 %v1696
      %1757 = vmatpush.msra.mxu0 %v1695
      %1758 = vmatpush.msra.mxu0 %v1694
      %1759 = vmatpush.msra.mxu0 %v1693
      %1760 = vmatpush.msra.mxu0 %v1692
      %1761 = vmatpush.msra.mxu0 %v1691
      %1762 = vmatpush.msra.mxu0 %v1690
      %1763 = vmatpush.msra.mxu0 %v1689
      %1764 = vmatpush.msra.mxu0 %v1688
      %1765 = vmatpush.msra.mxu0 %v1687
      %1766 = vmatpush.msra.mxu0 %v1686
      %1767 = vmatpush.msra.mxu0 %v1685
      %1768 = vmatpush.msra.mxu0 %v1684
      %1769 = vmatmul.f32.gmra.mxu0 %v1665
      %v1770 = vpop.f32.mrf.mxu0
      %v1771 = vadd.f32 %v1751, %v1770
      %1772 = vdwg.mxu0
      %1773 = vmatpush.msra.mxu0 %v1715
      %1774 = vmatpush.msra.mxu0 %v1714
      %1775 = vmatpush.msra.mxu0 %v1713
      %1776 = vmatpush.msra.mxu0 %v1712
      %1777 = vmatpush.msra.mxu0 %v1711
      %1778 = vmatpush.msra.mxu0 %v1710
      %1779 = vmatpush.msra.mxu0 %v1709
      %1780 = vmatpush.msra.mxu0 %v1708
      %1781 = vmatpush.msra.mxu0 %v1707
      %1782 = vmatpush.msra.mxu0 %v1706
      %1783 = vmatpush.msra.mxu0 %v1705
      %1784 = vmatpush.msra.mxu0 %v1704
      %1785 = vmatpush.msra.mxu0 %v1703
      %1786 = vmatpush.msra.mxu0 %v1702
      %1787 = vmatpush.msra.mxu0 %v1701
      %1788 = vmatpush.msra.mxu0 %v1700
      %1789 = vmatmul.f32.gmra.mxu0 %v1666
      %v1790 = vpop.f32.mrf.mxu0
      %v1791 = vadd.f32 %v1771, %v1790
      %1792 = vdwg.mxu0
      %1793 = vmatpush.msra.mxu0 %v1731
      %1794 = vmatpush.msra.mxu0 %v1730
      %1795 = vmatpush.msra.mxu0 %v1729
      %1796 = vmatpush.msra.mxu0 %v1728
      %1797 = vmatpush.msra.mxu0 %v1727
      %1798 = vmatpush.msra.mxu0 %v1726
      %1799 = vmatpush.msra.mxu0 %v1725
      %1800 = vmatpush.msra.mxu0 %v1724
      %1801 = vmatpush.msra.mxu0 %v1723
      %1802 = vmatpush.msra.mxu0 %v1722
      %1803 = vmatpush.msra.mxu0 %v1721
      %1804 = vmatpush.msra.mxu0 %v1720
      %1805 = vmatpush.msra.mxu0 %v1719
      %1806 = vmatpush.msra.mxu0 %v1718
      %1807 = vmatpush.msra.mxu0 %v1717
      %1808 = vmatpush.msra.mxu0 %v1716
      %1809 = vmatmul.f32.gmra.mxu0 %v1667
      %v1810 = vpop.f32.mrf.mxu0
      %v1811 = vadd.f32 %v1791, %v1810
      %1812 = vdwg.mxu0
      %v1813 = vld [vmem:[%s9] sm:$0xff]
      %v1814 = vld [vmem:[%s9 + $0x8] sm:$0xff]
      %v1815 = vld [vmem:[%s9 + $0x10] sm:$0xff]
      %v1816 = vld [vmem:[%s9 + $0x18] sm:$0xff]
      %v1817 = vld [vmem:[%s10] sm:$0x1]
      %v1819 = vperm.slane %v1817, 0
      %1821 = vmatpush.msra.mxu0 0.0
      %1822 = vmatpush.msra.mxu0 0.0
      %1823 = vmatpush.msra.mxu0 0.0
      %1824 = vmatpush.msra.mxu0 0.0
      %1825 = vmatpush.msra.mxu0 0.0
      %1826 = vmatpush.msra.mxu0 0.0
      %1827 = vmatpush.msra.mxu0 0.0
      %1828 = vmatpush.msra.mxu0 0.0
      %1829 = vmatpush.msra.mxu0 0.0
      %1830 = vmatpush.msra.mxu0 0.0
      %1831 = vmatpush.msra.mxu0 0.0
      %1832 = vmatpush.msra.mxu0 0.0
      %1833 = vmatpush.msra.mxu0 %v1816
      %1834 = vmatpush.msra.mxu0 %v1815
      %1835 = vmatpush.msra.mxu0 %v1814
      %1836 = vmatpush.msra.mxu0 %v1813
      %1837 = vmatmul.f32.gmra.mxu0 %v510
      %v1838 = vpop.f32.mrf.mxu0
      %v1839 = vadd.f32 %v1819, %v1838
      %1840 = vmatmul.f32.gmra.mxu0 %v513
      %v1841 = vpop.f32.mrf.mxu0
      %v1842 = vadd.f32 %v1819, %v1841
      %1843 = vmatmul.f32.gmra.mxu0 %v516
      %v1844 = vpop.f32.mrf.mxu0
      %v1845 = vadd.f32 %v1819, %v1844
      %1846 = vmatmul.f32.gmra.mxu0 %v519
      %v1847 = vpop.f32.mrf.mxu0
      %v1848 = vadd.f32 %v1819, %v1847
      %1849 = vmatmul.f32.gmra.mxu0 %v522
      %v1850 = vpop.f32.mrf.mxu0
      %v1851 = vadd.f32 %v1819, %v1850
      %1852 = vmatmul.f32.gmra.mxu0 %v525
      %v1853 = vpop.f32.mrf.mxu0
      %v1854 = vadd.f32 %v1819, %v1853
      %1855 = vmatmul.f32.gmra.mxu0 %v528
      %v1856 = vpop.f32.mrf.mxu0
      %v1857 = vadd.f32 %v1819, %v1856
      %1858 = vmatmul.f32.gmra.mxu0 %v531
      %v1859 = vpop.f32.mrf.mxu0
      %v1860 = vadd.f32 %v1819, %v1859
      %1861 = vmatmul.f32.gmra.mxu0 %v534
      %v1862 = vpop.f32.mrf.mxu0
      %v1863 = vadd.f32 %v1819, %v1862
      %1864 = vmatmul.f32.gmra.mxu0 %v537
      %v1865 = vpop.f32.mrf.mxu0
      %v1866 = vadd.f32 %v1819, %v1865
      %1867 = vmatmul.f32.gmra.mxu0 %v540
      %v1868 = vpop.f32.mrf.mxu0
      %v1869 = vadd.f32 %v1819, %v1868
      %1870 = vmatmul.f32.gmra.mxu0 %v543
      %v1871 = vpop.f32.mrf.mxu0
      %v1872 = vadd.f32 %v1819, %v1871
      %1873 = vmatmul.f32.gmra.mxu0 %v546
      %v1874 = vpop.f32.mrf.mxu0
      %v1875 = vadd.f32 %v1819, %v1874
      %1876 = vmatmul.f32.gmra.mxu0 %v549
      %v1877 = vpop.f32.mrf.mxu0
      %v1878 = vadd.f32 %v1819, %v1877
      %1879 = vmatmul.f32.gmra.mxu0 %v552
      %v1880 = vpop.f32.mrf.mxu0
      %v1881 = vadd.f32 %v1819, %v1880
      %1882 = vmatmul.f32.gmra.mxu0 %v555
      %v1883 = vpop.f32.mrf.mxu0
      %v1884 = vadd.f32 %v1819, %v1883
      %1885 = vmatmul.f32.gmra.mxu0 %v558
      %v1886 = vpop.f32.mrf.mxu0
      %v1887 = vadd.f32 %v1819, %v1886
      %1888 = vmatmul.f32.gmra.mxu0 %v561
      %v1889 = vpop.f32.mrf.mxu0
      %v1890 = vadd.f32 %v1819, %v1889
      %1891 = vmatmul.f32.gmra.mxu0 %v564
      %v1892 = vpop.f32.mrf.mxu0
      %v1893 = vadd.f32 %v1819, %v1892
      %1894 = vmatmul.f32.gmra.mxu0 %v567
      %v1895 = vpop.f32.mrf.mxu0
      %v1896 = vadd.f32 %v1819, %v1895
      %1897 = vmatmul.f32.gmra.mxu0 %v570
      %v1898 = vpop.f32.mrf.mxu0
      %v1899 = vadd.f32 %v1819, %v1898
      %1900 = vmatmul.f32.gmra.mxu0 %v573
      %v1901 = vpop.f32.mrf.mxu0
      %v1902 = vadd.f32 %v1819, %v1901
      %1903 = vmatmul.f32.gmra.mxu0 %v576
      %v1904 = vpop.f32.mrf.mxu0
      %v1905 = vadd.f32 %v1819, %v1904
      %1906 = vmatmul.f32.gmra.mxu0 %v579
      %v1907 = vpop.f32.mrf.mxu0
      %v1908 = vadd.f32 %v1819, %v1907
      %1909 = vmatmul.f32.gmra.mxu0 %v582
      %v1910 = vpop.f32.mrf.mxu0
      %v1911 = vadd.f32 %v1819, %v1910
      %1912 = vmatmul.f32.gmra.mxu0 %v585
      %v1913 = vpop.f32.mrf.mxu0
      %v1914 = vadd.f32 %v1819, %v1913
      %1915 = vmatmul.f32.gmra.mxu0 %v588
      %v1916 = vpop.f32.mrf.mxu0
      %v1917 = vadd.f32 %v1819, %v1916
      %1918 = vmatmul.f32.gmra.mxu0 %v591
      %v1919 = vpop.f32.mrf.mxu0
      %v1920 = vadd.f32 %v1819, %v1919
      %1921 = vmatmul.f32.gmra.mxu0 %v594
      %v1922 = vpop.f32.mrf.mxu0
      %v1923 = vadd.f32 %v1819, %v1922
      %1924 = vmatmul.f32.gmra.mxu0 %v597
      %v1925 = vpop.f32.mrf.mxu0
      %v1926 = vadd.f32 %v1819, %v1925
      %1927 = vmatmul.f32.gmra.mxu0 %v600
      %v1928 = vpop.f32.mrf.mxu0
      %v1929 = vadd.f32 %v1819, %v1928
      %1930 = vmatmul.f32.gmra.mxu0 %v603
      %v1931 = vpop.f32.mrf.mxu0
      %v1932 = vadd.f32 %v1819, %v1931
      %1933 = vdwg.mxu0
      %v1934 = vmul.f32 %v1839, 1.702
      %v1935 = vmul.f32 %v1842, 1.702
      %v1936 = vmul.f32 %v1845, 1.702
      %v1937 = vmul.f32 %v1848, 1.702
      %v1938 = vmul.f32 %v1851, 1.702
      %v1939 = vmul.f32 %v1854, 1.702
      %v1940 = vmul.f32 %v1857, 1.702
      %v1941 = vmul.f32 %v1860, 1.702
      %v1942 = vmul.f32 %v1863, 1.702
      %v1943 = vmul.f32 %v1866, 1.702
      %v1944 = vmul.f32 %v1869, 1.702
      %v1945 = vmul.f32 %v1872, 1.702
      %v1946 = vmul.f32 %v1875, 1.702
      %v1947 = vmul.f32 %v1878, 1.702
      %v1948 = vmul.f32 %v1881, 1.702
      %v1949 = vmul.f32 %v1884, 1.702
      %v1950 = vmul.f32 %v1887, 1.702
      %v1951 = vmul.f32 %v1890, 1.702
      %v1952 = vmul.f32 %v1893, 1.702
      %v1953 = vmul.f32 %v1896, 1.702
      %v1954 = vmul.f32 %v1899, 1.702
      %v1955 = vmul.f32 %v1902, 1.702
      %v1956 = vmul.f32 %v1905, 1.702
      %v1957 = vmul.f32 %v1908, 1.702
      %v1958 = vmul.f32 %v1911, 1.702
      %v1959 = vmul.f32 %v1914, 1.702
      %v1960 = vmul.f32 %v1917, 1.702
      %v1961 = vmul.f32 %v1920, 1.702
      %v1962 = vmul.f32 %v1923, 1.702
      %v1963 = vmul.f32 %v1926, 1.702
      %v1964 = vmul.f32 %v1929, 1.702
      %v1965 = vmul.f32 %v1932, 1.702
      %v1966 = vxor.u32 %v1934, 2147483648
      %v1967 = vxor.u32 %v1935, 2147483648
      %v1968 = vxor.u32 %v1936, 2147483648
      %v1969 = vxor.u32 %v1937, 2147483648
      %v1970 = vxor.u32 %v1938, 2147483648
      %v1971 = vxor.u32 %v1939, 2147483648
      %v1972 = vxor.u32 %v1940, 2147483648
      %v1973 = vxor.u32 %v1941, 2147483648
      %v1974 = vxor.u32 %v1942, 2147483648
      %v1975 = vxor.u32 %v1943, 2147483648
      %v1976 = vxor.u32 %v1944, 2147483648
      %v1977 = vxor.u32 %v1945, 2147483648
      %v1978 = vxor.u32 %v1946, 2147483648
      %v1979 = vxor.u32 %v1947, 2147483648
      %v1980 = vxor.u32 %v1948, 2147483648
      %v1981 = vxor.u32 %v1949, 2147483648
      %v1982 = vxor.u32 %v1950, 2147483648
      %v1983 = vxor.u32 %v1951, 2147483648
      %v1984 = vxor.u32 %v1952, 2147483648
      %v1985 = vxor.u32 %v1953, 2147483648
      %v1986 = vxor.u32 %v1954, 2147483648
      %v1987 = vxor.u32 %v1955, 2147483648
      %v1988 = vxor.u32 %v1956, 2147483648
      %v1989 = vxor.u32 %v1957, 2147483648
      %v1990 = vxor.u32 %v1958, 2147483648
      %v1991 = vxor.u32 %v1959, 2147483648
      %v1992 = vxor.u32 %v1960, 2147483648
      %v1993 = vxor.u32 %v1961, 2147483648
      %v1994 = vxor.u32 %v1962, 2147483648
      %v1995 = vxor.u32 %v1963, 2147483648
      %v1996 = vxor.u32 %v1964, 2147483648
      %v1997 = vxor.u32 %v1965, 2147483648
      %v1998 = vmul.f32 %v1966, 1.442695
      %v1999 = vpow.pop %v1998
      %v2000 = vmul.f32 %v1967, 1.442695
      %v2001 = vpow.pop %v2000
      %v2002 = vmul.f32 %v1968, 1.442695
      %v2003 = vpow.pop %v2002
      %v2004 = vmul.f32 %v1969, 1.442695
      %v2005 = vpow.pop %v2004
      %v2006 = vmul.f32 %v1970, 1.442695
      %v2007 = vpow.pop %v2006
      %v2008 = vmul.f32 %v1971, 1.442695
      %v2009 = vpow.pop %v2008
      %v2010 = vmul.f32 %v1972, 1.442695
      %v2011 = vpow.pop %v2010
      %v2012 = vmul.f32 %v1973, 1.442695
      %v2013 = vpow.pop %v2012
      %v2014 = vmul.f32 %v1974, 1.442695
      %v2015 = vpow.pop %v2014
      %v2016 = vmul.f32 %v1975, 1.442695
      %v2017 = vpow.pop %v2016
      %v2018 = vmul.f32 %v1976, 1.442695
      %v2019 = vpow.pop %v2018
      %v2020 = vmul.f32 %v1977, 1.442695
      %v2021 = vpow.pop %v2020
      %v2022 = vmul.f32 %v1978, 1.442695
      %v2023 = vpow.pop %v2022
      %v2024 = vmul.f32 %v1979, 1.442695
      %v2025 = vpow.pop %v2024
      %v2026 = vmul.f32 %v1980, 1.442695
      %v2027 = vpow.pop %v2026
      %v2028 = vmul.f32 %v1981, 1.442695
      %v2029 = vpow.pop %v2028
      %v2030 = vmul.f32 %v1982, 1.442695
      %v2031 = vpow.pop %v2030
      %v2032 = vmul.f32 %v1983, 1.442695
      %v2033 = vpow.pop %v2032
      %v2034 = vmul.f32 %v1984, 1.442695
      %v2035 = vpow.pop %v2034
      %v2036 = vmul.f32 %v1985, 1.442695
      %v2037 = vpow.pop %v2036
      %v2038 = vmul.f32 %v1986, 1.442695
      %v2039 = vpow.pop %v2038
      %v2040 = vmul.f32 %v1987, 1.442695
      %v2041 = vpow.pop %v2040
      %v2042 = vmul.f32 %v1988, 1.442695
      %v2043 = vpow.pop %v2042
      %v2044 = vmul.f32 %v1989, 1.442695
      %v2045 = vpow.pop %v2044
      %v2046 = vmul.f32 %v1990, 1.442695
      %v2047 = vpow.pop %v2046
      %v2048 = vmul.f32 %v1991, 1.442695
      %v2049 = vpow.pop %v2048
      %v2050 = vmul.f32 %v1992, 1.442695
      %v2051 = vpow.pop %v2050
      %v2052 = vmul.f32 %v1993, 1.442695
      %v2053 = vpow.pop %v2052
      %v2054 = vmul.f32 %v1994, 1.442695
      %v2055 = vpow.pop %v2054
      %v2056 = vmul.f32 %v1995, 1.442695
      %v2057 = vpow.pop %v2056
      %v2058 = vmul.f32 %v1996, 1.442695
      %v2059 = vpow.pop %v2058
      %v2060 = vmul.f32 %v1997, 1.442695
      %v2061 = vpow.pop %v2060
      %v2062 = vadd.f32 %v1999, 1.0
      %v2063 = vadd.f32 %v2001, 1.0
      %v2064 = vadd.f32 %v2003, 1.0
      %v2065 = vadd.f32 %v2005, 1.0
      %v2066 = vadd.f32 %v2007, 1.0
      %v2067 = vadd.f32 %v2009, 1.0
      %v2068 = vadd.f32 %v2011, 1.0
      %v2069 = vadd.f32 %v2013, 1.0
      %v2070 = vadd.f32 %v2015, 1.0
      %v2071 = vadd.f32 %v2017, 1.0
      %v2072 = vadd.f32 %v2019, 1.0
      %v2073 = vadd.f32 %v2021, 1.0
      %v2074 = vadd.f32 %v2023, 1.0
      %v2075 = vadd.f32 %v2025, 1.0
      %v2076 = vadd.f32 %v2027, 1.0
      %v2077 = vadd.f32 %v2029, 1.0
      %v2078 = vadd.f32 %v2031, 1.0
      %v2079 = vadd.f32 %v2033, 1.0
      %v2080 = vadd.f32 %v2035, 1.0
      %v2081 = vadd.f32 %v2037, 1.0
      %v2082 = vadd.f32 %v2039, 1.0
      %v2083 = vadd.f32 %v2041, 1.0
      %v2084 = vadd.f32 %v2043, 1.0
      %v2085 = vadd.f32 %v2045, 1.0
      %v2086 = vadd.f32 %v2047, 1.0
      %v2087 = vadd.f32 %v2049, 1.0
      %v2088 = vadd.f32 %v2051, 1.0
      %v2089 = vadd.f32 %v2053, 1.0
      %v2090 = vadd.f32 %v2055, 1.0
      %v2091 = vadd.f32 %v2057, 1.0
      %v2092 = vadd.f32 %v2059, 1.0
      %v2093 = vadd.f32 %v2061, 1.0
      %v2094 = vrcp.pop %v2062
      %v2095 = vmul.f32 %v2062, %v2094
      %v2096 = vsub.f32 1.0, %v2095
      %v2097 = vmul.f32 %v2094, %v2096
      %v2098 = vadd.f32 %v2094, %v2097
      %vm2099 = vweird.f32 %v2062
      %vm2100 = vweird.f32 %v2094
      %vm2101 = vmor %vm2099, %vm2100
      %v2102 = vsel %vm2101, %v2094, %v2098
      %v2103 = vand.u32 2147483647, %v2062
      %vm2104 = vcmp.eq.f32.partialorder %v2103, 8.507059e+37
      %v2105 = vand.u32 %v2062, 2147483648
      %v2106 = vor.u32 1.1754944e-38, %v2105
      %v2107 = vsel %vm2104, %v2106, %v2102
      %v2108 = vmul.f32 1.0, %v2107
      %v2109 = vrcp.pop %v2063
      %v2110 = vmul.f32 %v2063, %v2109
      %v2111 = vsub.f32 1.0, %v2110
      %v2112 = vmul.f32 %v2109, %v2111
      %v2113 = vadd.f32 %v2109, %v2112
      %vm2114 = vweird.f32 %v2063
      %vm2115 = vweird.f32 %v2109
      %vm2116 = vmor %vm2114, %vm2115
      %v2117 = vsel %vm2116, %v2109, %v2113
      %v2118 = vand.u32 2147483647, %v2063
      %vm2119 = vcmp.eq.f32.partialorder %v2118, 8.507059e+37
      %v2120 = vand.u32 %v2063, 2147483648
      %v2121 = vor.u32 1.1754944e-38, %v2120
      %v2122 = vsel %vm2119, %v2121, %v2117
      %v2123 = vmul.f32 1.0, %v2122
      %v2124 = vrcp.pop %v2064
      %v2125 = vmul.f32 %v2064, %v2124
      %v2126 = vsub.f32 1.0, %v2125
      %v2127 = vmul.f32 %v2124, %v2126
      %v2128 = vadd.f32 %v2124, %v2127
      %vm2129 = vweird.f32 %v2064
      %vm2130 = vweird.f32 %v2124
      %vm2131 = vmor %vm2129, %vm2130
      %v2132 = vsel %vm2131, %v2124, %v2128
      %v2133 = vand.u32 2147483647, %v2064
      %vm2134 = vcmp.eq.f32.partialorder %v2133, 8.507059e+37
      %v2135 = vand.u32 %v2064, 2147483648
      %v2136 = vor.u32 1.1754944e-38, %v2135
      %v2137 = vsel %vm2134, %v2136, %v2132
      %v2138 = vmul.f32 1.0, %v2137
      %v2139 = vrcp.pop %v2065
      %v2140 = vmul.f32 %v2065, %v2139
      %v2141 = vsub.f32 1.0, %v2140
      %v2142 = vmul.f32 %v2139, %v2141
      %v2143 = vadd.f32 %v2139, %v2142
      %vm2144 = vweird.f32 %v2065
      %vm2145 = vweird.f32 %v2139
      %vm2146 = vmor %vm2144, %vm2145
      %v2147 = vsel %vm2146, %v2139, %v2143
      %v2148 = vand.u32 2147483647, %v2065
      %vm2149 = vcmp.eq.f32.partialorder %v2148, 8.507059e+37
      %v2150 = vand.u32 %v2065, 2147483648
      %v2151 = vor.u32 1.1754944e-38, %v2150
      %v2152 = vsel %vm2149, %v2151, %v2147
      %v2153 = vmul.f32 1.0, %v2152
      %v2154 = vrcp.pop %v2066
      %v2155 = vmul.f32 %v2066, %v2154
      %v2156 = vsub.f32 1.0, %v2155
      %v2157 = vmul.f32 %v2154, %v2156
      %v2158 = vadd.f32 %v2154, %v2157
      %vm2159 = vweird.f32 %v2066
      %vm2160 = vweird.f32 %v2154
      %vm2161 = vmor %vm2159, %vm2160
      %v2162 = vsel %vm2161, %v2154, %v2158
      %v2163 = vand.u32 2147483647, %v2066
      %vm2164 = vcmp.eq.f32.partialorder %v2163, 8.507059e+37
      %v2165 = vand.u32 %v2066, 2147483648
      %v2166 = vor.u32 1.1754944e-38, %v2165
      %v2167 = vsel %vm2164, %v2166, %v2162
      %v2168 = vmul.f32 1.0, %v2167
      %v2169 = vrcp.pop %v2067
      %v2170 = vmul.f32 %v2067, %v2169
      %v2171 = vsub.f32 1.0, %v2170
      %v2172 = vmul.f32 %v2169, %v2171
      %v2173 = vadd.f32 %v2169, %v2172
      %vm2174 = vweird.f32 %v2067
      %vm2175 = vweird.f32 %v2169
      %vm2176 = vmor %vm2174, %vm2175
      %v2177 = vsel %vm2176, %v2169, %v2173
      %v2178 = vand.u32 2147483647, %v2067
      %vm2179 = vcmp.eq.f32.partialorder %v2178, 8.507059e+37
      %v2180 = vand.u32 %v2067, 2147483648
      %v2181 = vor.u32 1.1754944e-38, %v2180
      %v2182 = vsel %vm2179, %v2181, %v2177
      %v2183 = vmul.f32 1.0, %v2182
      %v2184 = vrcp.pop %v2068
      %v2185 = vmul.f32 %v2068, %v2184
      %v2186 = vsub.f32 1.0, %v2185
      %v2187 = vmul.f32 %v2184, %v2186
      %v2188 = vadd.f32 %v2184, %v2187
      %vm2189 = vweird.f32 %v2068
      %vm2190 = vweird.f32 %v2184
      %vm2191 = vmor %vm2189, %vm2190
      %v2192 = vsel %vm2191, %v2184, %v2188
      %v2193 = vand.u32 2147483647, %v2068
      %vm2194 = vcmp.eq.f32.partialorder %v2193, 8.507059e+37
      %v2195 = vand.u32 %v2068, 2147483648
      %v2196 = vor.u32 1.1754944e-38, %v2195
      %v2197 = vsel %vm2194, %v2196, %v2192
      %v2198 = vmul.f32 1.0, %v2197
      %v2199 = vrcp.pop %v2069
      %v2200 = vmul.f32 %v2069, %v2199
      %v2201 = vsub.f32 1.0, %v2200
      %v2202 = vmul.f32 %v2199, %v2201
      %v2203 = vadd.f32 %v2199, %v2202
      %vm2204 = vweird.f32 %v2069
      %vm2205 = vweird.f32 %v2199
      %vm2206 = vmor %vm2204, %vm2205
      %v2207 = vsel %vm2206, %v2199, %v2203
      %v2208 = vand.u32 2147483647, %v2069
      %vm2209 = vcmp.eq.f32.partialorder %v2208, 8.507059e+37
      %v2210 = vand.u32 %v2069, 2147483648
      %v2211 = vor.u32 1.1754944e-38, %v2210
      %v2212 = vsel %vm2209, %v2211, %v2207
      %v2213 = vmul.f32 1.0, %v2212
      %v2214 = vrcp.pop %v2070
      %v2215 = vmul.f32 %v2070, %v2214
      %v2216 = vsub.f32 1.0, %v2215
      %v2217 = vmul.f32 %v2214, %v2216
      %v2218 = vadd.f32 %v2214, %v2217
      %vm2219 = vweird.f32 %v2070
      %vm2220 = vweird.f32 %v2214
      %vm2221 = vmor %vm2219, %vm2220
      %v2222 = vsel %vm2221, %v2214, %v2218
      %v2223 = vand.u32 2147483647, %v2070
      %vm2224 = vcmp.eq.f32.partialorder %v2223, 8.507059e+37
      %v2225 = vand.u32 %v2070, 2147483648
      %v2226 = vor.u32 1.1754944e-38, %v2225
      %v2227 = vsel %vm2224, %v2226, %v2222
      %v2228 = vmul.f32 1.0, %v2227
      %v2229 = vrcp.pop %v2071
      %v2230 = vmul.f32 %v2071, %v2229
      %v2231 = vsub.f32 1.0, %v2230
      %v2232 = vmul.f32 %v2229, %v2231
      %v2233 = vadd.f32 %v2229, %v2232
      %vm2234 = vweird.f32 %v2071
      %vm2235 = vweird.f32 %v2229
      %vm2236 = vmor %vm2234, %vm2235
      %v2237 = vsel %vm2236, %v2229, %v2233
      %v2238 = vand.u32 2147483647, %v2071
      %vm2239 = vcmp.eq.f32.partialorder %v2238, 8.507059e+37
      %v2240 = vand.u32 %v2071, 2147483648
      %v2241 = vor.u32 1.1754944e-38, %v2240
      %v2242 = vsel %vm2239, %v2241, %v2237
      %v2243 = vmul.f32 1.0, %v2242
      %v2244 = vrcp.pop %v2072
      %v2245 = vmul.f32 %v2072, %v2244
      %v2246 = vsub.f32 1.0, %v2245
      %v2247 = vmul.f32 %v2244, %v2246
      %v2248 = vadd.f32 %v2244, %v2247
      %vm2249 = vweird.f32 %v2072
      %vm2250 = vweird.f32 %v2244
      %vm2251 = vmor %vm2249, %vm2250
      %v2252 = vsel %vm2251, %v2244, %v2248
      %v2253 = vand.u32 2147483647, %v2072
      %vm2254 = vcmp.eq.f32.partialorder %v2253, 8.507059e+37
      %v2255 = vand.u32 %v2072, 2147483648
      %v2256 = vor.u32 1.1754944e-38, %v2255
      %v2257 = vsel %vm2254, %v2256, %v2252
      %v2258 = vmul.f32 1.0, %v2257
      %v2259 = vrcp.pop %v2073
      %v2260 = vmul.f32 %v2073, %v2259
      %v2261 = vsub.f32 1.0, %v2260
      %v2262 = vmul.f32 %v2259, %v2261
      %v2263 = vadd.f32 %v2259, %v2262
      %vm2264 = vweird.f32 %v2073
      %vm2265 = vweird.f32 %v2259
      %vm2266 = vmor %vm2264, %vm2265
      %v2267 = vsel %vm2266, %v2259, %v2263
      %v2268 = vand.u32 2147483647, %v2073
      %vm2269 = vcmp.eq.f32.partialorder %v2268, 8.507059e+37
      %v2270 = vand.u32 %v2073, 2147483648
      %v2271 = vor.u32 1.1754944e-38, %v2270
      %v2272 = vsel %vm2269, %v2271, %v2267
      %v2273 = vmul.f32 1.0, %v2272
      %v2274 = vrcp.pop %v2074
      %v2275 = vmul.f32 %v2074, %v2274
      %v2276 = vsub.f32 1.0, %v2275
      %v2277 = vmul.f32 %v2274, %v2276
      %v2278 = vadd.f32 %v2274, %v2277
      %vm2279 = vweird.f32 %v2074
      %vm2280 = vweird.f32 %v2274
      %vm2281 = vmor %vm2279, %vm2280
      %v2282 = vsel %vm2281, %v2274, %v2278
      %v2283 = vand.u32 2147483647, %v2074
      %vm2284 = vcmp.eq.f32.partialorder %v2283, 8.507059e+37
      %v2285 = vand.u32 %v2074, 2147483648
      %v2286 = vor.u32 1.1754944e-38, %v2285
      %v2287 = vsel %vm2284, %v2286, %v2282
      %v2288 = vmul.f32 1.0, %v2287
      %v2289 = vrcp.pop %v2075
      %v2290 = vmul.f32 %v2075, %v2289
      %v2291 = vsub.f32 1.0, %v2290
      %v2292 = vmul.f32 %v2289, %v2291
      %v2293 = vadd.f32 %v2289, %v2292
      %vm2294 = vweird.f32 %v2075
      %vm2295 = vweird.f32 %v2289
      %vm2296 = vmor %vm2294, %vm2295
      %v2297 = vsel %vm2296, %v2289, %v2293
      %v2298 = vand.u32 2147483647, %v2075
      %vm2299 = vcmp.eq.f32.partialorder %v2298, 8.507059e+37
      %v2300 = vand.u32 %v2075, 2147483648
      %v2301 = vor.u32 1.1754944e-38, %v2300
      %v2302 = vsel %vm2299, %v2301, %v2297
      %v2303 = vmul.f32 1.0, %v2302
      %v2304 = vrcp.pop %v2076
      %v2305 = vmul.f32 %v2076, %v2304
      %v2306 = vsub.f32 1.0, %v2305
      %v2307 = vmul.f32 %v2304, %v2306
      %v2308 = vadd.f32 %v2304, %v2307
      %vm2309 = vweird.f32 %v2076
      %vm2310 = vweird.f32 %v2304
      %vm2311 = vmor %vm2309, %vm2310
      %v2312 = vsel %vm2311, %v2304, %v2308
      %v2313 = vand.u32 2147483647, %v2076
      %vm2314 = vcmp.eq.f32.partialorder %v2313, 8.507059e+37
      %v2315 = vand.u32 %v2076, 2147483648
      %v2316 = vor.u32 1.1754944e-38, %v2315
      %v2317 = vsel %vm2314, %v2316, %v2312
      %v2318 = vmul.f32 1.0, %v2317
      %v2319 = vrcp.pop %v2077
      %v2320 = vmul.f32 %v2077, %v2319
      %v2321 = vsub.f32 1.0, %v2320
      %v2322 = vmul.f32 %v2319, %v2321
      %v2323 = vadd.f32 %v2319, %v2322
      %vm2324 = vweird.f32 %v2077
      %vm2325 = vweird.f32 %v2319
      %vm2326 = vmor %vm2324, %vm2325
      %v2327 = vsel %vm2326, %v2319, %v2323
      %v2328 = vand.u32 2147483647, %v2077
      %vm2329 = vcmp.eq.f32.partialorder %v2328, 8.507059e+37
      %v2330 = vand.u32 %v2077, 2147483648
      %v2331 = vor.u32 1.1754944e-38, %v2330
      %v2332 = vsel %vm2329, %v2331, %v2327
      %v2333 = vmul.f32 1.0, %v2332
      %v2334 = vrcp.pop %v2078
      %v2335 = vmul.f32 %v2078, %v2334
      %v2336 = vsub.f32 1.0, %v2335
      %v2337 = vmul.f32 %v2334, %v2336
      %v2338 = vadd.f32 %v2334, %v2337
      %vm2339 = vweird.f32 %v2078
      %vm2340 = vweird.f32 %v2334
      %vm2341 = vmor %vm2339, %vm2340
      %v2342 = vsel %vm2341, %v2334, %v2338
      %v2343 = vand.u32 2147483647, %v2078
      %vm2344 = vcmp.eq.f32.partialorder %v2343, 8.507059e+37
      %v2345 = vand.u32 %v2078, 2147483648
      %v2346 = vor.u32 1.1754944e-38, %v2345
      %v2347 = vsel %vm2344, %v2346, %v2342
      %v2348 = vmul.f32 1.0, %v2347
      %v2349 = vrcp.pop %v2079
      %v2350 = vmul.f32 %v2079, %v2349
      %v2351 = vsub.f32 1.0, %v2350
      %v2352 = vmul.f32 %v2349, %v2351
      %v2353 = vadd.f32 %v2349, %v2352
      %vm2354 = vweird.f32 %v2079
      %vm2355 = vweird.f32 %v2349
      %vm2356 = vmor %vm2354, %vm2355
      %v2357 = vsel %vm2356, %v2349, %v2353
      %v2358 = vand.u32 2147483647, %v2079
      %vm2359 = vcmp.eq.f32.partialorder %v2358, 8.507059e+37
      %v2360 = vand.u32 %v2079, 2147483648
      %v2361 = vor.u32 1.1754944e-38, %v2360
      %v2362 = vsel %vm2359, %v2361, %v2357
      %v2363 = vmul.f32 1.0, %v2362
      %v2364 = vrcp.pop %v2080
      %v2365 = vmul.f32 %v2080, %v2364
      %v2366 = vsub.f32 1.0, %v2365
      %v2367 = vmul.f32 %v2364, %v2366
      %v2368 = vadd.f32 %v2364, %v2367
      %vm2369 = vweird.f32 %v2080
      %vm2370 = vweird.f32 %v2364
      %vm2371 = vmor %vm2369, %vm2370
      %v2372 = vsel %vm2371, %v2364, %v2368
      %v2373 = vand.u32 2147483647, %v2080
      %vm2374 = vcmp.eq.f32.partialorder %v2373, 8.507059e+37
      %v2375 = vand.u32 %v2080, 2147483648
      %v2376 = vor.u32 1.1754944e-38, %v2375
      %v2377 = vsel %vm2374, %v2376, %v2372
      %v2378 = vmul.f32 1.0, %v2377
      %v2379 = vrcp.pop %v2081
      %v2380 = vmul.f32 %v2081, %v2379
      %v2381 = vsub.f32 1.0, %v2380
      %v2382 = vmul.f32 %v2379, %v2381
      %v2383 = vadd.f32 %v2379, %v2382
      %vm2384 = vweird.f32 %v2081
      %vm2385 = vweird.f32 %v2379
      %vm2386 = vmor %vm2384, %vm2385
      %v2387 = vsel %vm2386, %v2379, %v2383
      %v2388 = vand.u32 2147483647, %v2081
      %vm2389 = vcmp.eq.f32.partialorder %v2388, 8.507059e+37
      %v2390 = vand.u32 %v2081, 2147483648
      %v2391 = vor.u32 1.1754944e-38, %v2390
      %v2392 = vsel %vm2389, %v2391, %v2387
      %v2393 = vmul.f32 1.0, %v2392
      %v2394 = vrcp.pop %v2082
      %v2395 = vmul.f32 %v2082, %v2394
      %v2396 = vsub.f32 1.0, %v2395
      %v2397 = vmul.f32 %v2394, %v2396
      %v2398 = vadd.f32 %v2394, %v2397
      %vm2399 = vweird.f32 %v2082
      %vm2400 = vweird.f32 %v2394
      %vm2401 = vmor %vm2399, %vm2400
      %v2402 = vsel %vm2401, %v2394, %v2398
      %v2403 = vand.u32 2147483647, %v2082
      %vm2404 = vcmp.eq.f32.partialorder %v2403, 8.507059e+37
      %v2405 = vand.u32 %v2082, 2147483648
      %v2406 = vor.u32 1.1754944e-38, %v2405
      %v2407 = vsel %vm2404, %v2406, %v2402
      %v2408 = vmul.f32 1.0, %v2407
      %v2409 = vrcp.pop %v2083
      %v2410 = vmul.f32 %v2083, %v2409
      %v2411 = vsub.f32 1.0, %v2410
      %v2412 = vmul.f32 %v2409, %v2411
      %v2413 = vadd.f32 %v2409, %v2412
      %vm2414 = vweird.f32 %v2083
      %vm2415 = vweird.f32 %v2409
      %vm2416 = vmor %vm2414, %vm2415
      %v2417 = vsel %vm2416, %v2409, %v2413
      %v2418 = vand.u32 2147483647, %v2083
      %vm2419 = vcmp.eq.f32.partialorder %v2418, 8.507059e+37
      %v2420 = vand.u32 %v2083, 2147483648
      %v2421 = vor.u32 1.1754944e-38, %v2420
      %v2422 = vsel %vm2419, %v2421, %v2417
      %v2423 = vmul.f32 1.0, %v2422
      %v2424 = vrcp.pop %v2084
      %v2425 = vmul.f32 %v2084, %v2424
      %v2426 = vsub.f32 1.0, %v2425
      %v2427 = vmul.f32 %v2424, %v2426
      %v2428 = vadd.f32 %v2424, %v2427
      %vm2429 = vweird.f32 %v2084
      %vm2430 = vweird.f32 %v2424
      %vm2431 = vmor %vm2429, %vm2430
      %v2432 = vsel %vm2431, %v2424, %v2428
      %v2433 = vand.u32 2147483647, %v2084
      %vm2434 = vcmp.eq.f32.partialorder %v2433, 8.507059e+37
      %v2435 = vand.u32 %v2084, 2147483648
      %v2436 = vor.u32 1.1754944e-38, %v2435
      %v2437 = vsel %vm2434, %v2436, %v2432
      %v2438 = vmul.f32 1.0, %v2437
      %v2439 = vrcp.pop %v2085
      %v2440 = vmul.f32 %v2085, %v2439
      %v2441 = vsub.f32 1.0, %v2440
      %v2442 = vmul.f32 %v2439, %v2441
      %v2443 = vadd.f32 %v2439, %v2442
      %vm2444 = vweird.f32 %v2085
      %vm2445 = vweird.f32 %v2439
      %vm2446 = vmor %vm2444, %vm2445
      %v2447 = vsel %vm2446, %v2439, %v2443
      %v2448 = vand.u32 2147483647, %v2085
      %vm2449 = vcmp.eq.f32.partialorder %v2448, 8.507059e+37
      %v2450 = vand.u32 %v2085, 2147483648
      %v2451 = vor.u32 1.1754944e-38, %v2450
      %v2452 = vsel %vm2449, %v2451, %v2447
      %v2453 = vmul.f32 1.0, %v2452
      %v2454 = vrcp.pop %v2086
      %v2455 = vmul.f32 %v2086, %v2454
      %v2456 = vsub.f32 1.0, %v2455
      %v2457 = vmul.f32 %v2454, %v2456
      %v2458 = vadd.f32 %v2454, %v2457
      %vm2459 = vweird.f32 %v2086
      %vm2460 = vweird.f32 %v2454
      %vm2461 = vmor %vm2459, %vm2460
      %v2462 = vsel %vm2461, %v2454, %v2458
      %v2463 = vand.u32 2147483647, %v2086
      %vm2464 = vcmp.eq.f32.partialorder %v2463, 8.507059e+37
      %v2465 = vand.u32 %v2086, 2147483648
      %v2466 = vor.u32 1.1754944e-38, %v2465
      %v2467 = vsel %vm2464, %v2466, %v2462
      %v2468 = vmul.f32 1.0, %v2467
      %v2469 = vrcp.pop %v2087
      %v2470 = vmul.f32 %v2087, %v2469
      %v2471 = vsub.f32 1.0, %v2470
      %v2472 = vmul.f32 %v2469, %v2471
      %v2473 = vadd.f32 %v2469, %v2472
      %vm2474 = vweird.f32 %v2087
      %vm2475 = vweird.f32 %v2469
      %vm2476 = vmor %vm2474, %vm2475
      %v2477 = vsel %vm2476, %v2469, %v2473
      %v2478 = vand.u32 2147483647, %v2087
      %vm2479 = vcmp.eq.f32.partialorder %v2478, 8.507059e+37
      %v2480 = vand.u32 %v2087, 2147483648
      %v2481 = vor.u32 1.1754944e-38, %v2480
      %v2482 = vsel %vm2479, %v2481, %v2477
      %v2483 = vmul.f32 1.0, %v2482
      %v2484 = vrcp.pop %v2088
      %v2485 = vmul.f32 %v2088, %v2484
      %v2486 = vsub.f32 1.0, %v2485
      %v2487 = vmul.f32 %v2484, %v2486
      %v2488 = vadd.f32 %v2484, %v2487
      %vm2489 = vweird.f32 %v2088
      %vm2490 = vweird.f32 %v2484
      %vm2491 = vmor %vm2489, %vm2490
      %v2492 = vsel %vm2491, %v2484, %v2488
      %v2493 = vand.u32 2147483647, %v2088
      %vm2494 = vcmp.eq.f32.partialorder %v2493, 8.507059e+37
      %v2495 = vand.u32 %v2088, 2147483648
      %v2496 = vor.u32 1.1754944e-38, %v2495
      %v2497 = vsel %vm2494, %v2496, %v2492
      %v2498 = vmul.f32 1.0, %v2497
      %v2499 = vrcp.pop %v2089
      %v2500 = vmul.f32 %v2089, %v2499
      %v2501 = vsub.f32 1.0, %v2500
      %v2502 = vmul.f32 %v2499, %v2501
      %v2503 = vadd.f32 %v2499, %v2502
      %vm2504 = vweird.f32 %v2089
      %vm2505 = vweird.f32 %v2499
      %vm2506 = vmor %vm2504, %vm2505
      %v2507 = vsel %vm2506, %v2499, %v2503
      %v2508 = vand.u32 2147483647, %v2089
      %vm2509 = vcmp.eq.f32.partialorder %v2508, 8.507059e+37
      %v2510 = vand.u32 %v2089, 2147483648
      %v2511 = vor.u32 1.1754944e-38, %v2510
      %v2512 = vsel %vm2509, %v2511, %v2507
      %v2513 = vmul.f32 1.0, %v2512
      %v2514 = vrcp.pop %v2090
      %v2515 = vmul.f32 %v2090, %v2514
      %v2516 = vsub.f32 1.0, %v2515
      %v2517 = vmul.f32 %v2514, %v2516
      %v2518 = vadd.f32 %v2514, %v2517
      %vm2519 = vweird.f32 %v2090
      %vm2520 = vweird.f32 %v2514
      %vm2521 = vmor %vm2519, %vm2520
      %v2522 = vsel %vm2521, %v2514, %v2518
      %v2523 = vand.u32 2147483647, %v2090
      %vm2524 = vcmp.eq.f32.partialorder %v2523, 8.507059e+37
      %v2525 = vand.u32 %v2090, 2147483648
      %v2526 = vor.u32 1.1754944e-38, %v2525
      %v2527 = vsel %vm2524, %v2526, %v2522
      %v2528 = vmul.f32 1.0, %v2527
      %v2529 = vrcp.pop %v2091
      %v2530 = vmul.f32 %v2091, %v2529
      %v2531 = vsub.f32 1.0, %v2530
      %v2532 = vmul.f32 %v2529, %v2531
      %v2533 = vadd.f32 %v2529, %v2532
      %vm2534 = vweird.f32 %v2091
      %vm2535 = vweird.f32 %v2529
      %vm2536 = vmor %vm2534, %vm2535
      %v2537 = vsel %vm2536, %v2529, %v2533
      %v2538 = vand.u32 2147483647, %v2091
      %vm2539 = vcmp.eq.f32.partialorder %v2538, 8.507059e+37
      %v2540 = vand.u32 %v2091, 2147483648
      %v2541 = vor.u32 1.1754944e-38, %v2540
      %v2542 = vsel %vm2539, %v2541, %v2537
      %v2543 = vmul.f32 1.0, %v2542
      %v2544 = vrcp.pop %v2092
      %v2545 = vmul.f32 %v2092, %v2544
      %v2546 = vsub.f32 1.0, %v2545
      %v2547 = vmul.f32 %v2544, %v2546
      %v2548 = vadd.f32 %v2544, %v2547
      %vm2549 = vweird.f32 %v2092
      %vm2550 = vweird.f32 %v2544
      %vm2551 = vmor %vm2549, %vm2550
      %v2552 = vsel %vm2551, %v2544, %v2548
      %v2553 = vand.u32 2147483647, %v2092
      %vm2554 = vcmp.eq.f32.partialorder %v2553, 8.507059e+37
      %v2555 = vand.u32 %v2092, 2147483648
      %v2556 = vor.u32 1.1754944e-38, %v2555
      %v2557 = vsel %vm2554, %v2556, %v2552
      %v2558 = vmul.f32 1.0, %v2557
      %v2559 = vrcp.pop %v2093
      %v2560 = vmul.f32 %v2093, %v2559
      %v2561 = vsub.f32 1.0, %v2560
      %v2562 = vmul.f32 %v2559, %v2561
      %v2563 = vadd.f32 %v2559, %v2562
      %vm2564 = vweird.f32 %v2093
      %vm2565 = vweird.f32 %v2559
      %vm2566 = vmor %vm2564, %vm2565
      %v2567 = vsel %vm2566, %v2559, %v2563
      %v2568 = vand.u32 2147483647, %v2093
      %vm2569 = vcmp.eq.f32.partialorder %v2568, 8.507059e+37
      %v2570 = vand.u32 %v2093, 2147483648
      %v2571 = vor.u32 1.1754944e-38, %v2570
      %v2572 = vsel %vm2569, %v2571, %v2567
      %v2573 = vmul.f32 1.0, %v2572
      %v2574 = vmul.f32 %v1839, %v2108
      %v2575 = vmul.f32 %v1842, %v2123
      %v2576 = vmul.f32 %v1845, %v2138
      %v2577 = vmul.f32 %v1848, %v2153
      %v2578 = vmul.f32 %v1851, %v2168
      %v2579 = vmul.f32 %v1854, %v2183
      %v2580 = vmul.f32 %v1857, %v2198
      %v2581 = vmul.f32 %v1860, %v2213
      %v2582 = vmul.f32 %v1863, %v2228
      %v2583 = vmul.f32 %v1866, %v2243
      %v2584 = vmul.f32 %v1869, %v2258
      %v2585 = vmul.f32 %v1872, %v2273
      %v2586 = vmul.f32 %v1875, %v2288
      %v2587 = vmul.f32 %v1878, %v2303
      %v2588 = vmul.f32 %v1881, %v2318
      %v2589 = vmul.f32 %v1884, %v2333
      %v2590 = vmul.f32 %v1887, %v2348
      %v2591 = vmul.f32 %v1890, %v2363
      %v2592 = vmul.f32 %v1893, %v2378
      %v2593 = vmul.f32 %v1896, %v2393
      %v2594 = vmul.f32 %v1899, %v2408
      %v2595 = vmul.f32 %v1902, %v2423
      %v2596 = vmul.f32 %v1905, %v2438
      %v2597 = vmul.f32 %v1908, %v2453
      %v2598 = vmul.f32 %v1911, %v2468
      %v2599 = vmul.f32 %v1914, %v2483
      %v2600 = vmul.f32 %v1917, %v2498
      %v2601 = vmul.f32 %v1920, %v2513
      %v2602 = vmul.f32 %v1923, %v2528
      %v2603 = vmul.f32 %v1926, %v2543
      %v2604 = vmul.f32 %v1929, %v2558
      %v2605 = vmul.f32 %v1932, %v2573
      %vm2606 = vcmask 64512
      %2607 = vst.msk [vmem:[#allocation2 + $0x11] sm:$0xff] %vm2606, %v2574
      %2608 = vst.msk [vmem:[#allocation2 + $0x19] sm:$0xff] %vm2606, %v2575
      %2609 = vst.msk [vmem:[#allocation2 + $0x21] sm:$0xff] %vm2606, %v2576
      %2610 = vst.msk [vmem:[#allocation2 + $0x29] sm:$0xff] %vm2606, %v2577
      %2611 = vst.msk [vmem:[#allocation2 + $0x31] sm:$0xff] %vm2606, %v2578
      %2612 = vst.msk [vmem:[#allocation2 + $0x39] sm:$0xff] %vm2606, %v2579
      %2613 = vst.msk [vmem:[#allocation2 + $0x41] sm:$0xff] %vm2606, %v2580
      %2614 = vst.msk [vmem:[#allocation2 + $0x49] sm:$0xff] %vm2606, %v2581
      %2615 = vst.msk [vmem:[#allocation2 + $0x51] sm:$0xff] %vm2606, %v2582
      %2616 = vst.msk [vmem:[#allocation2 + $0x59] sm:$0xff] %vm2606, %v2583
      %2617 = vst.msk [vmem:[#allocation2 + $0x61] sm:$0xff] %vm2606, %v2584
      %2618 = vst.msk [vmem:[#allocation2 + $0x69] sm:$0xff] %vm2606, %v2585
      %2619 = vst.msk [vmem:[#allocation2 + $0x71] sm:$0xff] %vm2606, %v2586
      %2620 = vst.msk [vmem:[#allocation2 + $0x79] sm:$0xff] %vm2606, %v2587
      %2621 = vst.msk [vmem:[#allocation2 + $0x81] sm:$0xff] %vm2606, %v2588
      %2622 = vst.msk [vmem:[#allocation2 + $0x89] sm:$0xff] %vm2606, %v2589
      %2623 = vst.msk [vmem:[#allocation2 + $0x91] sm:$0xff] %vm2606, %v2590
      %2624 = vst.msk [vmem:[#allocation2 + $0x99] sm:$0xff] %vm2606, %v2591
      %2625 = vst.msk [vmem:[#allocation2 + $0xa1] sm:$0xff] %vm2606, %v2592
      %2626 = vst.msk [vmem:[#allocation2 + $0xa9] sm:$0xff] %vm2606, %v2593
      %2627 = vst.msk [vmem:[#allocation2 + $0xb1] sm:$0xff] %vm2606, %v2594
      %2628 = vst.msk [vmem:[#allocation2 + $0xb9] sm:$0xff] %vm2606, %v2595
      %2629 = vst.msk [vmem:[#allocation2 + $0xc1] sm:$0xff] %vm2606, %v2596
      %2630 = vst.msk [vmem:[#allocation2 + $0xc9] sm:$0xff] %vm2606, %v2597
      %2631 = vst.msk [vmem:[#allocation2 + $0xd1] sm:$0xff] %vm2606, %v2598
      %2632 = vst.msk [vmem:[#allocation2 + $0xd9] sm:$0xff] %vm2606, %v2599
      %2633 = vst.msk [vmem:[#allocation2 + $0xe1] sm:$0xff] %vm2606, %v2600
      %2634 = vst.msk [vmem:[#allocation2 + $0xe9] sm:$0xff] %vm2606, %v2601
      %2635 = vst.msk [vmem:[#allocation2 + $0xf1] sm:$0xff] %vm2606, %v2602
      %2636 = vst.msk [vmem:[#allocation2 + $0xf9] sm:$0xff] %vm2606, %v2603
      %2637 = vst.msk [vmem:[#allocation2 + $0x101] sm:$0xff] %vm2606, %v2604
      %2638 = vst.msk [vmem:[#allocation2 + $0x109] sm:$0xff] %vm2606, %v2605
      %v2639 = vld [vmem:[#allocation2] sm:$0xff]
      %v2640 = vld [vmem:[#allocation2 + $0x8] sm:$0xff]
      %v2641 = vld [vmem:[#allocation2 + $0x10] sm:$0xff]
      %v2642 = vld [vmem:[#allocation2 + $0x18] sm:$0xff]
      %v2643 = vld [vmem:[#allocation2 + $0x20] sm:$0xff]
      %v2644 = vld [vmem:[#allocation2 + $0x28] sm:$0xff]
      %v2645 = vld [vmem:[#allocation2 + $0x30] sm:$0xff]
      %v2646 = vld [vmem:[#allocation2 + $0x38] sm:$0xff]
      %v2647 = vld [vmem:[#allocation2 + $0x40] sm:$0xff]
      %v2648 = vld [vmem:[#allocation2 + $0x48] sm:$0xff]
      %v2649 = vld [vmem:[#allocation2 + $0x50] sm:$0xff]
      %v2650 = vld [vmem:[#allocation2 + $0x58] sm:$0xff]
      %v2651 = vld [vmem:[#allocation2 + $0x60] sm:$0xff]
      %v2652 = vld [vmem:[#allocation2 + $0x68] sm:$0xff]
      %v2653 = vld [vmem:[#allocation2 + $0x70] sm:$0xff]
      %v2654 = vld [vmem:[#allocation2 + $0x78] sm:$0xff]
      %v2655 = vld [vmem:[#allocation2 + $0x80] sm:$0xff]
      %v2656 = vld [vmem:[#allocation2 + $0x88] sm:$0xff]
      %v2657 = vld [vmem:[#allocation2 + $0x90] sm:$0xff]
      %v2658 = vld [vmem:[#allocation2 + $0x98] sm:$0xff]
      %v2659 = vld [vmem:[#allocation2 + $0xa0] sm:$0xff]
      %v2660 = vld [vmem:[#allocation2 + $0xa8] sm:$0xff]
      %v2661 = vld [vmem:[#allocation2 + $0xb0] sm:$0xff]
      %v2662 = vld [vmem:[#allocation2 + $0xb8] sm:$0xff]
      %v2663 = vld [vmem:[#allocation2 + $0xc0] sm:$0xff]
      %v2664 = vld [vmem:[#allocation2 + $0xc8] sm:$0xff]
      %v2665 = vld [vmem:[#allocation2 + $0xd0] sm:$0xff]
      %v2666 = vld [vmem:[#allocation2 + $0xd8] sm:$0xff]
      %v2667 = vld [vmem:[#allocation2 + $0xe0] sm:$0xff]
      %v2668 = vld [vmem:[#allocation2 + $0xe8] sm:$0xff]
      %v2669 = vld [vmem:[#allocation2 + $0xf0] sm:$0xff]
      %v2670 = vld [vmem:[#allocation2 + $0xf8] sm:$0xff]
      %v2671 = vld [vmem:[#allocation2 + $0x1] sm:$0xff]
      %v2672 = vld [vmem:[#allocation2 + $0x9] sm:$0xff]
      %v2673 = vld [vmem:[#allocation2 + $0x11] sm:$0xff]
      %v2674 = vld [vmem:[#allocation2 + $0x19] sm:$0xff]
      %v2675 = vld [vmem:[#allocation2 + $0x21] sm:$0xff]
      %v2676 = vld [vmem:[#allocation2 + $0x29] sm:$0xff]
      %v2677 = vld [vmem:[#allocation2 + $0x31] sm:$0xff]
      %v2678 = vld [vmem:[#allocation2 + $0x39] sm:$0xff]
      %v2679 = vld [vmem:[#allocation2 + $0x41] sm:$0xff]
      %v2680 = vld [vmem:[#allocation2 + $0x49] sm:$0xff]
      %v2681 = vld [vmem:[#allocation2 + $0x51] sm:$0xff]
      %v2682 = vld [vmem:[#allocation2 + $0x59] sm:$0xff]
      %v2683 = vld [vmem:[#allocation2 + $0x61] sm:$0xff]
      %v2684 = vld [vmem:[#allocation2 + $0x69] sm:$0xff]
      %v2685 = vld [vmem:[#allocation2 + $0x71] sm:$0xff]
      %v2686 = vld [vmem:[#allocation2 + $0x79] sm:$0xff]
      %v2687 = vld [vmem:[#allocation2 + $0x81] sm:$0xff]
      %v2688 = vld [vmem:[#allocation2 + $0x89] sm:$0xff]
      %v2689 = vld [vmem:[#allocation2 + $0x91] sm:$0xff]
      %v2690 = vld [vmem:[#allocation2 + $0x99] sm:$0xff]
      %v2691 = vld [vmem:[#allocation2 + $0xa1] sm:$0xff]
      %v2692 = vld [vmem:[#allocation2 + $0xa9] sm:$0xff]
      %v2693 = vld [vmem:[#allocation2 + $0xb1] sm:$0xff]
      %v2694 = vld [vmem:[#allocation2 + $0xb9] sm:$0xff]
      %v2695 = vld [vmem:[#allocation2 + $0xc1] sm:$0xff]
      %v2696 = vld [vmem:[#allocation2 + $0xc9] sm:$0xff]
      %v2697 = vld [vmem:[#allocation2 + $0xd1] sm:$0xff]
      %v2698 = vld [vmem:[#allocation2 + $0xd9] sm:$0xff]
      %v2699 = vld [vmem:[#allocation2 + $0xe1] sm:$0xff]
      %v2700 = vld [vmem:[#allocation2 + $0xe9] sm:$0xff]
      %v2701 = vld [vmem:[#allocation2 + $0xf1] sm:$0xff]
      %v2702 = vld [vmem:[#allocation2 + $0xf9] sm:$0xff]
      %v2703 = vld [vmem:[#allocation2 + $0x2] sm:$0xff]
      %v2704 = vld [vmem:[#allocation2 + $0xa] sm:$0xff]
      %v2705 = vld [vmem:[#allocation2 + $0x12] sm:$0xff]
      %v2706 = vld [vmem:[#allocation2 + $0x1a] sm:$0xff]
      %v2707 = vld [vmem:[#allocation2 + $0x22] sm:$0xff]
      %v2708 = vld [vmem:[#allocation2 + $0x2a] sm:$0xff]
      %v2709 = vld [vmem:[#allocation2 + $0x32] sm:$0xff]
      %v2710 = vld [vmem:[#allocation2 + $0x3a] sm:$0xff]
      %v2711 = vld [vmem:[#allocation2 + $0x42] sm:$0xff]
      %v2712 = vld [vmem:[#allocation2 + $0x4a] sm:$0xff]
      %v2713 = vld [vmem:[#allocation2 + $0x52] sm:$0xff]
      %v2714 = vld [vmem:[#allocation2 + $0x5a] sm:$0xff]
      %v2715 = vld [vmem:[#allocation2 + $0x62] sm:$0xff]
      %v2716 = vld [vmem:[#allocation2 + $0x6a] sm:$0xff]
      %v2717 = vld [vmem:[#allocation2 + $0x72] sm:$0xff]
      %v2718 = vld [vmem:[#allocation2 + $0x7a] sm:$0xff]
      %v2719 = vld [vmem:[#allocation2 + $0x82] sm:$0xff]
      %v2720 = vld [vmem:[#allocation2 + $0x8a] sm:$0xff]
      %v2721 = vld [vmem:[#allocation2 + $0x92] sm:$0xff]
      %v2722 = vld [vmem:[#allocation2 + $0x9a] sm:$0xff]
      %v2723 = vld [vmem:[#allocation2 + $0xa2] sm:$0xff]
      %v2724 = vld [vmem:[#allocation2 + $0xaa] sm:$0xff]
      %v2725 = vld [vmem:[#allocation2 + $0xb2] sm:$0xff]
      %v2726 = vld [vmem:[#allocation2 + $0xba] sm:$0xff]
      %v2727 = vld [vmem:[#allocation2 + $0xc2] sm:$0xff]
      %v2728 = vld [vmem:[#allocation2 + $0xca] sm:$0xff]
      %v2729 = vld [vmem:[#allocation2 + $0xd2] sm:$0xff]
      %v2730 = vld [vmem:[#allocation2 + $0xda] sm:$0xff]
      %v2731 = vld [vmem:[#allocation2 + $0xe2] sm:$0xff]
      %v2732 = vld [vmem:[#allocation2 + $0xea] sm:$0xff]
      %v2733 = vld [vmem:[#allocation2 + $0xf2] sm:$0xff]
      %v2734 = vld [vmem:[#allocation2 + $0xfa] sm:$0xff]
      %v2735 = vld [vmem:[#allocation2 + $0x100] sm:$0xff]
      %v2736 = vld [vmem:[#allocation2 + $0x108] sm:$0xff]
      %v2737 = vld [vmem:[#allocation2 + $0x101] sm:$0xff]
      %v2738 = vld [vmem:[#allocation2 + $0x109] sm:$0xff]
      %v2739 = vld [vmem:[#allocation2 + $0x102] sm:$0xff]
      %v2740 = vld [vmem:[#allocation2 + $0x10a] sm:$0xff]
      %v2741 = vld [vmem:[#allocation2 + $0x110] sm:$0xff]
      %v2742 = vld [vmem:[#allocation2 + $0x118] sm:$0xff]
      %v2743 = vld [vmem:[#allocation2 + $0x111] sm:$0xff]
      %v2744 = vld [vmem:[#allocation2 + $0x119] sm:$0xff]
      %v2745 = vld [vmem:[#allocation2 + $0x112] sm:$0xff]
      %v2746 = vld [vmem:[#allocation2 + $0x11a] sm:$0xff]
      %2779 = vrot.lane.b32.xlu0 %v2671, 8
      %v2780 = vpop.permute.xlu0 %2779
      %2781 = vrot.lane.b32.xlu0 %v2672, 8
      %v2782 = vpop.permute.xlu0 %2781
      %2783 = vrot.lane.b32.xlu0 %v2673, 8
      %v2784 = vpop.permute.xlu0 %2783
      %2785 = vrot.lane.b32.xlu0 %v2674, 8
      %v2786 = vpop.permute.xlu0 %2785
      %2787 = vrot.lane.b32.xlu0 %v2675, 8
      %v2788 = vpop.permute.xlu0 %2787
      %2789 = vrot.lane.b32.xlu0 %v2676, 8
      %v2790 = vpop.permute.xlu0 %2789
      %2791 = vrot.lane.b32.xlu0 %v2677, 8
      %v2792 = vpop.permute.xlu0 %2791
      %2793 = vrot.lane.b32.xlu0 %v2678, 8
      %v2794 = vpop.permute.xlu0 %2793
      %2795 = vrot.lane.b32.xlu0 %v2679, 8
      %v2796 = vpop.permute.xlu0 %2795
      %2797 = vrot.lane.b32.xlu0 %v2680, 8
      %v2798 = vpop.permute.xlu0 %2797
      %2799 = vrot.lane.b32.xlu0 %v2681, 8
      %v2800 = vpop.permute.xlu0 %2799
      %2801 = vrot.lane.b32.xlu0 %v2682, 8
      %v2802 = vpop.permute.xlu0 %2801
      %2803 = vrot.lane.b32.xlu0 %v2683, 8
      %v2804 = vpop.permute.xlu0 %2803
      %2805 = vrot.lane.b32.xlu0 %v2684, 8
      %v2806 = vpop.permute.xlu0 %2805
      %2807 = vrot.lane.b32.xlu0 %v2685, 8
      %v2808 = vpop.permute.xlu0 %2807
      %2809 = vrot.lane.b32.xlu0 %v2686, 8
      %v2810 = vpop.permute.xlu0 %2809
      %2811 = vrot.lane.b32.xlu0 %v2687, 8
      %v2812 = vpop.permute.xlu0 %2811
      %2813 = vrot.lane.b32.xlu0 %v2688, 8
      %v2814 = vpop.permute.xlu0 %2813
      %2815 = vrot.lane.b32.xlu0 %v2689, 8
      %v2816 = vpop.permute.xlu0 %2815
      %2817 = vrot.lane.b32.xlu0 %v2690, 8
      %v2818 = vpop.permute.xlu0 %2817
      %2819 = vrot.lane.b32.xlu0 %v2691, 8
      %v2820 = vpop.permute.xlu0 %2819
      %2821 = vrot.lane.b32.xlu0 %v2692, 8
      %v2822 = vpop.permute.xlu0 %2821
      %2823 = vrot.lane.b32.xlu0 %v2693, 8
      %v2824 = vpop.permute.xlu0 %2823
      %2825 = vrot.lane.b32.xlu0 %v2694, 8
      %v2826 = vpop.permute.xlu0 %2825
      %2827 = vrot.lane.b32.xlu0 %v2695, 8
      %v2828 = vpop.permute.xlu0 %2827
      %2829 = vrot.lane.b32.xlu0 %v2696, 8
      %v2830 = vpop.permute.xlu0 %2829
      %2831 = vrot.lane.b32.xlu0 %v2697, 8
      %v2832 = vpop.permute.xlu0 %2831
      %2833 = vrot.lane.b32.xlu0 %v2698, 8
      %v2834 = vpop.permute.xlu0 %2833
      %2835 = vrot.lane.b32.xlu0 %v2699, 8
      %v2836 = vpop.permute.xlu0 %2835
      %2837 = vrot.lane.b32.xlu0 %v2700, 8
      %v2838 = vpop.permute.xlu0 %2837
      %2839 = vrot.lane.b32.xlu0 %v2701, 8
      %v2840 = vpop.permute.xlu0 %2839
      %2841 = vrot.lane.b32.xlu0 %v2702, 8
      %v2842 = vpop.permute.xlu0 %2841
      %2907 = vrot.lane.b32.xlu0 %v2703, 16
      %v2908 = vpop.permute.xlu0 %2907
      %2909 = vrot.lane.b32.xlu0 %v2704, 16
      %v2910 = vpop.permute.xlu0 %2909
      %2911 = vrot.lane.b32.xlu0 %v2705, 16
      %v2912 = vpop.permute.xlu0 %2911
      %2913 = vrot.lane.b32.xlu0 %v2706, 16
      %v2914 = vpop.permute.xlu0 %2913
      %2915 = vrot.lane.b32.xlu0 %v2707, 16
      %v2916 = vpop.permute.xlu0 %2915
      %2917 = vrot.lane.b32.xlu0 %v2708, 16
      %v2918 = vpop.permute.xlu0 %2917
      %2919 = vrot.lane.b32.xlu0 %v2709, 16
      %v2920 = vpop.permute.xlu0 %2919
      %2921 = vrot.lane.b32.xlu0 %v2710, 16
      %v2922 = vpop.permute.xlu0 %2921
      %2923 = vrot.lane.b32.xlu0 %v2711, 16
      %v2924 = vpop.permute.xlu0 %2923
      %2925 = vrot.lane.b32.xlu0 %v2712, 16
      %v2926 = vpop.permute.xlu0 %2925
      %2927 = vrot.lane.b32.xlu0 %v2713, 16
      %v2928 = vpop.permute.xlu0 %2927
      %2929 = vrot.lane.b32.xlu0 %v2714, 16
      %v2930 = vpop.permute.xlu0 %2929
      %2931 = vrot.lane.b32.xlu0 %v2715, 16
      %v2932 = vpop.permute.xlu0 %2931
      %2933 = vrot.lane.b32.xlu0 %v2716, 16
      %v2934 = vpop.permute.xlu0 %2933
      %2935 = vrot.lane.b32.xlu0 %v2717, 16
      %v2936 = vpop.permute.xlu0 %2935
      %2937 = vrot.lane.b32.xlu0 %v2718, 16
      %v2938 = vpop.permute.xlu0 %2937
      %2939 = vrot.lane.b32.xlu0 %v2719, 16
      %v2940 = vpop.permute.xlu0 %2939
      %2941 = vrot.lane.b32.xlu0 %v2720, 16
      %v2942 = vpop.permute.xlu0 %2941
      %2943 = vrot.lane.b32.xlu0 %v2721, 16
      %v2944 = vpop.permute.xlu0 %2943
      %2945 = vrot.lane.b32.xlu0 %v2722, 16
      %v2946 = vpop.permute.xlu0 %2945
      %2947 = vrot.lane.b32.xlu0 %v2723, 16
      %v2948 = vpop.permute.xlu0 %2947
      %2949 = vrot.lane.b32.xlu0 %v2724, 16
      %v2950 = vpop.permute.xlu0 %2949
      %2951 = vrot.lane.b32.xlu0 %v2725, 16
      %v2952 = vpop.permute.xlu0 %2951
      %2953 = vrot.lane.b32.xlu0 %v2726, 16
      %v2954 = vpop.permute.xlu0 %2953
      %2955 = vrot.lane.b32.xlu0 %v2727, 16
      %v2956 = vpop.permute.xlu0 %2955
      %2957 = vrot.lane.b32.xlu0 %v2728, 16
      %v2958 = vpop.permute.xlu0 %2957
      %2959 = vrot.lane.b32.xlu0 %v2729, 16
      %v2960 = vpop.permute.xlu0 %2959
      %2961 = vrot.lane.b32.xlu0 %v2730, 16
      %v2962 = vpop.permute.xlu0 %2961
      %2963 = vrot.lane.b32.xlu0 %v2731, 16
      %v2964 = vpop.permute.xlu0 %2963
      %2965 = vrot.lane.b32.xlu0 %v2732, 16
      %v2966 = vpop.permute.xlu0 %2965
      %2967 = vrot.lane.b32.xlu0 %v2733, 16
      %v2968 = vpop.permute.xlu0 %2967
      %2969 = vrot.lane.b32.xlu0 %v2734, 16
      %v2970 = vpop.permute.xlu0 %2969
      %3035 = vrot.lane.b32.xlu0 %v2641, 24
      %v3036 = vpop.permute.xlu0 %3035
      %3037 = vrot.lane.b32.xlu0 %v2642, 24
      %v3038 = vpop.permute.xlu0 %3037
      %3039 = vrot.lane.b32.xlu0 %v2643, 24
      %v3040 = vpop.permute.xlu0 %3039
      %3041 = vrot.lane.b32.xlu0 %v2644, 24
      %v3042 = vpop.permute.xlu0 %3041
      %3043 = vrot.lane.b32.xlu0 %v2645, 24
      %v3044 = vpop.permute.xlu0 %3043
      %3045 = vrot.lane.b32.xlu0 %v2646, 24
      %v3046 = vpop.permute.xlu0 %3045
      %3047 = vrot.lane.b32.xlu0 %v2647, 24
      %v3048 = vpop.permute.xlu0 %3047
      %3049 = vrot.lane.b32.xlu0 %v2648, 24
      %v3050 = vpop.permute.xlu0 %3049
      %3051 = vrot.lane.b32.xlu0 %v2649, 24
      %v3052 = vpop.permute.xlu0 %3051
      %3053 = vrot.lane.b32.xlu0 %v2650, 24
      %v3054 = vpop.permute.xlu0 %3053
      %3055 = vrot.lane.b32.xlu0 %v2651, 24
      %v3056 = vpop.permute.xlu0 %3055
      %3057 = vrot.lane.b32.xlu0 %v2652, 24
      %v3058 = vpop.permute.xlu0 %3057
      %3059 = vrot.lane.b32.xlu0 %v2653, 24
      %v3060 = vpop.permute.xlu0 %3059
      %3061 = vrot.lane.b32.xlu0 %v2654, 24
      %v3062 = vpop.permute.xlu0 %3061
      %3063 = vrot.lane.b32.xlu0 %v2655, 24
      %v3064 = vpop.permute.xlu0 %3063
      %3065 = vrot.lane.b32.xlu0 %v2656, 24
      %v3066 = vpop.permute.xlu0 %3065
      %3067 = vrot.lane.b32.xlu0 %v2657, 24
      %v3068 = vpop.permute.xlu0 %3067
      %3069 = vrot.lane.b32.xlu0 %v2658, 24
      %v3070 = vpop.permute.xlu0 %3069
      %3071 = vrot.lane.b32.xlu0 %v2659, 24
      %v3072 = vpop.permute.xlu0 %3071
      %3073 = vrot.lane.b32.xlu0 %v2660, 24
      %v3074 = vpop.permute.xlu0 %3073
      %3075 = vrot.lane.b32.xlu0 %v2661, 24
      %v3076 = vpop.permute.xlu0 %3075
      %3077 = vrot.lane.b32.xlu0 %v2662, 24
      %v3078 = vpop.permute.xlu0 %3077
      %3079 = vrot.lane.b32.xlu0 %v2663, 24
      %v3080 = vpop.permute.xlu0 %3079
      %3081 = vrot.lane.b32.xlu0 %v2664, 24
      %v3082 = vpop.permute.xlu0 %3081
      %3083 = vrot.lane.b32.xlu0 %v2665, 24
      %v3084 = vpop.permute.xlu0 %3083
      %3085 = vrot.lane.b32.xlu0 %v2666, 24
      %v3086 = vpop.permute.xlu0 %3085
      %3087 = vrot.lane.b32.xlu0 %v2667, 24
      %v3088 = vpop.permute.xlu0 %3087
      %3089 = vrot.lane.b32.xlu0 %v2668, 24
      %v3090 = vpop.permute.xlu0 %3089
      %3091 = vrot.lane.b32.xlu0 %v2669, 24
      %v3092 = vpop.permute.xlu0 %3091
      %3093 = vrot.lane.b32.xlu0 %v2670, 24
      %v3094 = vpop.permute.xlu0 %3093
      %3095 = vrot.lane.b32.xlu0 %v2735, 24
      %v3096 = vpop.permute.xlu0 %3095
      %3097 = vrot.lane.b32.xlu0 %v2736, 24
      %v3098 = vpop.permute.xlu0 %3097
      %3133 = vrot.lane.b32.xlu0 %v2673, 32
      %v3134 = vpop.permute.xlu0 %3133
      %3135 = vrot.lane.b32.xlu0 %v2674, 32
      %v3136 = vpop.permute.xlu0 %3135
      %3137 = vrot.lane.b32.xlu0 %v2675, 32
      %v3138 = vpop.permute.xlu0 %3137
      %3139 = vrot.lane.b32.xlu0 %v2676, 32
      %v3140 = vpop.permute.xlu0 %3139
      %3141 = vrot.lane.b32.xlu0 %v2677, 32
      %v3142 = vpop.permute.xlu0 %3141
      %3143 = vrot.lane.b32.xlu0 %v2678, 32
      %v3144 = vpop.permute.xlu0 %3143
      %3145 = vrot.lane.b32.xlu0 %v2679, 32
      %v3146 = vpop.permute.xlu0 %3145
      %3147 = vrot.lane.b32.xlu0 %v2680, 32
      %v3148 = vpop.permute.xlu0 %3147
      %3149 = vrot.lane.b32.xlu0 %v2681, 32
      %v3150 = vpop.permute.xlu0 %3149
      %3151 = vrot.lane.b32.xlu0 %v2682, 32
      %v3152 = vpop.permute.xlu0 %3151
      %3153 = vrot.lane.b32.xlu0 %v2683, 32
      %v3154 = vpop.permute.xlu0 %3153
      %3155 = vrot.lane.b32.xlu0 %v2684, 32
      %v3156 = vpop.permute.xlu0 %3155
      %3157 = vrot.lane.b32.xlu0 %v2685, 32
      %v3158 = vpop.permute.xlu0 %3157
      %3159 = vrot.lane.b32.xlu0 %v2686, 32
      %v3160 = vpop.permute.xlu0 %3159
      %3161 = vrot.lane.b32.xlu0 %v2687, 32
      %v3162 = vpop.permute.xlu0 %3161
      %3163 = vrot.lane.b32.xlu0 %v2688, 32
      %v3164 = vpop.permute.xlu0 %3163
      %3165 = vrot.lane.b32.xlu0 %v2689, 32
      %v3166 = vpop.permute.xlu0 %3165
      %3167 = vrot.lane.b32.xlu0 %v2690, 32
      %v3168 = vpop.permute.xlu0 %3167
      %3169 = vrot.lane.b32.xlu0 %v2691, 32
      %v3170 = vpop.permute.xlu0 %3169
      %3171 = vrot.lane.b32.xlu0 %v2692, 32
      %v3172 = vpop.permute.xlu0 %3171
      %3173 = vrot.lane.b32.xlu0 %v2693, 32
      %v3174 = vpop.permute.xlu0 %3173
      %3175 = vrot.lane.b32.xlu0 %v2694, 32
      %v3176 = vpop.permute.xlu0 %3175
      %3177 = vrot.lane.b32.xlu0 %v2695, 32
      %v3178 = vpop.permute.xlu0 %3177
      %3179 = vrot.lane.b32.xlu0 %v2696, 32
      %v3180 = vpop.permute.xlu0 %3179
      %3181 = vrot.lane.b32.xlu0 %v2697, 32
      %v3182 = vpop.permute.xlu0 %3181
      %3183 = vrot.lane.b32.xlu0 %v2698, 32
      %v3184 = vpop.permute.xlu0 %3183
      %3185 = vrot.lane.b32.xlu0 %v2699, 32
      %v3186 = vpop.permute.xlu0 %3185
      %3187 = vrot.lane.b32.xlu0 %v2700, 32
      %v3188 = vpop.permute.xlu0 %3187
      %3189 = vrot.lane.b32.xlu0 %v2701, 32
      %v3190 = vpop.permute.xlu0 %3189
      %3191 = vrot.lane.b32.xlu0 %v2702, 32
      %v3192 = vpop.permute.xlu0 %3191
      %3193 = vrot.lane.b32.xlu0 %v2737, 32
      %v3194 = vpop.permute.xlu0 %3193
      %3195 = vrot.lane.b32.xlu0 %v2738, 32
      %v3196 = vpop.permute.xlu0 %3195
      %3231 = vrot.lane.b32.xlu0 %v2705, 40
      %v3232 = vpop.permute.xlu0 %3231
      %3233 = vrot.lane.b32.xlu0 %v2706, 40
      %v3234 = vpop.permute.xlu0 %3233
      %3235 = vrot.lane.b32.xlu0 %v2707, 40
      %v3236 = vpop.permute.xlu0 %3235
      %3237 = vrot.lane.b32.xlu0 %v2708, 40
      %v3238 = vpop.permute.xlu0 %3237
      %3239 = vrot.lane.b32.xlu0 %v2709, 40
      %v3240 = vpop.permute.xlu0 %3239
      %3241 = vrot.lane.b32.xlu0 %v2710, 40
      %v3242 = vpop.permute.xlu0 %3241
      %3243 = vrot.lane.b32.xlu0 %v2711, 40
      %v3244 = vpop.permute.xlu0 %3243
      %3245 = vrot.lane.b32.xlu0 %v2712, 40
      %v3246 = vpop.permute.xlu0 %3245
      %3247 = vrot.lane.b32.xlu0 %v2713, 40
      %v3248 = vpop.permute.xlu0 %3247
      %3249 = vrot.lane.b32.xlu0 %v2714, 40
      %v3250 = vpop.permute.xlu0 %3249
      %3251 = vrot.lane.b32.xlu0 %v2715, 40
      %v3252 = vpop.permute.xlu0 %3251
      %3253 = vrot.lane.b32.xlu0 %v2716, 40
      %v3254 = vpop.permute.xlu0 %3253
      %3255 = vrot.lane.b32.xlu0 %v2717, 40
      %v3256 = vpop.permute.xlu0 %3255
      %3257 = vrot.lane.b32.xlu0 %v2718, 40
      %v3258 = vpop.permute.xlu0 %3257
      %3259 = vrot.lane.b32.xlu0 %v2719, 40
      %v3260 = vpop.permute.xlu0 %3259
      %3261 = vrot.lane.b32.xlu0 %v2720, 40
      %v3262 = vpop.permute.xlu0 %3261
      %3263 = vrot.lane.b32.xlu0 %v2721, 40
      %v3264 = vpop.permute.xlu0 %3263
      %3265 = vrot.lane.b32.xlu0 %v2722, 40
      %v3266 = vpop.permute.xlu0 %3265
      %3267 = vrot.lane.b32.xlu0 %v2723, 40
      %v3268 = vpop.permute.xlu0 %3267
      %3269 = vrot.lane.b32.xlu0 %v2724, 40
      %v3270 = vpop.permute.xlu0 %3269
      %3271 = vrot.lane.b32.xlu0 %v2725, 40
      %v3272 = vpop.permute.xlu0 %3271
      %3273 = vrot.lane.b32.xlu0 %v2726, 40
      %v3274 = vpop.permute.xlu0 %3273
      %3275 = vrot.lane.b32.xlu0 %v2727, 40
      %v3276 = vpop.permute.xlu0 %3275
      %3277 = vrot.lane.b32.xlu0 %v2728, 40
      %v3278 = vpop.permute.xlu0 %3277
      %3279 = vrot.lane.b32.xlu0 %v2729, 40
      %v3280 = vpop.permute.xlu0 %3279
      %3281 = vrot.lane.b32.xlu0 %v2730, 40
      %v3282 = vpop.permute.xlu0 %3281
      %3283 = vrot.lane.b32.xlu0 %v2731, 40
      %v3284 = vpop.permute.xlu0 %3283
      %3285 = vrot.lane.b32.xlu0 %v2732, 40
      %v3286 = vpop.permute.xlu0 %3285
      %3287 = vrot.lane.b32.xlu0 %v2733, 40
      %v3288 = vpop.permute.xlu0 %3287
      %3289 = vrot.lane.b32.xlu0 %v2734, 40
      %v3290 = vpop.permute.xlu0 %3289
      %3291 = vrot.lane.b32.xlu0 %v2739, 40
      %v3292 = vpop.permute.xlu0 %3291
      %3293 = vrot.lane.b32.xlu0 %v2740, 40
      %v3294 = vpop.permute.xlu0 %3293
      %3329 = vrot.lane.b32.xlu0 %v2643, 48
      %v3330 = vpop.permute.xlu0 %3329
      %3331 = vrot.lane.b32.xlu0 %v2644, 48
      %v3332 = vpop.permute.xlu0 %3331
      %3333 = vrot.lane.b32.xlu0 %v2645, 48
      %v3334 = vpop.permute.xlu0 %3333
      %3335 = vrot.lane.b32.xlu0 %v2646, 48
      %v3336 = vpop.permute.xlu0 %3335
      %3337 = vrot.lane.b32.xlu0 %v2647, 48
      %v3338 = vpop.permute.xlu0 %3337
      %3339 = vrot.lane.b32.xlu0 %v2648, 48
      %v3340 = vpop.permute.xlu0 %3339
      %3341 = vrot.lane.b32.xlu0 %v2649, 48
      %v3342 = vpop.permute.xlu0 %3341
      %3343 = vrot.lane.b32.xlu0 %v2650, 48
      %v3344 = vpop.permute.xlu0 %3343
      %3345 = vrot.lane.b32.xlu0 %v2651, 48
      %v3346 = vpop.permute.xlu0 %3345
      %3347 = vrot.lane.b32.xlu0 %v2652, 48
      %v3348 = vpop.permute.xlu0 %3347
      %3349 = vrot.lane.b32.xlu0 %v2653, 48
      %v3350 = vpop.permute.xlu0 %3349
      %3351 = vrot.lane.b32.xlu0 %v2654, 48
      %v3352 = vpop.permute.xlu0 %3351
      %3353 = vrot.lane.b32.xlu0 %v2655, 48
      %v3354 = vpop.permute.xlu0 %3353
      %3355 = vrot.lane.b32.xlu0 %v2656, 48
      %v3356 = vpop.permute.xlu0 %3355
      %3357 = vrot.lane.b32.xlu0 %v2657, 48
      %v3358 = vpop.permute.xlu0 %3357
      %3359 = vrot.lane.b32.xlu0 %v2658, 48
      %v3360 = vpop.permute.xlu0 %3359
      %3361 = vrot.lane.b32.xlu0 %v2659, 48
      %v3362 = vpop.permute.xlu0 %3361
      %3363 = vrot.lane.b32.xlu0 %v2660, 48
      %v3364 = vpop.permute.xlu0 %3363
      %3365 = vrot.lane.b32.xlu0 %v2661, 48
      %v3366 = vpop.permute.xlu0 %3365
      %3367 = vrot.lane.b32.xlu0 %v2662, 48
      %v3368 = vpop.permute.xlu0 %3367
      %3369 = vrot.lane.b32.xlu0 %v2663, 48
      %v3370 = vpop.permute.xlu0 %3369
      %3371 = vrot.lane.b32.xlu0 %v2664, 48
      %v3372 = vpop.permute.xlu0 %3371
      %3373 = vrot.lane.b32.xlu0 %v2665, 48
      %v3374 = vpop.permute.xlu0 %3373
      %3375 = vrot.lane.b32.xlu0 %v2666, 48
      %v3376 = vpop.permute.xlu0 %3375
      %3377 = vrot.lane.b32.xlu0 %v2667, 48
      %v3378 = vpop.permute.xlu0 %3377
      %3379 = vrot.lane.b32.xlu0 %v2668, 48
      %v3380 = vpop.permute.xlu0 %3379
      %3381 = vrot.lane.b32.xlu0 %v2669, 48
      %v3382 = vpop.permute.xlu0 %3381
      %3383 = vrot.lane.b32.xlu0 %v2670, 48
      %v3384 = vpop.permute.xlu0 %3383
      %3385 = vrot.lane.b32.xlu0 %v2735, 48
      %v3386 = vpop.permute.xlu0 %3385
      %3387 = vrot.lane.b32.xlu0 %v2736, 48
      %v3388 = vpop.permute.xlu0 %3387
      %3389 = vrot.lane.b32.xlu0 %v2741, 48
      %v3390 = vpop.permute.xlu0 %3389
      %3391 = vrot.lane.b32.xlu0 %v2742, 48
      %v3392 = vpop.permute.xlu0 %3391
      %3427 = vrot.lane.b32.xlu0 %v2675, 56
      %v3428 = vpop.permute.xlu0 %3427
      %3429 = vrot.lane.b32.xlu0 %v2676, 56
      %v3430 = vpop.permute.xlu0 %3429
      %3431 = vrot.lane.b32.xlu0 %v2677, 56
      %v3432 = vpop.permute.xlu0 %3431
      %3433 = vrot.lane.b32.xlu0 %v2678, 56
      %v3434 = vpop.permute.xlu0 %3433
      %3435 = vrot.lane.b32.xlu0 %v2679, 56
      %v3436 = vpop.permute.xlu0 %3435
      %3437 = vrot.lane.b32.xlu0 %v2680, 56
      %v3438 = vpop.permute.xlu0 %3437
      %3439 = vrot.lane.b32.xlu0 %v2681, 56
      %v3440 = vpop.permute.xlu0 %3439
      %3441 = vrot.lane.b32.xlu0 %v2682, 56
      %v3442 = vpop.permute.xlu0 %3441
      %3443 = vrot.lane.b32.xlu0 %v2683, 56
      %v3444 = vpop.permute.xlu0 %3443
      %3445 = vrot.lane.b32.xlu0 %v2684, 56
      %v3446 = vpop.permute.xlu0 %3445
      %3447 = vrot.lane.b32.xlu0 %v2685, 56
      %v3448 = vpop.permute.xlu0 %3447
      %3449 = vrot.lane.b32.xlu0 %v2686, 56
      %v3450 = vpop.permute.xlu0 %3449
      %3451 = vrot.lane.b32.xlu0 %v2687, 56
      %v3452 = vpop.permute.xlu0 %3451
      %3453 = vrot.lane.b32.xlu0 %v2688, 56
      %v3454 = vpop.permute.xlu0 %3453
      %3455 = vrot.lane.b32.xlu0 %v2689, 56
      %v3456 = vpop.permute.xlu0 %3455
      %3457 = vrot.lane.b32.xlu0 %v2690, 56
      %v3458 = vpop.permute.xlu0 %3457
      %3459 = vrot.lane.b32.xlu0 %v2691, 56
      %v3460 = vpop.permute.xlu0 %3459
      %3461 = vrot.lane.b32.xlu0 %v2692, 56
      %v3462 = vpop.permute.xlu0 %3461
      %3463 = vrot.lane.b32.xlu0 %v2693, 56
      %v3464 = vpop.permute.xlu0 %3463
      %3465 = vrot.lane.b32.xlu0 %v2694, 56
      %v3466 = vpop.permute.xlu0 %3465
      %3467 = vrot.lane.b32.xlu0 %v2695, 56
      %v3468 = vpop.permute.xlu0 %3467
      %3469 = vrot.lane.b32.xlu0 %v2696, 56
      %v3470 = vpop.permute.xlu0 %3469
      %3471 = vrot.lane.b32.xlu0 %v2697, 56
      %v3472 = vpop.permute.xlu0 %3471
      %3473 = vrot.lane.b32.xlu0 %v2698, 56
      %v3474 = vpop.permute.xlu0 %3473
      %3475 = vrot.lane.b32.xlu0 %v2699, 56
      %v3476 = vpop.permute.xlu0 %3475
      %3477 = vrot.lane.b32.xlu0 %v2700, 56
      %v3478 = vpop.permute.xlu0 %3477
      %3479 = vrot.lane.b32.xlu0 %v2701, 56
      %v3480 = vpop.permute.xlu0 %3479
      %3481 = vrot.lane.b32.xlu0 %v2702, 56
      %v3482 = vpop.permute.xlu0 %3481
      %3483 = vrot.lane.b32.xlu0 %v2737, 56
      %v3484 = vpop.permute.xlu0 %3483
      %3485 = vrot.lane.b32.xlu0 %v2738, 56
      %v3486 = vpop.permute.xlu0 %3485
      %3487 = vrot.lane.b32.xlu0 %v2743, 56
      %v3488 = vpop.permute.xlu0 %3487
      %3489 = vrot.lane.b32.xlu0 %v2744, 56
      %v3490 = vpop.permute.xlu0 %3489
      %3525 = vrot.lane.b32.xlu0 %v2707, 64
      %v3526 = vpop.permute.xlu0 %3525
      %3527 = vrot.lane.b32.xlu0 %v2708, 64
      %v3528 = vpop.permute.xlu0 %3527
      %3529 = vrot.lane.b32.xlu0 %v2709, 64
      %v3530 = vpop.permute.xlu0 %3529
      %3531 = vrot.lane.b32.xlu0 %v2710, 64
      %v3532 = vpop.permute.xlu0 %3531
      %3533 = vrot.lane.b32.xlu0 %v2711, 64
      %v3534 = vpop.permute.xlu0 %3533
      %3535 = vrot.lane.b32.xlu0 %v2712, 64
      %v3536 = vpop.permute.xlu0 %3535
      %3537 = vrot.lane.b32.xlu0 %v2713, 64
      %v3538 = vpop.permute.xlu0 %3537
      %3539 = vrot.lane.b32.xlu0 %v2714, 64
      %v3540 = vpop.permute.xlu0 %3539
      %3541 = vrot.lane.b32.xlu0 %v2715, 64
      %v3542 = vpop.permute.xlu0 %3541
      %3543 = vrot.lane.b32.xlu0 %v2716, 64
      %v3544 = vpop.permute.xlu0 %3543
      %3545 = vrot.lane.b32.xlu0 %v2717, 64
      %v3546 = vpop.permute.xlu0 %3545
      %3547 = vrot.lane.b32.xlu0 %v2718, 64
      %v3548 = vpop.permute.xlu0 %3547
      %3549 = vrot.lane.b32.xlu0 %v2719, 64
      %v3550 = vpop.permute.xlu0 %3549
      %3551 = vrot.lane.b32.xlu0 %v2720, 64
      %v3552 = vpop.permute.xlu0 %3551
      %3553 = vrot.lane.b32.xlu0 %v2721, 64
      %v3554 = vpop.permute.xlu0 %3553
      %3555 = vrot.lane.b32.xlu0 %v2722, 64
      %v3556 = vpop.permute.xlu0 %3555
      %3557 = vrot.lane.b32.xlu0 %v2723, 64
      %v3558 = vpop.permute.xlu0 %3557
      %3559 = vrot.lane.b32.xlu0 %v2724, 64
      %v3560 = vpop.permute.xlu0 %3559
      %3561 = vrot.lane.b32.xlu0 %v2725, 64
      %v3562 = vpop.permute.xlu0 %3561
      %3563 = vrot.lane.b32.xlu0 %v2726, 64
      %v3564 = vpop.permute.xlu0 %3563
      %3565 = vrot.lane.b32.xlu0 %v2727, 64
      %v3566 = vpop.permute.xlu0 %3565
      %3567 = vrot.lane.b32.xlu0 %v2728, 64
      %v3568 = vpop.permute.xlu0 %3567
      %3569 = vrot.lane.b32.xlu0 %v2729, 64
      %v3570 = vpop.permute.xlu0 %3569
      %3571 = vrot.lane.b32.xlu0 %v2730, 64
      %v3572 = vpop.permute.xlu0 %3571
      %3573 = vrot.lane.b32.xlu0 %v2731, 64
      %v3574 = vpop.permute.xlu0 %3573
      %3575 = vrot.lane.b32.xlu0 %v2732, 64
      %v3576 = vpop.permute.xlu0 %3575
      %3577 = vrot.lane.b32.xlu0 %v2733, 64
      %v3578 = vpop.permute.xlu0 %3577
      %3579 = vrot.lane.b32.xlu0 %v2734, 64
      %v3580 = vpop.permute.xlu0 %3579
      %3581 = vrot.lane.b32.xlu0 %v2739, 64
      %v3582 = vpop.permute.xlu0 %3581
      %3583 = vrot.lane.b32.xlu0 %v2740, 64
      %v3584 = vpop.permute.xlu0 %3583
      %3585 = vrot.lane.b32.xlu0 %v2745, 64
      %v3586 = vpop.permute.xlu0 %3585
      %3587 = vrot.lane.b32.xlu0 %v2746, 64
      %v3588 = vpop.permute.xlu0 %3587
      %v3621 = vsel %vm2606, %v2639, %v2780
      %v3622 = vsel %vm2606, %v2640, %v2782
      %v3623 = vsel %vm2606, %v2641, %v2784
      %v3624 = vsel %vm2606, %v2642, %v2786
      %v3625 = vsel %vm2606, %v2643, %v2788
      %v3626 = vsel %vm2606, %v2644, %v2790
      %v3627 = vsel %vm2606, %v2645, %v2792
      %v3628 = vsel %vm2606, %v2646, %v2794
      %v3629 = vsel %vm2606, %v2647, %v2796
      %v3630 = vsel %vm2606, %v2648, %v2798
      %v3631 = vsel %vm2606, %v2649, %v2800
      %v3632 = vsel %vm2606, %v2650, %v2802
      %v3633 = vsel %vm2606, %v2651, %v2804
      %v3634 = vsel %vm2606, %v2652, %v2806
      %v3635 = vsel %vm2606, %v2653, %v2808
      %v3636 = vsel %vm2606, %v2654, %v2810
      %v3637 = vsel %vm2606, %v2655, %v2812
      %v3638 = vsel %vm2606, %v2656, %v2814
      %v3639 = vsel %vm2606, %v2657, %v2816
      %v3640 = vsel %vm2606, %v2658, %v2818
      %v3641 = vsel %vm2606, %v2659, %v2820
      %v3642 = vsel %vm2606, %v2660, %v2822
      %v3643 = vsel %vm2606, %v2661, %v2824
      %v3644 = vsel %vm2606, %v2662, %v2826
      %v3645 = vsel %vm2606, %v2663, %v2828
      %v3646 = vsel %vm2606, %v2664, %v2830
      %v3647 = vsel %vm2606, %v2665, %v2832
      %v3648 = vsel %vm2606, %v2666, %v2834
      %v3649 = vsel %vm2606, %v2667, %v2836
      %v3650 = vsel %vm2606, %v2668, %v2838
      %v3651 = vsel %vm2606, %v2669, %v2840
      %v3652 = vsel %vm2606, %v2670, %v2842
      %vm3653 = vcmask 130048
      %v3654 = vsel %vm3653, %v3621, %v2908
      %v3655 = vsel %vm3653, %v3622, %v2910
      %v3656 = vsel %vm3653, %v3623, %v2912
      %v3657 = vsel %vm3653, %v3624, %v2914
      %v3658 = vsel %vm3653, %v3625, %v2916
      %v3659 = vsel %vm3653, %v3626, %v2918
      %v3660 = vsel %vm3653, %v3627, %v2920
      %v3661 = vsel %vm3653, %v3628, %v2922
      %v3662 = vsel %vm3653, %v3629, %v2924
      %v3663 = vsel %vm3653, %v3630, %v2926
      %v3664 = vsel %vm3653, %v3631, %v2928
      %v3665 = vsel %vm3653, %v3632, %v2930
      %v3666 = vsel %vm3653, %v3633, %v2932
      %v3667 = vsel %vm3653, %v3634, %v2934
      %v3668 = vsel %vm3653, %v3635, %v2936
      %v3669 = vsel %vm3653, %v3636, %v2938
      %v3670 = vsel %vm3653, %v3637, %v2940
      %v3671 = vsel %vm3653, %v3638, %v2942
      %v3672 = vsel %vm3653, %v3639, %v2944
      %v3673 = vsel %vm3653, %v3640, %v2946
      %v3674 = vsel %vm3653, %v3641, %v2948
      %v3675 = vsel %vm3653, %v3642, %v2950
      %v3676 = vsel %vm3653, %v3643, %v2952
      %v3677 = vsel %vm3653, %v3644, %v2954
      %v3678 = vsel %vm3653, %v3645, %v2956
      %v3679 = vsel %vm3653, %v3646, %v2958
      %v3680 = vsel %vm3653, %v3647, %v2960
      %v3681 = vsel %vm3653, %v3648, %v2962
      %v3682 = vsel %vm3653, %v3649, %v2964
      %v3683 = vsel %vm3653, %v3650, %v2966
      %v3684 = vsel %vm3653, %v3651, %v2968
      %v3685 = vsel %vm3653, %v3652, %v2970
      %vm3686 = vcmask 195584
      %v3687 = vsel %vm3686, %v3654, %v3036
      %v3688 = vsel %vm3686, %v3655, %v3038
      %v3689 = vsel %vm3686, %v3656, %v3040
      %v3690 = vsel %vm3686, %v3657, %v3042
      %v3691 = vsel %vm3686, %v3658, %v3044
      %v3692 = vsel %vm3686, %v3659, %v3046
      %v3693 = vsel %vm3686, %v3660, %v3048
      %v3694 = vsel %vm3686, %v3661, %v3050
      %v3695 = vsel %vm3686, %v3662, %v3052
      %v3696 = vsel %vm3686, %v3663, %v3054
      %v3697 = vsel %vm3686, %v3664, %v3056
      %v3698 = vsel %vm3686, %v3665, %v3058
      %v3699 = vsel %vm3686, %v3666, %v3060
      %v3700 = vsel %vm3686, %v3667, %v3062
      %v3701 = vsel %vm3686, %v3668, %v3064
      %v3702 = vsel %vm3686, %v3669, %v3066
      %v3703 = vsel %vm3686, %v3670, %v3068
      %v3704 = vsel %vm3686, %v3671, %v3070
      %v3705 = vsel %vm3686, %v3672, %v3072
      %v3706 = vsel %vm3686, %v3673, %v3074
      %v3707 = vsel %vm3686, %v3674, %v3076
      %v3708 = vsel %vm3686, %v3675, %v3078
      %v3709 = vsel %vm3686, %v3676, %v3080
      %v3710 = vsel %vm3686, %v3677, %v3082
      %v3711 = vsel %vm3686, %v3678, %v3084
      %v3712 = vsel %vm3686, %v3679, %v3086
      %v3713 = vsel %vm3686, %v3680, %v3088
      %v3714 = vsel %vm3686, %v3681, %v3090
      %v3715 = vsel %vm3686, %v3682, %v3092
      %v3716 = vsel %vm3686, %v3683, %v3094
      %v3717 = vsel %vm3686, %v3684, %v3096
      %v3718 = vsel %vm3686, %v3685, %v3098
      %v3719 = vsel %vm508, %v3687, %v3134
      %v3720 = vsel %vm508, %v3688, %v3136
      %v3721 = vsel %vm508, %v3689, %v3138
      %v3722 = vsel %vm508, %v3690, %v3140
      %v3723 = vsel %vm508, %v3691, %v3142
      %v3724 = vsel %vm508, %v3692, %v3144
      %v3725 = vsel %vm508, %v3693, %v3146
      %v3726 = vsel %vm508, %v3694, %v3148
      %v3727 = vsel %vm508, %v3695, %v3150
      %v3728 = vsel %vm508, %v3696, %v3152
      %v3729 = vsel %vm508, %v3697, %v3154
      %v3730 = vsel %vm508, %v3698, %v3156
      %v3731 = vsel %vm508, %v3699, %v3158
      %v3732 = vsel %vm508, %v3700, %v3160
      %v3733 = vsel %vm508, %v3701, %v3162
      %v3734 = vsel %vm508, %v3702, %v3164
      %v3735 = vsel %vm508, %v3703, %v3166
      %v3736 = vsel %vm508, %v3704, %v3168
      %v3737 = vsel %vm508, %v3705, %v3170
      %v3738 = vsel %vm508, %v3706, %v3172
      %v3739 = vsel %vm508, %v3707, %v3174
      %v3740 = vsel %vm508, %v3708, %v3176
      %v3741 = vsel %vm508, %v3709, %v3178
      %v3742 = vsel %vm508, %v3710, %v3180
      %v3743 = vsel %vm508, %v3711, %v3182
      %v3744 = vsel %vm508, %v3712, %v3184
      %v3745 = vsel %vm508, %v3713, %v3186
      %v3746 = vsel %vm508, %v3714, %v3188
      %v3747 = vsel %vm508, %v3715, %v3190
      %v3748 = vsel %vm508, %v3716, %v3192
      %v3749 = vsel %vm508, %v3717, %v3194
      %v3750 = vsel %vm508, %v3718, %v3196
      %vm3751 = vcmask 326656
      %v3752 = vsel %vm3751, %v3719, %v3232
      %v3753 = vsel %vm3751, %v3720, %v3234
      %v3754 = vsel %vm3751, %v3721, %v3236
      %v3755 = vsel %vm3751, %v3722, %v3238
      %v3756 = vsel %vm3751, %v3723, %v3240
      %v3757 = vsel %vm3751, %v3724, %v3242
      %v3758 = vsel %vm3751, %v3725, %v3244
      %v3759 = vsel %vm3751, %v3726, %v3246
      %v3760 = vsel %vm3751, %v3727, %v3248
      %v3761 = vsel %vm3751, %v3728, %v3250
      %v3762 = vsel %vm3751, %v3729, %v3252
      %v3763 = vsel %vm3751, %v3730, %v3254
      %v3764 = vsel %vm3751, %v3731, %v3256
      %v3765 = vsel %vm3751, %v3732, %v3258
      %v3766 = vsel %vm3751, %v3733, %v3260
      %v3767 = vsel %vm3751, %v3734, %v3262
      %v3768 = vsel %vm3751, %v3735, %v3264
      %v3769 = vsel %vm3751, %v3736, %v3266
      %v3770 = vsel %vm3751, %v3737, %v3268
      %v3771 = vsel %vm3751, %v3738, %v3270
      %v3772 = vsel %vm3751, %v3739, %v3272
      %v3773 = vsel %vm3751, %v3740, %v3274
      %v3774 = vsel %vm3751, %v3741, %v3276
      %v3775 = vsel %vm3751, %v3742, %v3278
      %v3776 = vsel %vm3751, %v3743, %v3280
      %v3777 = vsel %vm3751, %v3744, %v3282
      %v3778 = vsel %vm3751, %v3745, %v3284
      %v3779 = vsel %vm3751, %v3746, %v3286
      %v3780 = vsel %vm3751, %v3747, %v3288
      %v3781 = vsel %vm3751, %v3748, %v3290
      %v3782 = vsel %vm3751, %v3749, %v3292
      %v3783 = vsel %vm3751, %v3750, %v3294
      %vm3784 = vcmask 392192
      %v3785 = vsel %vm3784, %v3752, %v3330
      %v3786 = vsel %vm3784, %v3753, %v3332
      %v3787 = vsel %vm3784, %v3754, %v3334
      %v3788 = vsel %vm3784, %v3755, %v3336
      %v3789 = vsel %vm3784, %v3756, %v3338
      %v3790 = vsel %vm3784, %v3757, %v3340
      %v3791 = vsel %vm3784, %v3758, %v3342
      %v3792 = vsel %vm3784, %v3759, %v3344
      %v3793 = vsel %vm3784, %v3760, %v3346
      %v3794 = vsel %vm3784, %v3761, %v3348
      %v3795 = vsel %vm3784, %v3762, %v3350
      %v3796 = vsel %vm3784, %v3763, %v3352
      %v3797 = vsel %vm3784, %v3764, %v3354
      %v3798 = vsel %vm3784, %v3765, %v3356
      %v3799 = vsel %vm3784, %v3766, %v3358
      %v3800 = vsel %vm3784, %v3767, %v3360
      %v3801 = vsel %vm3784, %v3768, %v3362
      %v3802 = vsel %vm3784, %v3769, %v3364
      %v3803 = vsel %vm3784, %v3770, %v3366
      %v3804 = vsel %vm3784, %v3771, %v3368
      %v3805 = vsel %vm3784, %v3772, %v3370
      %v3806 = vsel %vm3784, %v3773, %v3372
      %v3807 = vsel %vm3784, %v3774, %v3374
      %v3808 = vsel %vm3784, %v3775, %v3376
      %v3809 = vsel %vm3784, %v3776, %v3378
      %v3810 = vsel %vm3784, %v3777, %v3380
      %v3811 = vsel %vm3784, %v3778, %v3382
      %v3812 = vsel %vm3784, %v3779, %v3384
      %v3813 = vsel %vm3784, %v3780, %v3386
      %v3814 = vsel %vm3784, %v3781, %v3388
      %v3815 = vsel %vm3784, %v3782, %v3390
      %v3816 = vsel %vm3784, %v3783, %v3392
      %vm3817 = vcmask 457728
      %v3818 = vsel %vm3817, %v3785, %v3428
      %v3819 = vsel %vm3817, %v3786, %v3430
      %v3820 = vsel %vm3817, %v3787, %v3432
      %v3821 = vsel %vm3817, %v3788, %v3434
      %v3822 = vsel %vm3817, %v3789, %v3436
      %v3823 = vsel %vm3817, %v3790, %v3438
      %v3824 = vsel %vm3817, %v3791, %v3440
      %v3825 = vsel %vm3817, %v3792, %v3442
      %v3826 = vsel %vm3817, %v3793, %v3444
      %v3827 = vsel %vm3817, %v3794, %v3446
      %v3828 = vsel %vm3817, %v3795, %v3448
      %v3829 = vsel %vm3817, %v3796, %v3450
      %v3830 = vsel %vm3817, %v3797, %v3452
      %v3831 = vsel %vm3817, %v3798, %v3454
      %v3832 = vsel %vm3817, %v3799, %v3456
      %v3833 = vsel %vm3817, %v3800, %v3458
      %v3834 = vsel %vm3817, %v3801, %v3460
      %v3835 = vsel %vm3817, %v3802, %v3462
      %v3836 = vsel %vm3817, %v3803, %v3464
      %v3837 = vsel %vm3817, %v3804, %v3466
      %v3838 = vsel %vm3817, %v3805, %v3468
      %v3839 = vsel %vm3817, %v3806, %v3470
      %v3840 = vsel %vm3817, %v3807, %v3472
      %v3841 = vsel %vm3817, %v3808, %v3474
      %v3842 = vsel %vm3817, %v3809, %v3476
      %v3843 = vsel %vm3817, %v3810, %v3478
      %v3844 = vsel %vm3817, %v3811, %v3480
      %v3845 = vsel %vm3817, %v3812, %v3482
      %v3846 = vsel %vm3817, %v3813, %v3484
      %v3847 = vsel %vm3817, %v3814, %v3486
      %v3848 = vsel %vm3817, %v3815, %v3488
      %v3849 = vsel %vm3817, %v3816, %v3490
      %v3850 = vsel %vm762, %v3818, %v3526
      %v3851 = vsel %vm762, %v3819, %v3528
      %v3852 = vsel %vm762, %v3820, %v3530
      %v3853 = vsel %vm762, %v3821, %v3532
      %v3854 = vsel %vm762, %v3822, %v3534
      %v3855 = vsel %vm762, %v3823, %v3536
      %v3856 = vsel %vm762, %v3824, %v3538
      %v3857 = vsel %vm762, %v3825, %v3540
      %v3858 = vsel %vm762, %v3826, %v3542
      %v3859 = vsel %vm762, %v3827, %v3544
      %v3860 = vsel %vm762, %v3828, %v3546
      %v3861 = vsel %vm762, %v3829, %v3548
      %v3862 = vsel %vm762, %v3830, %v3550
      %v3863 = vsel %vm762, %v3831, %v3552
      %v3864 = vsel %vm762, %v3832, %v3554
      %v3865 = vsel %vm762, %v3833, %v3556
      %v3866 = vsel %vm762, %v3834, %v3558
      %v3867 = vsel %vm762, %v3835, %v3560
      %v3868 = vsel %vm762, %v3836, %v3562
      %v3869 = vsel %vm762, %v3837, %v3564
      %v3870 = vsel %vm762, %v3838, %v3566
      %v3871 = vsel %vm762, %v3839, %v3568
      %v3872 = vsel %vm762, %v3840, %v3570
      %v3873 = vsel %vm762, %v3841, %v3572
      %v3874 = vsel %vm762, %v3842, %v3574
      %v3875 = vsel %vm762, %v3843, %v3576
      %v3876 = vsel %vm762, %v3844, %v3578
      %v3877 = vsel %vm762, %v3845, %v3580
      %v3878 = vsel %vm762, %v3846, %v3582
      %v3879 = vsel %vm762, %v3847, %v3584
      %v3880 = vsel %vm762, %v3848, %v3586
      %v3881 = vsel %vm762, %v3849, %v3588
      %v3882 = vld [vmem:[%s11] sm:$0xff]
      %v3883 = vld [vmem:[%s11 + $0x8] sm:$0xff]
      %v3884 = vld [vmem:[%s11 + $0x10] sm:$0xff]
      %v3885 = vld [vmem:[%s11 + $0x18] sm:$0xff]
      %v3886 = vld [vmem:[%s11 + $0x20] sm:$0xff]
      %v3887 = vld [vmem:[%s11 + $0x28] sm:$0xff]
      %v3888 = vld [vmem:[%s11 + $0x30] sm:$0xff]
      %v3889 = vld [vmem:[%s11 + $0x38] sm:$0xff]
      %v3890 = vld [vmem:[%s11 + $0x40] sm:$0xff]
      %v3891 = vld [vmem:[%s11 + $0x48] sm:$0xff]
      %v3892 = vld [vmem:[%s11 + $0x50] sm:$0xff]
      %v3893 = vld [vmem:[%s11 + $0x58] sm:$0xff]
      %v3894 = vld [vmem:[%s11 + $0x60] sm:$0xff]
      %v3895 = vld [vmem:[%s11 + $0x68] sm:$0xff]
      %v3896 = vld [vmem:[%s11 + $0x70] sm:$0xff]
      %v3897 = vld [vmem:[%s11 + $0x78] sm:$0xff]
      %v3898 = vld [vmem:[%s11 + $0x80] sm:$0xff]
      %v3899 = vld [vmem:[%s11 + $0x88] sm:$0xff]
      %v3900 = vld [vmem:[%s11 + $0x90] sm:$0xff]
      %v3901 = vld [vmem:[%s11 + $0x98] sm:$0xff]
      %v3902 = vld [vmem:[%s11 + $0xa0] sm:$0xff]
      %v3903 = vld [vmem:[%s11 + $0xa8] sm:$0xff]
      %v3904 = vld [vmem:[%s11 + $0xb0] sm:$0xff]
      %v3905 = vld [vmem:[%s11 + $0xb8] sm:$0xff]
      %v3906 = vld [vmem:[%s11 + $0xc0] sm:$0xff]
      %v3907 = vld [vmem:[%s11 + $0xc8] sm:$0xff]
      %v3908 = vld [vmem:[%s11 + $0xd0] sm:$0xff]
      %v3909 = vld [vmem:[%s11 + $0xd8] sm:$0xff]
      %v3910 = vld [vmem:[%s11 + $0xe0] sm:$0xff]
      %v3911 = vld [vmem:[%s11 + $0xe8] sm:$0xff]
      %v3912 = vld [vmem:[%s11 + $0xf0] sm:$0xff]
      %v3913 = vld [vmem:[%s11 + $0xf8] sm:$0xff]
      %vm3914 = vcmp.gt.f32.partialorder %v3882, 0.5
      %vm3915 = vcmp.gt.f32.partialorder %v3883, 0.5
      %vm3916 = vcmp.gt.f32.partialorder %v3884, 0.5
      %vm3917 = vcmp.gt.f32.partialorder %v3885, 0.5
      %vm3918 = vcmp.gt.f32.partialorder %v3886, 0.5
      %vm3919 = vcmp.gt.f32.partialorder %v3887, 0.5
      %vm3920 = vcmp.gt.f32.partialorder %v3888, 0.5
      %vm3921 = vcmp.gt.f32.partialorder %v3889, 0.5
      %vm3922 = vcmp.gt.f32.partialorder %v3890, 0.5
      %vm3923 = vcmp.gt.f32.partialorder %v3891, 0.5
      %vm3924 = vcmp.gt.f32.partialorder %v3892, 0.5
      %vm3925 = vcmp.gt.f32.partialorder %v3893, 0.5
      %vm3926 = vcmp.gt.f32.partialorder %v3894, 0.5
      %vm3927 = vcmp.gt.f32.partialorder %v3895, 0.5
      %vm3928 = vcmp.gt.f32.partialorder %v3896, 0.5
      %vm3929 = vcmp.gt.f32.partialorder %v3897, 0.5
      %vm3930 = vcmp.gt.f32.partialorder %v3898, 0.5
      %vm3931 = vcmp.gt.f32.partialorder %v3899, 0.5
      %vm3932 = vcmp.gt.f32.partialorder %v3900, 0.5
      %vm3933 = vcmp.gt.f32.partialorder %v3901, 0.5
      %vm3934 = vcmp.gt.f32.partialorder %v3902, 0.5
      %vm3935 = vcmp.gt.f32.partialorder %v3903, 0.5
      %vm3936 = vcmp.gt.f32.partialorder %v3904, 0.5
      %vm3937 = vcmp.gt.f32.partialorder %v3905, 0.5
      %vm3938 = vcmp.gt.f32.partialorder %v3906, 0.5
      %vm3939 = vcmp.gt.f32.partialorder %v3907, 0.5
      %vm3940 = vcmp.gt.f32.partialorder %v3908, 0.5
      %vm3941 = vcmp.gt.f32.partialorder %v3909, 0.5
      %vm3942 = vcmp.gt.f32.partialorder %v3910, 0.5
      %vm3943 = vcmp.gt.f32.partialorder %v3911, 0.5
      %vm3944 = vcmp.gt.f32.partialorder %v3912, 0.5
      %vm3945 = vcmp.gt.f32.partialorder %v3913, 0.5
      %v3946 = vsel %vm3914, %v3850, 0.0
      %v3947 = vsel %vm3915, %v3851, 0.0
      %v3948 = vsel %vm3916, %v3852, 0.0
      %v3949 = vsel %vm3917, %v3853, 0.0
      %v3950 = vsel %vm3918, %v3854, 0.0
      %v3951 = vsel %vm3919, %v3855, 0.0
      %v3952 = vsel %vm3920, %v3856, 0.0
      %v3953 = vsel %vm3921, %v3857, 0.0
      %v3954 = vsel %vm3922, %v3858, 0.0
      %v3955 = vsel %vm3923, %v3859, 0.0
      %v3956 = vsel %vm3924, %v3860, 0.0
      %v3957 = vsel %vm3925, %v3861, 0.0
      %v3958 = vsel %vm3926, %v3862, 0.0
      %v3959 = vsel %vm3927, %v3863, 0.0
      %v3960 = vsel %vm3928, %v3864, 0.0
      %v3961 = vsel %vm3929, %v3865, 0.0
      %v3962 = vsel %vm3930, %v3866, 0.0
      %v3963 = vsel %vm3931, %v3867, 0.0
      %v3964 = vsel %vm3932, %v3868, 0.0
      %v3965 = vsel %vm3933, %v3869, 0.0
      %v3966 = vsel %vm3934, %v3870, 0.0
      %v3967 = vsel %vm3935, %v3871, 0.0
      %v3968 = vsel %vm3936, %v3872, 0.0
      %v3969 = vsel %vm3937, %v3873, 0.0
      %v3970 = vsel %vm3938, %v3874, 0.0
      %v3971 = vsel %vm3939, %v3875, 0.0
      %v3972 = vsel %vm3940, %v3876, 0.0
      %v3973 = vsel %vm3941, %v3877, 0.0
      %v3974 = vsel %vm3942, %v3878, 0.0
      %v3975 = vsel %vm3943, %v3879, 0.0
      %v3976 = vsel %vm3944, %v3880, 0.0
      %v3977 = vsel %vm3945, %v3881, 0.0
      %vm3978 = vcmask 588800
      %v3980 = vsel %vm3978, %v3946, 0
      %v3983 = vsel %vm3978, %v3947, 0
      %v3986 = vsel %vm3978, %v3948, 0
      %v3989 = vsel %vm3978, %v3949, 0
      %v3992 = vsel %vm3978, %v3950, 0
      %v3995 = vsel %vm3978, %v3951, 0
      %v3998 = vsel %vm3978, %v3952, 0
      %v4001 = vsel %vm3978, %v3953, 0
      %v4004 = vsel %vm3978, %v3954, 0
      %v4007 = vsel %vm3978, %v3955, 0
      %v4010 = vsel %vm3978, %v3956, 0
      %v4013 = vsel %vm3978, %v3957, 0
      %v4016 = vsel %vm3978, %v3958, 0
      %v4019 = vsel %vm3978, %v3959, 0
      %v4022 = vsel %vm3978, %v3960, 0
      %v4025 = vsel %vm3978, %v3961, 0
      %v4028 = vsel %vm3978, %v3962, 0
      %v4031 = vsel %vm3978, %v3963, 0
      %v4034 = vsel %vm3978, %v3964, 0
      %v4037 = vsel %vm3978, %v3965, 0
      %v4040 = vsel %vm3978, %v3966, 0
      %v4043 = vsel %vm3978, %v3967, 0
      %v4046 = vsel %vm3978, %v3968, 0
      %v4049 = vsel %vm3978, %v3969, 0
      %v4052 = vsel %vm3978, %v3970, 0
      %v4055 = vsel %vm3978, %v3971, 0
      %v4058 = vsel %vm3978, %v3972, 0
      %v4061 = vsel %vm3978, %v3973, 0
      %v4064 = vsel %vm3978, %v3974, 0
      %v4067 = vsel %vm3978, %v3975, 0
      %v4070 = vsel %vm3978, %v3976, 0
      %v4073 = vsel %vm3978, %v3977, 0
      %v4076 = vsel %vm3978, %v1811, 0
      %4078 = vmatpush.xpose.msra.mxu0 0.0
      %4079 = vmatpush.xpose.msra.mxu0 0.0
      %4080 = vmatpush.xpose.msra.mxu0 0.0
      %4081 = vmatpush.xpose.msra.mxu0 0.0
      %4082 = vmatpush.xpose.msra.mxu0 0.0
      %4083 = vmatpush.xpose.msra.mxu0 0.0
      %4084 = vmatpush.xpose.msra.mxu0 0.0
      %4085 = vmatpush.xpose.msra.mxu0 0.0
      %4086 = vmatpush.xpose.msra.mxu0 0.0
      %4087 = vmatpush.xpose.msra.mxu0 0.0
      %4088 = vmatpush.xpose.msra.mxu0 0.0
      %4089 = vmatpush.xpose.msra.mxu0 0.0
      %4090 = vmatpush.xpose.msra.mxu0 0.0
      %4091 = vmatpush.xpose.msra.mxu0 0.0
      %4092 = vmatpush.xpose.msra.mxu0 0.0
      %4093 = vmatpush.xpose.msra.mxu0 %v4076
      %4094 = vmatmul.f32.gmra.mxu0 %v3980
      %v4095 = vpop.f32.mrf.mxu0
      %v4096 = vadd.f32 0.0, %v4095
      %4097 = vmatmul.f32.gmra.mxu0 %v3983
      %v4098 = vpop.f32.mrf.mxu0
      %v4099 = vadd.f32 0.0, %v4098
      %4100 = vmatmul.f32.gmra.mxu0 %v3986
      %v4101 = vpop.f32.mrf.mxu0
      %v4102 = vadd.f32 0.0, %v4101
      %4103 = vmatmul.f32.gmra.mxu0 %v3989
      %v4104 = vpop.f32.mrf.mxu0
      %v4105 = vadd.f32 0.0, %v4104
      %4106 = vmatmul.f32.gmra.mxu0 %v3992
      %v4107 = vpop.f32.mrf.mxu0
      %v4108 = vadd.f32 0.0, %v4107
      %4109 = vmatmul.f32.gmra.mxu0 %v3995
      %v4110 = vpop.f32.mrf.mxu0
      %v4111 = vadd.f32 0.0, %v4110
      %4112 = vmatmul.f32.gmra.mxu0 %v3998
      %v4113 = vpop.f32.mrf.mxu0
      %v4114 = vadd.f32 0.0, %v4113
      %4115 = vmatmul.f32.gmra.mxu0 %v4001
      %v4116 = vpop.f32.mrf.mxu0
      %v4117 = vadd.f32 0.0, %v4116
      %4118 = vmatmul.f32.gmra.mxu0 %v4004
      %v4119 = vpop.f32.mrf.mxu0
      %v4120 = vadd.f32 0.0, %v4119
      %4121 = vmatmul.f32.gmra.mxu0 %v4007
      %v4122 = vpop.f32.mrf.mxu0
      %v4123 = vadd.f32 0.0, %v4122
      %4124 = vmatmul.f32.gmra.mxu0 %v4010
      %v4125 = vpop.f32.mrf.mxu0
      %v4126 = vadd.f32 0.0, %v4125
      %4127 = vmatmul.f32.gmra.mxu0 %v4013
      %v4128 = vpop.f32.mrf.mxu0
      %v4129 = vadd.f32 0.0, %v4128
      %4130 = vmatmul.f32.gmra.mxu0 %v4016
      %v4131 = vpop.f32.mrf.mxu0
      %v4132 = vadd.f32 0.0, %v4131
      %4133 = vmatmul.f32.gmra.mxu0 %v4019
      %v4134 = vpop.f32.mrf.mxu0
      %v4135 = vadd.f32 0.0, %v4134
      %4136 = vmatmul.f32.gmra.mxu0 %v4022
      %v4137 = vpop.f32.mrf.mxu0
      %v4138 = vadd.f32 0.0, %v4137
      %4139 = vmatmul.f32.gmra.mxu0 %v4025
      %v4140 = vpop.f32.mrf.mxu0
      %v4141 = vadd.f32 0.0, %v4140
      %4142 = vmatmul.f32.gmra.mxu0 %v4028
      %v4143 = vpop.f32.mrf.mxu0
      %v4144 = vadd.f32 0.0, %v4143
      %4145 = vmatmul.f32.gmra.mxu0 %v4031
      %v4146 = vpop.f32.mrf.mxu0
      %v4147 = vadd.f32 0.0, %v4146
      %4148 = vmatmul.f32.gmra.mxu0 %v4034
      %v4149 = vpop.f32.mrf.mxu0
      %v4150 = vadd.f32 0.0, %v4149
      %4151 = vmatmul.f32.gmra.mxu0 %v4037
      %v4152 = vpop.f32.mrf.mxu0
      %v4153 = vadd.f32 0.0, %v4152
      %4154 = vmatmul.f32.gmra.mxu0 %v4040
      %v4155 = vpop.f32.mrf.mxu0
      %v4156 = vadd.f32 0.0, %v4155
      %4157 = vmatmul.f32.gmra.mxu0 %v4043
      %v4158 = vpop.f32.mrf.mxu0
      %v4159 = vadd.f32 0.0, %v4158
      %4160 = vmatmul.f32.gmra.mxu0 %v4046
      %v4161 = vpop.f32.mrf.mxu0
      %v4162 = vadd.f32 0.0, %v4161
      %4163 = vmatmul.f32.gmra.mxu0 %v4049
      %v4164 = vpop.f32.mrf.mxu0
      %v4165 = vadd.f32 0.0, %v4164
      %4166 = vmatmul.f32.gmra.mxu0 %v4052
      %v4167 = vpop.f32.mrf.mxu0
      %v4168 = vadd.f32 0.0, %v4167
      %4169 = vmatmul.f32.gmra.mxu0 %v4055
      %v4170 = vpop.f32.mrf.mxu0
      %v4171 = vadd.f32 0.0, %v4170
      %4172 = vmatmul.f32.gmra.mxu0 %v4058
      %v4173 = vpop.f32.mrf.mxu0
      %v4174 = vadd.f32 0.0, %v4173
      %4175 = vmatmul.f32.gmra.mxu0 %v4061
      %v4176 = vpop.f32.mrf.mxu0
      %v4177 = vadd.f32 0.0, %v4176
      %4178 = vmatmul.f32.gmra.mxu0 %v4064
      %v4179 = vpop.f32.mrf.mxu0
      %v4180 = vadd.f32 0.0, %v4179
      %4181 = vmatmul.f32.gmra.mxu0 %v4067
      %v4182 = vpop.f32.mrf.mxu0
      %v4183 = vadd.f32 0.0, %v4182
      %4184 = vmatmul.f32.gmra.mxu0 %v4070
      %v4185 = vpop.f32.mrf.mxu0
      %v4186 = vadd.f32 0.0, %v4185
      %4187 = vmatmul.f32.gmra.mxu0 %v4073
      %v4188 = vpop.f32.mrf.mxu0
      %v4189 = vadd.f32 0.0, %v4188
      %4190 = vdwg.mxu0
      %v4191 = vmul.f32 %v4096, 1.702
      %v4192 = vmul.f32 %v4099, 1.702
      %v4193 = vmul.f32 %v4102, 1.702
      %v4194 = vmul.f32 %v4105, 1.702
      %v4195 = vmul.f32 %v4108, 1.702
      %v4196 = vmul.f32 %v4111, 1.702
      %v4197 = vmul.f32 %v4114, 1.702
      %v4198 = vmul.f32 %v4117, 1.702
      %v4199 = vmul.f32 %v4120, 1.702
      %v4200 = vmul.f32 %v4123, 1.702
      %v4201 = vmul.f32 %v4126, 1.702
      %v4202 = vmul.f32 %v4129, 1.702
      %v4203 = vmul.f32 %v4132, 1.702
      %v4204 = vmul.f32 %v4135, 1.702
      %v4205 = vmul.f32 %v4138, 1.702
      %v4206 = vmul.f32 %v4141, 1.702
      %v4207 = vmul.f32 %v4144, 1.702
      %v4208 = vmul.f32 %v4147, 1.702
      %v4209 = vmul.f32 %v4150, 1.702
      %v4210 = vmul.f32 %v4153, 1.702
      %v4211 = vmul.f32 %v4156, 1.702
      %v4212 = vmul.f32 %v4159, 1.702
      %v4213 = vmul.f32 %v4162, 1.702
      %v4214 = vmul.f32 %v4165, 1.702
      %v4215 = vmul.f32 %v4168, 1.702
      %v4216 = vmul.f32 %v4171, 1.702
      %v4217 = vmul.f32 %v4174, 1.702
      %v4218 = vmul.f32 %v4177, 1.702
      %v4219 = vmul.f32 %v4180, 1.702
      %v4220 = vmul.f32 %v4183, 1.702
      %v4221 = vmul.f32 %v4186, 1.702
      %v4222 = vmul.f32 %v4189, 1.702
      %v4223 = vxor.u32 %v4191, 2147483648
      %v4224 = vxor.u32 %v4192, 2147483648
      %v4225 = vxor.u32 %v4193, 2147483648
      %v4226 = vxor.u32 %v4194, 2147483648
      %v4227 = vxor.u32 %v4195, 2147483648
      %v4228 = vxor.u32 %v4196, 2147483648
      %v4229 = vxor.u32 %v4197, 2147483648
      %v4230 = vxor.u32 %v4198, 2147483648
      %v4231 = vxor.u32 %v4199, 2147483648
      %v4232 = vxor.u32 %v4200, 2147483648
      %v4233 = vxor.u32 %v4201, 2147483648
      %v4234 = vxor.u32 %v4202, 2147483648
      %v4235 = vxor.u32 %v4203, 2147483648
      %v4236 = vxor.u32 %v4204, 2147483648
      %v4237 = vxor.u32 %v4205, 2147483648
      %v4238 = vxor.u32 %v4206, 2147483648
      %v4239 = vxor.u32 %v4207, 2147483648
      %v4240 = vxor.u32 %v4208, 2147483648
      %v4241 = vxor.u32 %v4209, 2147483648
      %v4242 = vxor.u32 %v4210, 2147483648
      %v4243 = vxor.u32 %v4211, 2147483648
      %v4244 = vxor.u32 %v4212, 2147483648
      %v4245 = vxor.u32 %v4213, 2147483648
      %v4246 = vxor.u32 %v4214, 2147483648
      %v4247 = vxor.u32 %v4215, 2147483648
      %v4248 = vxor.u32 %v4216, 2147483648
      %v4249 = vxor.u32 %v4217, 2147483648
      %v4250 = vxor.u32 %v4218, 2147483648
      %v4251 = vxor.u32 %v4219, 2147483648
      %v4252 = vxor.u32 %v4220, 2147483648
      %v4253 = vxor.u32 %v4221, 2147483648
      %v4254 = vxor.u32 %v4222, 2147483648
      %v4255 = vmul.f32 %v4223, 1.442695
      %v4256 = vpow.pop %v4255
      %v4257 = vmul.f32 %v4224, 1.442695
      %v4258 = vpow.pop %v4257
      %v4259 = vmul.f32 %v4225, 1.442695
      %v4260 = vpow.pop %v4259
      %v4261 = vmul.f32 %v4226, 1.442695
      %v4262 = vpow.pop %v4261
      %v4263 = vmul.f32 %v4227, 1.442695
      %v4264 = vpow.pop %v4263
      %v4265 = vmul.f32 %v4228, 1.442695
      %v4266 = vpow.pop %v4265
      %v4267 = vmul.f32 %v4229, 1.442695
      %v4268 = vpow.pop %v4267
      %v4269 = vmul.f32 %v4230, 1.442695
      %v4270 = vpow.pop %v4269
      %v4271 = vmul.f32 %v4231, 1.442695
      %v4272 = vpow.pop %v4271
      %v4273 = vmul.f32 %v4232, 1.442695
      %v4274 = vpow.pop %v4273
      %v4275 = vmul.f32 %v4233, 1.442695
      %v4276 = vpow.pop %v4275
      %v4277 = vmul.f32 %v4234, 1.442695
      %v4278 = vpow.pop %v4277
      %v4279 = vmul.f32 %v4235, 1.442695
      %v4280 = vpow.pop %v4279
      %v4281 = vmul.f32 %v4236, 1.442695
      %v4282 = vpow.pop %v4281
      %v4283 = vmul.f32 %v4237, 1.442695
      %v4284 = vpow.pop %v4283
      %v4285 = vmul.f32 %v4238, 1.442695
      %v4286 = vpow.pop %v4285
      %v4287 = vmul.f32 %v4239, 1.442695
      %v4288 = vpow.pop %v4287
      %v4289 = vmul.f32 %v4240, 1.442695
      %v4290 = vpow.pop %v4289
      %v4291 = vmul.f32 %v4241, 1.442695
      %v4292 = vpow.pop %v4291
      %v4293 = vmul.f32 %v4242, 1.442695
      %v4294 = vpow.pop %v4293
      %v4295 = vmul.f32 %v4243, 1.442695
      %v4296 = vpow.pop %v4295
      %v4297 = vmul.f32 %v4244, 1.442695
      %v4298 = vpow.pop %v4297
      %v4299 = vmul.f32 %v4245, 1.442695
      %v4300 = vpow.pop %v4299
      %v4301 = vmul.f32 %v4246, 1.442695
      %v4302 = vpow.pop %v4301
      %v4303 = vmul.f32 %v4247, 1.442695
      %v4304 = vpow.pop %v4303
      %v4305 = vmul.f32 %v4248, 1.442695
      %v4306 = vpow.pop %v4305
      %v4307 = vmul.f32 %v4249, 1.442695
      %v4308 = vpow.pop %v4307
      %v4309 = vmul.f32 %v4250, 1.442695
      %v4310 = vpow.pop %v4309
      %v4311 = vmul.f32 %v4251, 1.442695
      %v4312 = vpow.pop %v4311
      %v4313 = vmul.f32 %v4252, 1.442695
      %v4314 = vpow.pop %v4313
      %v4315 = vmul.f32 %v4253, 1.442695
      %v4316 = vpow.pop %v4315
      %v4317 = vmul.f32 %v4254, 1.442695
      %v4318 = vpow.pop %v4317
      %v4319 = vadd.f32 %v4256, 1.0
      %v4320 = vadd.f32 %v4258, 1.0
      %v4321 = vadd.f32 %v4260, 1.0
      %v4322 = vadd.f32 %v4262, 1.0
      %v4323 = vadd.f32 %v4264, 1.0
      %v4324 = vadd.f32 %v4266, 1.0
      %v4325 = vadd.f32 %v4268, 1.0
      %v4326 = vadd.f32 %v4270, 1.0
      %v4327 = vadd.f32 %v4272, 1.0
      %v4328 = vadd.f32 %v4274, 1.0
      %v4329 = vadd.f32 %v4276, 1.0
      %v4330 = vadd.f32 %v4278, 1.0
      %v4331 = vadd.f32 %v4280, 1.0
      %v4332 = vadd.f32 %v4282, 1.0
      %v4333 = vadd.f32 %v4284, 1.0
      %v4334 = vadd.f32 %v4286, 1.0
      %v4335 = vadd.f32 %v4288, 1.0
      %v4336 = vadd.f32 %v4290, 1.0
      %v4337 = vadd.f32 %v4292, 1.0
      %v4338 = vadd.f32 %v4294, 1.0
      %v4339 = vadd.f32 %v4296, 1.0
      %v4340 = vadd.f32 %v4298, 1.0
      %v4341 = vadd.f32 %v4300, 1.0
      %v4342 = vadd.f32 %v4302, 1.0
      %v4343 = vadd.f32 %v4304, 1.0
      %v4344 = vadd.f32 %v4306, 1.0
      %v4345 = vadd.f32 %v4308, 1.0
      %v4346 = vadd.f32 %v4310, 1.0
      %v4347 = vadd.f32 %v4312, 1.0
      %v4348 = vadd.f32 %v4314, 1.0
      %v4349 = vadd.f32 %v4316, 1.0
      %v4350 = vadd.f32 %v4318, 1.0
      %v4351 = vrcp.pop %v4319
      %v4352 = vmul.f32 %v4319, %v4351
      %v4353 = vsub.f32 1.0, %v4352
      %v4354 = vmul.f32 %v4351, %v4353
      %v4355 = vadd.f32 %v4351, %v4354
      %vm4356 = vweird.f32 %v4319
      %vm4357 = vweird.f32 %v4351
      %vm4358 = vmor %vm4356, %vm4357
      %v4359 = vsel %vm4358, %v4351, %v4355
      %v4360 = vand.u32 2147483647, %v4319
      %vm4361 = vcmp.eq.f32.partialorder %v4360, 8.507059e+37
      %v4362 = vand.u32 %v4319, 2147483648
      %v4363 = vor.u32 1.1754944e-38, %v4362
      %v4364 = vsel %vm4361, %v4363, %v4359
      %v4365 = vmul.f32 1.0, %v4364
      %v4366 = vrcp.pop %v4320
      %v4367 = vmul.f32 %v4320, %v4366
      %v4368 = vsub.f32 1.0, %v4367
      %v4369 = vmul.f32 %v4366, %v4368
      %v4370 = vadd.f32 %v4366, %v4369
      %vm4371 = vweird.f32 %v4320
      %vm4372 = vweird.f32 %v4366
      %vm4373 = vmor %vm4371, %vm4372
      %v4374 = vsel %vm4373, %v4366, %v4370
      %v4375 = vand.u32 2147483647, %v4320
      %vm4376 = vcmp.eq.f32.partialorder %v4375, 8.507059e+37
      %v4377 = vand.u32 %v4320, 2147483648
      %v4378 = vor.u32 1.1754944e-38, %v4377
      %v4379 = vsel %vm4376, %v4378, %v4374
      %v4380 = vmul.f32 1.0, %v4379
      %v4381 = vrcp.pop %v4321
      %v4382 = vmul.f32 %v4321, %v4381
      %v4383 = vsub.f32 1.0, %v4382
      %v4384 = vmul.f32 %v4381, %v4383
      %v4385 = vadd.f32 %v4381, %v4384
      %vm4386 = vweird.f32 %v4321
      %vm4387 = vweird.f32 %v4381
      %vm4388 = vmor %vm4386, %vm4387
      %v4389 = vsel %vm4388, %v4381, %v4385
      %v4390 = vand.u32 2147483647, %v4321
      %vm4391 = vcmp.eq.f32.partialorder %v4390, 8.507059e+37
      %v4392 = vand.u32 %v4321, 2147483648
      %v4393 = vor.u32 1.1754944e-38, %v4392
      %v4394 = vsel %vm4391, %v4393, %v4389
      %v4395 = vmul.f32 1.0, %v4394
      %v4396 = vrcp.pop %v4322
      %v4397 = vmul.f32 %v4322, %v4396
      %v4398 = vsub.f32 1.0, %v4397
      %v4399 = vmul.f32 %v4396, %v4398
      %v4400 = vadd.f32 %v4396, %v4399
      %vm4401 = vweird.f32 %v4322
      %vm4402 = vweird.f32 %v4396
      %vm4403 = vmor %vm4401, %vm4402
      %v4404 = vsel %vm4403, %v4396, %v4400
      %v4405 = vand.u32 2147483647, %v4322
      %vm4406 = vcmp.eq.f32.partialorder %v4405, 8.507059e+37
      %v4407 = vand.u32 %v4322, 2147483648
      %v4408 = vor.u32 1.1754944e-38, %v4407
      %v4409 = vsel %vm4406, %v4408, %v4404
      %v4410 = vmul.f32 1.0, %v4409
      %v4411 = vrcp.pop %v4323
      %v4412 = vmul.f32 %v4323, %v4411
      %v4413 = vsub.f32 1.0, %v4412
      %v4414 = vmul.f32 %v4411, %v4413
      %v4415 = vadd.f32 %v4411, %v4414
      %vm4416 = vweird.f32 %v4323
      %vm4417 = vweird.f32 %v4411
      %vm4418 = vmor %vm4416, %vm4417
      %v4419 = vsel %vm4418, %v4411, %v4415
      %v4420 = vand.u32 2147483647, %v4323
      %vm4421 = vcmp.eq.f32.partialorder %v4420, 8.507059e+37
      %v4422 = vand.u32 %v4323, 2147483648
      %v4423 = vor.u32 1.1754944e-38, %v4422
      %v4424 = vsel %vm4421, %v4423, %v4419
      %v4425 = vmul.f32 1.0, %v4424
      %v4426 = vrcp.pop %v4324
      %v4427 = vmul.f32 %v4324, %v4426
      %v4428 = vsub.f32 1.0, %v4427
      %v4429 = vmul.f32 %v4426, %v4428
      %v4430 = vadd.f32 %v4426, %v4429
      %vm4431 = vweird.f32 %v4324
      %vm4432 = vweird.f32 %v4426
      %vm4433 = vmor %vm4431, %vm4432
      %v4434 = vsel %vm4433, %v4426, %v4430
      %v4435 = vand.u32 2147483647, %v4324
      %vm4436 = vcmp.eq.f32.partialorder %v4435, 8.507059e+37
      %v4437 = vand.u32 %v4324, 2147483648
      %v4438 = vor.u32 1.1754944e-38, %v4437
      %v4439 = vsel %vm4436, %v4438, %v4434
      %v4440 = vmul.f32 1.0, %v4439
      %v4441 = vrcp.pop %v4325
      %v4442 = vmul.f32 %v4325, %v4441
      %v4443 = vsub.f32 1.0, %v4442
      %v4444 = vmul.f32 %v4441, %v4443
      %v4445 = vadd.f32 %v4441, %v4444
      %vm4446 = vweird.f32 %v4325
      %vm4447 = vweird.f32 %v4441
      %vm4448 = vmor %vm4446, %vm4447
      %v4449 = vsel %vm4448, %v4441, %v4445
      %v4450 = vand.u32 2147483647, %v4325
      %vm4451 = vcmp.eq.f32.partialorder %v4450, 8.507059e+37
      %v4452 = vand.u32 %v4325, 2147483648
      %v4453 = vor.u32 1.1754944e-38, %v4452
      %v4454 = vsel %vm4451, %v4453, %v4449
      %v4455 = vmul.f32 1.0, %v4454
      %v4456 = vrcp.pop %v4326
      %v4457 = vmul.f32 %v4326, %v4456
      %v4458 = vsub.f32 1.0, %v4457
      %v4459 = vmul.f32 %v4456, %v4458
      %v4460 = vadd.f32 %v4456, %v4459
      %vm4461 = vweird.f32 %v4326
      %vm4462 = vweird.f32 %v4456
      %vm4463 = vmor %vm4461, %vm4462
      %v4464 = vsel %vm4463, %v4456, %v4460
      %v4465 = vand.u32 2147483647, %v4326
      %vm4466 = vcmp.eq.f32.partialorder %v4465, 8.507059e+37
      %v4467 = vand.u32 %v4326, 2147483648
      %v4468 = vor.u32 1.1754944e-38, %v4467
      %v4469 = vsel %vm4466, %v4468, %v4464
      %v4470 = vmul.f32 1.0, %v4469
      %v4471 = vrcp.pop %v4327
      %v4472 = vmul.f32 %v4327, %v4471
      %v4473 = vsub.f32 1.0, %v4472
      %v4474 = vmul.f32 %v4471, %v4473
      %v4475 = vadd.f32 %v4471, %v4474
      %vm4476 = vweird.f32 %v4327
      %vm4477 = vweird.f32 %v4471
      %vm4478 = vmor %vm4476, %vm4477
      %v4479 = vsel %vm4478, %v4471, %v4475
      %v4480 = vand.u32 2147483647, %v4327
      %vm4481 = vcmp.eq.f32.partialorder %v4480, 8.507059e+37
      %v4482 = vand.u32 %v4327, 2147483648
      %v4483 = vor.u32 1.1754944e-38, %v4482
      %v4484 = vsel %vm4481, %v4483, %v4479
      %v4485 = vmul.f32 1.0, %v4484
      %v4486 = vrcp.pop %v4328
      %v4487 = vmul.f32 %v4328, %v4486
      %v4488 = vsub.f32 1.0, %v4487
      %v4489 = vmul.f32 %v4486, %v4488
      %v4490 = vadd.f32 %v4486, %v4489
      %vm4491 = vweird.f32 %v4328
      %vm4492 = vweird.f32 %v4486
      %vm4493 = vmor %vm4491, %vm4492
      %v4494 = vsel %vm4493, %v4486, %v4490
      %v4495 = vand.u32 2147483647, %v4328
      %vm4496 = vcmp.eq.f32.partialorder %v4495, 8.507059e+37
      %v4497 = vand.u32 %v4328, 2147483648
      %v4498 = vor.u32 1.1754944e-38, %v4497
      %v4499 = vsel %vm4496, %v4498, %v4494
      %v4500 = vmul.f32 1.0, %v4499
      %v4501 = vrcp.pop %v4329
      %v4502 = vmul.f32 %v4329, %v4501
      %v4503 = vsub.f32 1.0, %v4502
      %v4504 = vmul.f32 %v4501, %v4503
      %v4505 = vadd.f32 %v4501, %v4504
      %vm4506 = vweird.f32 %v4329
      %vm4507 = vweird.f32 %v4501
      %vm4508 = vmor %vm4506, %vm4507
      %v4509 = vsel %vm4508, %v4501, %v4505
      %v4510 = vand.u32 2147483647, %v4329
      %vm4511 = vcmp.eq.f32.partialorder %v4510, 8.507059e+37
      %v4512 = vand.u32 %v4329, 2147483648
      %v4513 = vor.u32 1.1754944e-38, %v4512
      %v4514 = vsel %vm4511, %v4513, %v4509
      %v4515 = vmul.f32 1.0, %v4514
      %v4516 = vrcp.pop %v4330
      %v4517 = vmul.f32 %v4330, %v4516
      %v4518 = vsub.f32 1.0, %v4517
      %v4519 = vmul.f32 %v4516, %v4518
      %v4520 = vadd.f32 %v4516, %v4519
      %vm4521 = vweird.f32 %v4330
      %vm4522 = vweird.f32 %v4516
      %vm4523 = vmor %vm4521, %vm4522
      %v4524 = vsel %vm4523, %v4516, %v4520
      %v4525 = vand.u32 2147483647, %v4330
      %vm4526 = vcmp.eq.f32.partialorder %v4525, 8.507059e+37
      %v4527 = vand.u32 %v4330, 2147483648
      %v4528 = vor.u32 1.1754944e-38, %v4527
      %v4529 = vsel %vm4526, %v4528, %v4524
      %v4530 = vmul.f32 1.0, %v4529
      %v4531 = vrcp.pop %v4331
      %v4532 = vmul.f32 %v4331, %v4531
      %v4533 = vsub.f32 1.0, %v4532
      %v4534 = vmul.f32 %v4531, %v4533
      %v4535 = vadd.f32 %v4531, %v4534
      %vm4536 = vweird.f32 %v4331
      %vm4537 = vweird.f32 %v4531
      %vm4538 = vmor %vm4536, %vm4537
      %v4539 = vsel %vm4538, %v4531, %v4535
      %v4540 = vand.u32 2147483647, %v4331
      %vm4541 = vcmp.eq.f32.partialorder %v4540, 8.507059e+37
      %v4542 = vand.u32 %v4331, 2147483648
      %v4543 = vor.u32 1.1754944e-38, %v4542
      %v4544 = vsel %vm4541, %v4543, %v4539
      %v4545 = vmul.f32 1.0, %v4544
      %v4546 = vrcp.pop %v4332
      %v4547 = vmul.f32 %v4332, %v4546
      %v4548 = vsub.f32 1.0, %v4547
      %v4549 = vmul.f32 %v4546, %v4548
      %v4550 = vadd.f32 %v4546, %v4549
      %vm4551 = vweird.f32 %v4332
      %vm4552 = vweird.f32 %v4546
      %vm4553 = vmor %vm4551, %vm4552
      %v4554 = vsel %vm4553, %v4546, %v4550
      %v4555 = vand.u32 2147483647, %v4332
      %vm4556 = vcmp.eq.f32.partialorder %v4555, 8.507059e+37
      %v4557 = vand.u32 %v4332, 2147483648
      %v4558 = vor.u32 1.1754944e-38, %v4557
      %v4559 = vsel %vm4556, %v4558, %v4554
      %v4560 = vmul.f32 1.0, %v4559
      %v4561 = vrcp.pop %v4333
      %v4562 = vmul.f32 %v4333, %v4561
      %v4563 = vsub.f32 1.0, %v4562
      %v4564 = vmul.f32 %v4561, %v4563
      %v4565 = vadd.f32 %v4561, %v4564
      %vm4566 = vweird.f32 %v4333
      %vm4567 = vweird.f32 %v4561
      %vm4568 = vmor %vm4566, %vm4567
      %v4569 = vsel %vm4568, %v4561, %v4565
      %v4570 = vand.u32 2147483647, %v4333
      %vm4571 = vcmp.eq.f32.partialorder %v4570, 8.507059e+37
      %v4572 = vand.u32 %v4333, 2147483648
      %v4573 = vor.u32 1.1754944e-38, %v4572
      %v4574 = vsel %vm4571, %v4573, %v4569
      %v4575 = vmul.f32 1.0, %v4574
      %v4576 = vrcp.pop %v4334
      %v4577 = vmul.f32 %v4334, %v4576
      %v4578 = vsub.f32 1.0, %v4577
      %v4579 = vmul.f32 %v4576, %v4578
      %v4580 = vadd.f32 %v4576, %v4579
      %vm4581 = vweird.f32 %v4334
      %vm4582 = vweird.f32 %v4576
      %vm4583 = vmor %vm4581, %vm4582
      %v4584 = vsel %vm4583, %v4576, %v4580
      %v4585 = vand.u32 2147483647, %v4334
      %vm4586 = vcmp.eq.f32.partialorder %v4585, 8.507059e+37
      %v4587 = vand.u32 %v4334, 2147483648
      %v4588 = vor.u32 1.1754944e-38, %v4587
      %v4589 = vsel %vm4586, %v4588, %v4584
      %v4590 = vmul.f32 1.0, %v4589
      %v4591 = vrcp.pop %v4335
      %v4592 = vmul.f32 %v4335, %v4591
      %v4593 = vsub.f32 1.0, %v4592
      %v4594 = vmul.f32 %v4591, %v4593
      %v4595 = vadd.f32 %v4591, %v4594
      %vm4596 = vweird.f32 %v4335
      %vm4597 = vweird.f32 %v4591
      %vm4598 = vmor %vm4596, %vm4597
      %v4599 = vsel %vm4598, %v4591, %v4595
      %v4600 = vand.u32 2147483647, %v4335
      %vm4601 = vcmp.eq.f32.partialorder %v4600, 8.507059e+37
      %v4602 = vand.u32 %v4335, 2147483648
      %v4603 = vor.u32 1.1754944e-38, %v4602
      %v4604 = vsel %vm4601, %v4603, %v4599
      %v4605 = vmul.f32 1.0, %v4604
      %v4606 = vrcp.pop %v4336
      %v4607 = vmul.f32 %v4336, %v4606
      %v4608 = vsub.f32 1.0, %v4607
      %v4609 = vmul.f32 %v4606, %v4608
      %v4610 = vadd.f32 %v4606, %v4609
      %vm4611 = vweird.f32 %v4336
      %vm4612 = vweird.f32 %v4606
      %vm4613 = vmor %vm4611, %vm4612
      %v4614 = vsel %vm4613, %v4606, %v4610
      %v4615 = vand.u32 2147483647, %v4336
      %vm4616 = vcmp.eq.f32.partialorder %v4615, 8.507059e+37
      %v4617 = vand.u32 %v4336, 2147483648
      %v4618 = vor.u32 1.1754944e-38, %v4617
      %v4619 = vsel %vm4616, %v4618, %v4614
      %v4620 = vmul.f32 1.0, %v4619
      %v4621 = vrcp.pop %v4337
      %v4622 = vmul.f32 %v4337, %v4621
      %v4623 = vsub.f32 1.0, %v4622
      %v4624 = vmul.f32 %v4621, %v4623
      %v4625 = vadd.f32 %v4621, %v4624
      %vm4626 = vweird.f32 %v4337
      %vm4627 = vweird.f32 %v4621
      %vm4628 = vmor %vm4626, %vm4627
      %v4629 = vsel %vm4628, %v4621, %v4625
      %v4630 = vand.u32 2147483647, %v4337
      %vm4631 = vcmp.eq.f32.partialorder %v4630, 8.507059e+37
      %v4632 = vand.u32 %v4337, 2147483648
      %v4633 = vor.u32 1.1754944e-38, %v4632
      %v4634 = vsel %vm4631, %v4633, %v4629
      %v4635 = vmul.f32 1.0, %v4634
      %v4636 = vrcp.pop %v4338
      %v4637 = vmul.f32 %v4338, %v4636
      %v4638 = vsub.f32 1.0, %v4637
      %v4639 = vmul.f32 %v4636, %v4638
      %v4640 = vadd.f32 %v4636, %v4639
      %vm4641 = vweird.f32 %v4338
      %vm4642 = vweird.f32 %v4636
      %vm4643 = vmor %vm4641, %vm4642
      %v4644 = vsel %vm4643, %v4636, %v4640
      %v4645 = vand.u32 2147483647, %v4338
      %vm4646 = vcmp.eq.f32.partialorder %v4645, 8.507059e+37
      %v4647 = vand.u32 %v4338, 2147483648
      %v4648 = vor.u32 1.1754944e-38, %v4647
      %v4649 = vsel %vm4646, %v4648, %v4644
      %v4650 = vmul.f32 1.0, %v4649
      %v4651 = vrcp.pop %v4339
      %v4652 = vmul.f32 %v4339, %v4651
      %v4653 = vsub.f32 1.0, %v4652
      %v4654 = vmul.f32 %v4651, %v4653
      %v4655 = vadd.f32 %v4651, %v4654
      %vm4656 = vweird.f32 %v4339
      %vm4657 = vweird.f32 %v4651
      %vm4658 = vmor %vm4656, %vm4657
      %v4659 = vsel %vm4658, %v4651, %v4655
      %v4660 = vand.u32 2147483647, %v4339
      %vm4661 = vcmp.eq.f32.partialorder %v4660, 8.507059e+37
      %v4662 = vand.u32 %v4339, 2147483648
      %v4663 = vor.u32 1.1754944e-38, %v4662
      %v4664 = vsel %vm4661, %v4663, %v4659
      %v4665 = vmul.f32 1.0, %v4664
      %v4666 = vrcp.pop %v4340
      %v4667 = vmul.f32 %v4340, %v4666
      %v4668 = vsub.f32 1.0, %v4667
      %v4669 = vmul.f32 %v4666, %v4668
      %v4670 = vadd.f32 %v4666, %v4669
      %vm4671 = vweird.f32 %v4340
      %vm4672 = vweird.f32 %v4666
      %vm4673 = vmor %vm4671, %vm4672
      %v4674 = vsel %vm4673, %v4666, %v4670
      %v4675 = vand.u32 2147483647, %v4340
      %vm4676 = vcmp.eq.f32.partialorder %v4675, 8.507059e+37
      %v4677 = vand.u32 %v4340, 2147483648
      %v4678 = vor.u32 1.1754944e-38, %v4677
      %v4679 = vsel %vm4676, %v4678, %v4674
      %v4680 = vmul.f32 1.0, %v4679
      %v4681 = vrcp.pop %v4341
      %v4682 = vmul.f32 %v4341, %v4681
      %v4683 = vsub.f32 1.0, %v4682
      %v4684 = vmul.f32 %v4681, %v4683
      %v4685 = vadd.f32 %v4681, %v4684
      %vm4686 = vweird.f32 %v4341
      %vm4687 = vweird.f32 %v4681
      %vm4688 = vmor %vm4686, %vm4687
      %v4689 = vsel %vm4688, %v4681, %v4685
      %v4690 = vand.u32 2147483647, %v4341
      %vm4691 = vcmp.eq.f32.partialorder %v4690, 8.507059e+37
      %v4692 = vand.u32 %v4341, 2147483648
      %v4693 = vor.u32 1.1754944e-38, %v4692
      %v4694 = vsel %vm4691, %v4693, %v4689
      %v4695 = vmul.f32 1.0, %v4694
      %v4696 = vrcp.pop %v4342
      %v4697 = vmul.f32 %v4342, %v4696
      %v4698 = vsub.f32 1.0, %v4697
      %v4699 = vmul.f32 %v4696, %v4698
      %v4700 = vadd.f32 %v4696, %v4699
      %vm4701 = vweird.f32 %v4342
      %vm4702 = vweird.f32 %v4696
      %vm4703 = vmor %vm4701, %vm4702
      %v4704 = vsel %vm4703, %v4696, %v4700
      %v4705 = vand.u32 2147483647, %v4342
      %vm4706 = vcmp.eq.f32.partialorder %v4705, 8.507059e+37
      %v4707 = vand.u32 %v4342, 2147483648
      %v4708 = vor.u32 1.1754944e-38, %v4707
      %v4709 = vsel %vm4706, %v4708, %v4704
      %v4710 = vmul.f32 1.0, %v4709
      %v4711 = vrcp.pop %v4343
      %v4712 = vmul.f32 %v4343, %v4711
      %v4713 = vsub.f32 1.0, %v4712
      %v4714 = vmul.f32 %v4711, %v4713
      %v4715 = vadd.f32 %v4711, %v4714
      %vm4716 = vweird.f32 %v4343
      %vm4717 = vweird.f32 %v4711
      %vm4718 = vmor %vm4716, %vm4717
      %v4719 = vsel %vm4718, %v4711, %v4715
      %v4720 = vand.u32 2147483647, %v4343
      %vm4721 = vcmp.eq.f32.partialorder %v4720, 8.507059e+37
      %v4722 = vand.u32 %v4343, 2147483648
      %v4723 = vor.u32 1.1754944e-38, %v4722
      %v4724 = vsel %vm4721, %v4723, %v4719
      %v4725 = vmul.f32 1.0, %v4724
      %v4726 = vrcp.pop %v4344
      %v4727 = vmul.f32 %v4344, %v4726
      %v4728 = vsub.f32 1.0, %v4727
      %v4729 = vmul.f32 %v4726, %v4728
      %v4730 = vadd.f32 %v4726, %v4729
      %vm4731 = vweird.f32 %v4344
      %vm4732 = vweird.f32 %v4726
      %vm4733 = vmor %vm4731, %vm4732
      %v4734 = vsel %vm4733, %v4726, %v4730
      %v4735 = vand.u32 2147483647, %v4344
      %vm4736 = vcmp.eq.f32.partialorder %v4735, 8.507059e+37
      %v4737 = vand.u32 %v4344, 2147483648
      %v4738 = vor.u32 1.1754944e-38, %v4737
      %v4739 = vsel %vm4736, %v4738, %v4734
      %v4740 = vmul.f32 1.0, %v4739
      %v4741 = vrcp.pop %v4345
      %v4742 = vmul.f32 %v4345, %v4741
      %v4743 = vsub.f32 1.0, %v4742
      %v4744 = vmul.f32 %v4741, %v4743
      %v4745 = vadd.f32 %v4741, %v4744
      %vm4746 = vweird.f32 %v4345
      %vm4747 = vweird.f32 %v4741
      %vm4748 = vmor %vm4746, %vm4747
      %v4749 = vsel %vm4748, %v4741, %v4745
      %v4750 = vand.u32 2147483647, %v4345
      %vm4751 = vcmp.eq.f32.partialorder %v4750, 8.507059e+37
      %v4752 = vand.u32 %v4345, 2147483648
      %v4753 = vor.u32 1.1754944e-38, %v4752
      %v4754 = vsel %vm4751, %v4753, %v4749
      %v4755 = vmul.f32 1.0, %v4754
      %v4756 = vrcp.pop %v4346
      %v4757 = vmul.f32 %v4346, %v4756
      %v4758 = vsub.f32 1.0, %v4757
      %v4759 = vmul.f32 %v4756, %v4758
      %v4760 = vadd.f32 %v4756, %v4759
      %vm4761 = vweird.f32 %v4346
      %vm4762 = vweird.f32 %v4756
      %vm4763 = vmor %vm4761, %vm4762
      %v4764 = vsel %vm4763, %v4756, %v4760
      %v4765 = vand.u32 2147483647, %v4346
      %vm4766 = vcmp.eq.f32.partialorder %v4765, 8.507059e+37
      %v4767 = vand.u32 %v4346, 2147483648
      %v4768 = vor.u32 1.1754944e-38, %v4767
      %v4769 = vsel %vm4766, %v4768, %v4764
      %v4770 = vmul.f32 1.0, %v4769
      %v4771 = vrcp.pop %v4347
      %v4772 = vmul.f32 %v4347, %v4771
      %v4773 = vsub.f32 1.0, %v4772
      %v4774 = vmul.f32 %v4771, %v4773
      %v4775 = vadd.f32 %v4771, %v4774
      %vm4776 = vweird.f32 %v4347
      %vm4777 = vweird.f32 %v4771
      %vm4778 = vmor %vm4776, %vm4777
      %v4779 = vsel %vm4778, %v4771, %v4775
      %v4780 = vand.u32 2147483647, %v4347
      %vm4781 = vcmp.eq.f32.partialorder %v4780, 8.507059e+37
      %v4782 = vand.u32 %v4347, 2147483648
      %v4783 = vor.u32 1.1754944e-38, %v4782
      %v4784 = vsel %vm4781, %v4783, %v4779
      %v4785 = vmul.f32 1.0, %v4784
      %v4786 = vrcp.pop %v4348
      %v4787 = vmul.f32 %v4348, %v4786
      %v4788 = vsub.f32 1.0, %v4787
      %v4789 = vmul.f32 %v4786, %v4788
      %v4790 = vadd.f32 %v4786, %v4789
      %vm4791 = vweird.f32 %v4348
      %vm4792 = vweird.f32 %v4786
      %vm4793 = vmor %vm4791, %vm4792
      %v4794 = vsel %vm4793, %v4786, %v4790
      %v4795 = vand.u32 2147483647, %v4348
      %vm4796 = vcmp.eq.f32.partialorder %v4795, 8.507059e+37
      %v4797 = vand.u32 %v4348, 2147483648
      %v4798 = vor.u32 1.1754944e-38, %v4797
      %v4799 = vsel %vm4796, %v4798, %v4794
      %v4800 = vmul.f32 1.0, %v4799
      %v4801 = vrcp.pop %v4349
      %v4802 = vmul.f32 %v4349, %v4801
      %v4803 = vsub.f32 1.0, %v4802
      %v4804 = vmul.f32 %v4801, %v4803
      %v4805 = vadd.f32 %v4801, %v4804
      %vm4806 = vweird.f32 %v4349
      %vm4807 = vweird.f32 %v4801
      %vm4808 = vmor %vm4806, %vm4807
      %v4809 = vsel %vm4808, %v4801, %v4805
      %v4810 = vand.u32 2147483647, %v4349
      %vm4811 = vcmp.eq.f32.partialorder %v4810, 8.507059e+37
      %v4812 = vand.u32 %v4349, 2147483648
      %v4813 = vor.u32 1.1754944e-38, %v4812
      %v4814 = vsel %vm4811, %v4813, %v4809
      %v4815 = vmul.f32 1.0, %v4814
      %v4816 = vrcp.pop %v4350
      %v4817 = vmul.f32 %v4350, %v4816
      %v4818 = vsub.f32 1.0, %v4817
      %v4819 = vmul.f32 %v4816, %v4818
      %v4820 = vadd.f32 %v4816, %v4819
      %vm4821 = vweird.f32 %v4350
      %vm4822 = vweird.f32 %v4816
      %vm4823 = vmor %vm4821, %vm4822
      %v4824 = vsel %vm4823, %v4816, %v4820
      %v4825 = vand.u32 2147483647, %v4350
      %vm4826 = vcmp.eq.f32.partialorder %v4825, 8.507059e+37
      %v4827 = vand.u32 %v4350, 2147483648
      %v4828 = vor.u32 1.1754944e-38, %v4827
      %v4829 = vsel %vm4826, %v4828, %v4824
      %v4830 = vmul.f32 1.0, %v4829
      %v4831 = vmul.f32 %v4096, %v4365
      %v4832 = vmul.f32 %v4099, %v4380
      %v4833 = vmul.f32 %v4102, %v4395
      %v4834 = vmul.f32 %v4105, %v4410
      %v4835 = vmul.f32 %v4108, %v4425
      %v4836 = vmul.f32 %v4111, %v4440
      %v4837 = vmul.f32 %v4114, %v4455
      %v4838 = vmul.f32 %v4117, %v4470
      %v4839 = vmul.f32 %v4120, %v4485
      %v4840 = vmul.f32 %v4123, %v4500
      %v4841 = vmul.f32 %v4126, %v4515
      %v4842 = vmul.f32 %v4129, %v4530
      %v4843 = vmul.f32 %v4132, %v4545
      %v4844 = vmul.f32 %v4135, %v4560
      %v4845 = vmul.f32 %v4138, %v4575
      %v4846 = vmul.f32 %v4141, %v4590
      %v4847 = vmul.f32 %v4144, %v4605
      %v4848 = vmul.f32 %v4147, %v4620
      %v4849 = vmul.f32 %v4150, %v4635
      %v4850 = vmul.f32 %v4153, %v4650
      %v4851 = vmul.f32 %v4156, %v4665
      %v4852 = vmul.f32 %v4159, %v4680
      %v4853 = vmul.f32 %v4162, %v4695
      %v4854 = vmul.f32 %v4165, %v4710
      %v4855 = vmul.f32 %v4168, %v4725
      %v4856 = vmul.f32 %v4171, %v4740
      %v4857 = vmul.f32 %v4174, %v4755
      %v4858 = vmul.f32 %v4177, %v4770
      %v4859 = vmul.f32 %v4180, %v4785
      %v4860 = vmul.f32 %v4183, %v4800
      %v4861 = vmul.f32 %v4186, %v4815
      %v4862 = vmul.f32 %v4189, %v4830
      %v4863 = vld [vmem:[%s12] sm:$0xff]
      %v4864 = vld [vmem:[%s13] sm:$0x1]
      %v4866 = vperm.slane %v4864, 0
      %v4869 = vsel %vm2606, %v4831, 0
      %v4872 = vsel %vm2606, %v4832, 0
      %v4875 = vsel %vm2606, %v4833, 0
      %v4878 = vsel %vm2606, %v4834, 0
      %v4881 = vsel %vm2606, %v4835, 0
      %v4884 = vsel %vm2606, %v4836, 0
      %v4887 = vsel %vm2606, %v4837, 0
      %v4890 = vsel %vm2606, %v4838, 0
      %v4893 = vsel %vm2606, %v4839, 0
      %v4896 = vsel %vm2606, %v4840, 0
      %v4899 = vsel %vm2606, %v4841, 0
      %v4902 = vsel %vm2606, %v4842, 0
      %v4905 = vsel %vm2606, %v4843, 0
      %v4908 = vsel %vm2606, %v4844, 0
      %v4911 = vsel %vm2606, %v4845, 0
      %v4914 = vsel %vm2606, %v4846, 0
      %v4917 = vsel %vm2606, %v4847, 0
      %v4920 = vsel %vm2606, %v4848, 0
      %v4923 = vsel %vm2606, %v4849, 0
      %v4926 = vsel %vm2606, %v4850, 0
      %v4929 = vsel %vm2606, %v4851, 0
      %v4932 = vsel %vm2606, %v4852, 0
      %v4935 = vsel %vm2606, %v4853, 0
      %v4938 = vsel %vm2606, %v4854, 0
      %v4941 = vsel %vm2606, %v4855, 0
      %v4944 = vsel %vm2606, %v4856, 0
      %v4947 = vsel %vm2606, %v4857, 0
      %v4950 = vsel %vm2606, %v4858, 0
      %v4953 = vsel %vm2606, %v4859, 0
      %v4956 = vsel %vm2606, %v4860, 0
      %v4959 = vsel %vm2606, %v4861, 0
      %v4962 = vsel %vm2606, %v4862, 0
      %4964 = vmatpush.msra.mxu0 0.0
      %4965 = vmatpush.msra.mxu0 0.0
      %4966 = vmatpush.msra.mxu0 0.0
      %4967 = vmatpush.msra.mxu0 0.0
      %4968 = vmatpush.msra.mxu0 0.0
      %4969 = vmatpush.msra.mxu0 0.0
      %4970 = vmatpush.msra.mxu0 0.0
      %4971 = vmatpush.msra.mxu0 0.0
      %4972 = vmatpush.msra.mxu0 0.0
      %4973 = vmatpush.msra.mxu0 0.0
      %4974 = vmatpush.msra.mxu0 0.0
      %4975 = vmatpush.msra.mxu0 0.0
      %4976 = vmatpush.msra.mxu0 0.0
      %4977 = vmatpush.msra.mxu0 0.0
      %4978 = vmatpush.msra.mxu0 0.0
      %4979 = vmatpush.msra.mxu0 %v4863
      %4980 = vmatmul.f32.gmra.mxu0 %v4869
      %v4981 = vpop.f32.mrf.mxu0
      %v4982 = vadd.f32 %v4866, %v4981
      %4983 = vmatmul.f32.gmra.mxu0 %v4872
      %v4984 = vpop.f32.mrf.mxu0
      %v4985 = vadd.f32 %v4866, %v4984
      %4986 = vmatmul.f32.gmra.mxu0 %v4875
      %v4987 = vpop.f32.mrf.mxu0
      %v4988 = vadd.f32 %v4866, %v4987
      %4989 = vmatmul.f32.gmra.mxu0 %v4878
      %v4990 = vpop.f32.mrf.mxu0
      %v4991 = vadd.f32 %v4866, %v4990
      %4992 = vmatmul.f32.gmra.mxu0 %v4881
      %v4993 = vpop.f32.mrf.mxu0
      %v4994 = vadd.f32 %v4866, %v4993
      %4995 = vmatmul.f32.gmra.mxu0 %v4884
      %v4996 = vpop.f32.mrf.mxu0
      %v4997 = vadd.f32 %v4866, %v4996
      %4998 = vmatmul.f32.gmra.mxu0 %v4887
      %v4999 = vpop.f32.mrf.mxu0
      %v5000 = vadd.f32 %v4866, %v4999
      %5001 = vmatmul.f32.gmra.mxu0 %v4890
      %v5002 = vpop.f32.mrf.mxu0
      %v5003 = vadd.f32 %v4866, %v5002
      %5004 = vmatmul.f32.gmra.mxu0 %v4893
      %v5005 = vpop.f32.mrf.mxu0
      %v5006 = vadd.f32 %v4866, %v5005
      %5007 = vmatmul.f32.gmra.mxu0 %v4896
      %v5008 = vpop.f32.mrf.mxu0
      %v5009 = vadd.f32 %v4866, %v5008
      %5010 = vmatmul.f32.gmra.mxu0 %v4899
      %v5011 = vpop.f32.mrf.mxu0
      %v5012 = vadd.f32 %v4866, %v5011
      %5013 = vmatmul.f32.gmra.mxu0 %v4902
      %v5014 = vpop.f32.mrf.mxu0
      %v5015 = vadd.f32 %v4866, %v5014
      %5016 = vmatmul.f32.gmra.mxu0 %v4905
      %v5017 = vpop.f32.mrf.mxu0
      %v5018 = vadd.f32 %v4866, %v5017
      %5019 = vmatmul.f32.gmra.mxu0 %v4908
      %v5020 = vpop.f32.mrf.mxu0
      %v5021 = vadd.f32 %v4866, %v5020
      %5022 = vmatmul.f32.gmra.mxu0 %v4911
      %v5023 = vpop.f32.mrf.mxu0
      %v5024 = vadd.f32 %v4866, %v5023
      %5025 = vmatmul.f32.gmra.mxu0 %v4914
      %v5026 = vpop.f32.mrf.mxu0
      %v5027 = vadd.f32 %v4866, %v5026
      %5028 = vmatmul.f32.gmra.mxu0 %v4917
      %v5029 = vpop.f32.mrf.mxu0
      %v5030 = vadd.f32 %v4866, %v5029
      %5031 = vmatmul.f32.gmra.mxu0 %v4920
      %v5032 = vpop.f32.mrf.mxu0
      %v5033 = vadd.f32 %v4866, %v5032
      %5034 = vmatmul.f32.gmra.mxu0 %v4923
      %v5035 = vpop.f32.mrf.mxu0
      %v5036 = vadd.f32 %v4866, %v5035
      %5037 = vmatmul.f32.gmra.mxu0 %v4926
      %v5038 = vpop.f32.mrf.mxu0
      %v5039 = vadd.f32 %v4866, %v5038
      %5040 = vmatmul.f32.gmra.mxu0 %v4929
      %v5041 = vpop.f32.mrf.mxu0
      %v5042 = vadd.f32 %v4866, %v5041
      %5043 = vmatmul.f32.gmra.mxu0 %v4932
      %v5044 = vpop.f32.mrf.mxu0
      %v5045 = vadd.f32 %v4866, %v5044
      %5046 = vmatmul.f32.gmra.mxu0 %v4935
      %v5047 = vpop.f32.mrf.mxu0
      %v5048 = vadd.f32 %v4866, %v5047
      %5049 = vmatmul.f32.gmra.mxu0 %v4938
      %v5050 = vpop.f32.mrf.mxu0
      %v5051 = vadd.f32 %v4866, %v5050
      %5052 = vmatmul.f32.gmra.mxu0 %v4941
      %v5053 = vpop.f32.mrf.mxu0
      %v5054 = vadd.f32 %v4866, %v5053
      %5055 = vmatmul.f32.gmra.mxu0 %v4944
      %v5056 = vpop.f32.mrf.mxu0
      %v5057 = vadd.f32 %v4866, %v5056
      %5058 = vmatmul.f32.gmra.mxu0 %v4947
      %v5059 = vpop.f32.mrf.mxu0
      %v5060 = vadd.f32 %v4866, %v5059
      %5061 = vmatmul.f32.gmra.mxu0 %v4950
      %v5062 = vpop.f32.mrf.mxu0
      %v5063 = vadd.f32 %v4866, %v5062
      %5064 = vmatmul.f32.gmra.mxu0 %v4953
      %v5065 = vpop.f32.mrf.mxu0
      %v5066 = vadd.f32 %v4866, %v5065
      %5067 = vmatmul.f32.gmra.mxu0 %v4956
      %v5068 = vpop.f32.mrf.mxu0
      %v5069 = vadd.f32 %v4866, %v5068
      %5070 = vmatmul.f32.gmra.mxu0 %v4959
      %v5071 = vpop.f32.mrf.mxu0
      %v5072 = vadd.f32 %v4866, %v5071
      %5073 = vmatmul.f32.gmra.mxu0 %v4962
      %v5074 = vpop.f32.mrf.mxu0
      %v5075 = vadd.f32 %v4866, %v5074
      %5076 = vdwg.mxu0
      %v5077 = vadd.f32 %v4982, %v468
      %v5078 = vadd.f32 %v4985, %v469
      %v5079 = vadd.f32 %v4988, %v470
      %v5080 = vadd.f32 %v4991, %v471
      %v5081 = vadd.f32 %v4994, %v472
      %v5082 = vadd.f32 %v4997, %v473
      %v5083 = vadd.f32 %v5000, %v474
      %v5084 = vadd.f32 %v5003, %v475
      %v5085 = vadd.f32 %v5006, %v476
      %v5086 = vadd.f32 %v5009, %v477
      %v5087 = vadd.f32 %v5012, %v478
      %v5088 = vadd.f32 %v5015, %v479
      %v5089 = vadd.f32 %v5018, %v480
      %v5090 = vadd.f32 %v5021, %v481
      %v5091 = vadd.f32 %v5024, %v482
      %v5092 = vadd.f32 %v5027, %v483
      %v5093 = vadd.f32 %v5030, %v484
      %v5094 = vadd.f32 %v5033, %v485
      %v5095 = vadd.f32 %v5036, %v486
      %v5096 = vadd.f32 %v5039, %v487
      %v5097 = vadd.f32 %v5042, %v488
      %v5098 = vadd.f32 %v5045, %v489
      %v5099 = vadd.f32 %v5048, %v490
      %v5100 = vadd.f32 %v5051, %v491
      %v5101 = vadd.f32 %v5054, %v492
      %v5102 = vadd.f32 %v5057, %v493
      %v5103 = vadd.f32 %v5060, %v494
      %v5104 = vadd.f32 %v5063, %v495
      %v5105 = vadd.f32 %v5066, %v496
      %v5106 = vadd.f32 %v5069, %v497
      %v5107 = vadd.f32 %v5072, %v498
      %v5108 = vadd.f32 %v5075, %v499
      %5109 = vst.msk [vmem:[%s467] sm:$0xff] %vm508, %v5077
      %5110 = vst.msk [vmem:[%s467 + $0x8] sm:$0xff] %vm508, %v5078
      %5111 = vst.msk [vmem:[%s467 + $0x10] sm:$0xff] %vm508, %v5079
      %5112 = vst.msk [vmem:[%s467 + $0x18] sm:$0xff] %vm508, %v5080
      %5113 = vst.msk [vmem:[%s467 + $0x20] sm:$0xff] %vm508, %v5081
      %5114 = vst.msk [vmem:[%s467 + $0x28] sm:$0xff] %vm508, %v5082
      %5115 = vst.msk [vmem:[%s467 + $0x30] sm:$0xff] %vm508, %v5083
      %5116 = vst.msk [vmem:[%s467 + $0x38] sm:$0xff] %vm508, %v5084
      %5117 = vst.msk [vmem:[%s467 + $0x40] sm:$0xff] %vm508, %v5085
      %5118 = vst.msk [vmem:[%s467 + $0x48] sm:$0xff] %vm508, %v5086
      %5119 = vst.msk [vmem:[%s467 + $0x50] sm:$0xff] %vm508, %v5087
      %5120 = vst.msk [vmem:[%s467 + $0x58] sm:$0xff] %vm508, %v5088
      %5121 = vst.msk [vmem:[%s467 + $0x60] sm:$0xff] %vm508, %v5089
      %5122 = vst.msk [vmem:[%s467 + $0x68] sm:$0xff] %vm508, %v5090
      %5123 = vst.msk [vmem:[%s467 + $0x70] sm:$0xff] %vm508, %v5091
      %5124 = vst.msk [vmem:[%s467 + $0x78] sm:$0xff] %vm508, %v5092
      %5125 = vst.msk [vmem:[%s467 + $0x80] sm:$0xff] %vm508, %v5093
      %5126 = vst.msk [vmem:[%s467 + $0x88] sm:$0xff] %vm508, %v5094
      %5127 = vst.msk [vmem:[%s467 + $0x90] sm:$0xff] %vm508, %v5095
      %5128 = vst.msk [vmem:[%s467 + $0x98] sm:$0xff] %vm508, %v5096
      %5129 = vst.msk [vmem:[%s467 + $0xa0] sm:$0xff] %vm508, %v5097
      %5130 = vst.msk [vmem:[%s467 + $0xa8] sm:$0xff] %vm508, %v5098
      %5131 = vst.msk [vmem:[%s467 + $0xb0] sm:$0xff] %vm508, %v5099
      %5132 = vst.msk [vmem:[%s467 + $0xb8] sm:$0xff] %vm508, %v5100
      %5133 = vst.msk [vmem:[%s467 + $0xc0] sm:$0xff] %vm508, %v5101
      %5134 = vst.msk [vmem:[%s467 + $0xc8] sm:$0xff] %vm508, %v5102
      %5135 = vst.msk [vmem:[%s467 + $0xd0] sm:$0xff] %vm508, %v5103
      %5136 = vst.msk [vmem:[%s467 + $0xd8] sm:$0xff] %vm508, %v5104
      %5137 = vst.msk [vmem:[%s467 + $0xe0] sm:$0xff] %vm508, %v5105
      %5138 = vst.msk [vmem:[%s467 + $0xe8] sm:$0xff] %vm508, %v5106
      %5139 = vst.msk [vmem:[%s467 + $0xf0] sm:$0xff] %vm508, %v5107
      %5140 = vst.msk [vmem:[%s467 + $0xf8] sm:$0xff] %vm508, %v5108
      %p5141 = scmp.lt.s32.totalorder %s25, 1
      %s5142 = scalar_select %p5141, %s25, 1
      %s5143 = smul.addr %s5142, 32
      %s5144 = smul.addr %s5143, 8
      %s5145 = scalar_lea.vmem %s14, %s5144
      // Predicated region
      $region77: #{tpu_custom_call.1} parent=75 // pred_check
        %p5146 = pneg %p342
      $region78: #{tpu_custom_call.1} parent=75 // pred_check_branch
        %5148 = sbr.rel (%p5146) target = $region80
      $region79: #{tpu_custom_call.1} parent=75 // pred_region
        _
      $region80: #{tpu_custom_call.1} parent=75 // pred_fallthru
        _
    $region76: #{tpu_custom_call.1} parent=5 // pred_fallthru
      _
    %p5149 = scmp.le.s32.totalorder 2, %s20
    // Predicated region
    $region81: #{tpu_custom_call.1} parent=5 // pred_check
      %p5150 = pneg %p5149
    $region82: #{tpu_custom_call.1} parent=5 // pred_check_branch
      %5152 = sbr.rel (%p5150) target = $region84
    $region83: #{tpu_custom_call.1} parent=5 // pred_region
      %s5153 = ssub.s32 %s20, 2
      // Predicated region
      $region85: #{tpu_custom_call.1} parent=83 // pred_check
        %p5154 = pneg %p348
      $region86: #{tpu_custom_call.1} parent=83 // pred_check_branch
        %5156 = sbr.rel (%p5154) target = $region88
      $region87: #{tpu_custom_call.1} parent=83 // pred_region
        %p5157 = scmp.lt.s32.totalorder %s26, 1
        %s5158 = scalar_select %p5157, %s26, 1
        %s5159 = smul.addr %s5158, 32
        %s5160 = smul.addr %s5159, 8
        %s5161 = scalar_lea.vmem %s14, %s5160
      $region88: #{tpu_custom_call.1} parent=83 // pred_fallthru
        _
    $region84: #{tpu_custom_call.1} parent=5 // pred_fallthru
      _
  $region6: #{tpu_custom_call.1} parent=0 // loop_footer
    %s24 = sadd.s32 1, %s20
  $region7: #{tpu_custom_call.1} parent=0 // loop_footer_branch
    %19 = sbr.rel target = $region3
  $region8: #{tpu_custom_call.1} parent=0 // loop_exit
    _

</llo_original>
